<compile_context>
chip_gen: v7x
topology: tpu7x:2x2x1
jax: 0.10.0
libtpu: 0.0.40
codegen_flags: <defaults>
</compile_context>

<pallas_src>
import functools

import jax
import jax.numpy as jnp
from jax.experimental import pallas as pl
from jax.experimental.pallas import tpu as pltpu

_MAX_T_TILE = 2048    # max output time positions per kernel step
_LANE = 128
_HALO = 128           # right-halo width; must be >= (K-1)//stride for all layers


def _round_up(x, m):
    return (x + m - 1) // m * m


def _cdiv(a, b):
    return -(-a // b)


# ----------------------------------------------------------------------------
# Grouped Conv1d (+ optional LeakyReLU) — Pallas kernel
# ----------------------------------------------------------------------------
def _conv1d_kernel(x_ref, xh_ref, w_ref, b_ref, o_ref, win_ref, col_ref, *,
                   K, stride, c_in, t_blk, apply_act, negative_slope):
    """One (batch, time-tile) grid step of a grouped 1-D convolution.

    x_ref  : (stride*C_in, T_blk)        bf16  phase-split input, current tile
    xh_ref : (stride*C_in, HALO)         bf16  first HALO cols of the NEXT tile
    w_ref  : (C_out, K*C_in)             bf16  block-diagonal merged weight
                                               slab; column k*C_in + ci holds
                                               w[co, ci_in_group, k] (0 across
                                               groups)
    b_ref  : (C_out, 1)                  f32
    o_ref  : (C_out, T_blk)              f32   lane-dense (T_blk % 128 == 0)
    win_ref: (stride*C_in, T_blk+HALO)   bf16  scratch: contiguous window
    col_ref: (K*C_in, T_blk)             bf16  scratch: merged im2col slab
    """
    # Assemble the contiguous (tile + right halo) window with aligned stores.
    win_ref[:, :t_blk] = x_ref[...]
    win_ref[:, t_blk:] = xh_ref[...]

    # Merged im2col: one C_in-row (sublane-aligned destination) copy per tap.
    # Tap k = q*stride + r reads phase r shifted by q (static slices).
    for k in range(K):
        q, r = divmod(k, stride)
        col_ref[k * c_in:(k + 1) * c_in, :] = \
            win_ref[r * c_in:(r + 1) * c_in, q:q + t_blk]

    # ONE MXU contraction over the full K*C_in reduction axis (all groups).
    acc = jnp.dot(w_ref[...], col_ref[...], preferred_element_type=jnp.float32)
    acc = acc + b_ref[...]
    if apply_act:
        acc = jnp.maximum(acc, negative_slope * acc)     # LeakyReLU
    o_ref[...] = acc


def conv1d(x, w, b, *, stride, padding, groups, apply_act,
           negative_slope=0.1, max_t_tile=_MAX_T_TILE):
    """PyTorch-style Conv1d (grouped, strided, explicit zero padding) with an
    optional fused LeakyReLU.

    x: (B, C_in, T_in) f32.  w: (C_out, C_in//groups, K).  b: (C_out,).
    Returns (B, C_out, T_out) f32, T_out = (T_in + 2*padding - K)//stride + 1.
    """
    B, C_in, T_in = x.shape
    C_out, Cig, K = w.shape
    assert C_in == Cig * groups and C_out % groups == 0
    Cog = C_out // groups
    s = stride
    Qm = (K - 1) // s
    assert Qm <= _HALO, "kernel halo too small for this (K, stride)"

    T_out = (T_in + 2 * padding - K) // s + 1
    assert T_out >= 1
    n_tiles = _cdiv(T_out, max_t_tile)
    T_blk = _round_up(_cdiv(T_out, n_tiles), _LANE)      # balanced, 128-aligned

    # Phase-split column count: n_tiles tiles + one extra tile of zeros so the
    # (ti+1) halo BlockSpec of the last tile stays in bounds.
    Lcols = (n_tiles + 1) * T_blk
    Lp = s * Lcols

    # bf16 MXU operands; f32 accumulation happens on the MXU in the kernel.
    xq = x.astype(jnp.bfloat16)
    xp = jnp.pad(xq, ((0, 0), (0, 0), (padding, Lp - T_in - padding)))

    # Polyphase split (one layout pass; a no-op chain for stride == 1):
    #   xs[b, r*C_in + ci, u] = xp[b, ci, s*u + r]
    xs = xp.reshape(B, C_in, Lcols, s).transpose(0, 3, 1, 2)
    xs = xs.reshape(B, s * C_in, Lcols)

    # Block-diagonal merged weight slab (C_out, K*C_in):
    #   column k*C_in + ci = w[co, ci - g*Cig, k] if ci is in co's group else 0
    wg = w.reshape(groups, Cog, Cig, K)
    eye = jnp.eye(groups, dtype=w.dtype)
    w_full = (wg[:, None] * eye[:, :, None, None, None])       # (G,G,Cog,Cig,K)
    w_full = w_full.transpose(0, 2, 1, 3, 4).reshape(C_out, C_in, K)
    w_slab = w_full.transpose(0, 2, 1).reshape(C_out, K * C_in)
    w_slab = w_slab.astype(jnp.bfloat16)
    b_col = b.reshape(C_out, 1).astype(jnp.float32)

    kernel = functools.partial(
        _conv1d_kernel, K=K, stride=s, c_in=C_in, t_blk=T_blk,
        apply_act=apply_act, negative_slope=negative_slope)

    bpt = T_blk // _HALO                       # halo blocks per tile

    # MXU work actually issued (includes the block-diagonal zeros).
    flops = 2 * B * n_tiles * T_blk * C_out * K * C_in
    bytes_accessed = (B * Lcols * s * C_in * 2              # xs (tile stream)
                      + B * n_tiles * _HALO * s * C_in * 2  # halo stream
                      + w_slab.size * 2 + b_col.size * 4
                      + B * C_out * n_tiles * T_blk * 4)    # output writes

    vmem_est = (2 * s * C_in * (T_blk + _HALO) * 2          # x + halo (x2 buf)
                + 2 * C_out * T_blk * 4                     # out (x2 buf)
                + 2 * (w_slab.size * 2 + C_out * 4)         # weight + bias
                + s * C_in * (T_blk + _HALO) * 2            # win scratch
                + K * C_in * T_blk * 2)                     # col scratch
    vmem_limit = int(min(48 * 2 ** 20, max(16 * 2 ** 20, 2 * vmem_est)))

    out = pl.pallas_call(
        kernel,
        out_shape=jax.ShapeDtypeStruct((B, C_out, n_tiles * T_blk),
                                       jnp.float32),
        grid=(B, n_tiles),
        in_specs=[
            # current tile
            pl.BlockSpec((None, s * C_in, T_blk), lambda bi, ti: (bi, 0, ti)),
            # right halo = first HALO columns of the NEXT tile (same array)
            pl.BlockSpec((None, s * C_in, _HALO),
                         lambda bi, ti: (bi, 0, (ti + 1) * bpt)),
            pl.BlockSpec((C_out, K * C_in), lambda bi, ti: (0, 0)),
            pl.BlockSpec((C_out, 1), lambda bi, ti: (0, 0)),
        ],
        out_specs=pl.BlockSpec((None, C_out, T_blk),
                               lambda bi, ti: (bi, 0, ti)),
        scratch_shapes=[
            pltpu.VMEM((s * C_in, T_blk + _HALO), jnp.bfloat16),
            pltpu.VMEM((K * C_in, T_blk), jnp.bfloat16),
        ],
        compiler_params=pltpu.CompilerParams(
            dimension_semantics=("parallel", "parallel"),
            vmem_limit_bytes=vmem_limit),
        cost_estimate=pl.CostEstimate(flops=flops, transcendentals=0,
                                      bytes_accessed=bytes_accessed),
    )(xs, xs, w_slab, b_col)

    return out[:, :, :T_out]


def avg_pool1d(x):
    """AvgPool1d(kernel=4, stride=2, padding=2, count_include_pad=True) as a
    0.25-weight conv through the same tiled lane-dense kernel (the input is a
    1-channel waveform, so this is one cheap pass)."""
    w = jnp.full((1, 1, 4), 0.25, jnp.float32)
    b = jnp.zeros((1,), jnp.float32)
    return conv1d(x, w, b, stride=2, padding=2, groups=1, apply_act=False)


# ----------------------------------------------------------------------------
# Module structure (small synthetic widths; architecture logic == defaults)
# ----------------------------------------------------------------------------
def build_scale_disc_configs(in_channels=1, out_channels=1,
                             kernel_sizes=(15, 41, 5, 3), channels=16,
                             max_downsample_channels=64, max_groups=4,
                             downsample_scales=(2, 2, 4, 4, 1)):
    def c(i, o, k, s, g, act):
        return dict(in_ch=i, out_ch=o, k=k, pad=(k - 1) // 2, stride=s,
                    groups=g, act=act)

    cfgs = [c(in_channels, channels, kernel_sizes[0], 1, 1, True)]
    in_chs, out_chs, groups = channels, channels, 4
    for ds in downsample_scales:
        cfgs.append(c(in_chs, out_chs, kernel_sizes[1], ds, groups, True))
        in_chs = out_chs
        out_chs = min(in_chs * 2, max_downsample_channels)
        groups = min(groups * 4, max_groups)
    out_chs = min(in_chs * 2, max_downsample_channels)
    cfgs.append(c(in_chs, out_chs, kernel_sizes[2], 1, 1, True))
    cfgs.append(c(out_chs, out_channels, kernel_sizes[3], 1, 1, False))
    return cfgs


def init_disc_params(key, cfgs):
    params = []
    for cfg in cfgs:
        key, kw, kb = jax.random.split(key, 3)
        cig = cfg['in_ch'] // cfg['groups']
        fan_in = cig * cfg['k']
        w = jax.random.normal(kw, (cfg['out_ch'], cig, cfg['k']),
                              jnp.float32) * jnp.sqrt(2.0 / fan_in)
        b = jax.random.normal(kb, (cfg['out_ch'],), jnp.float32) * 0.01
        params.append((w, b))
    return params, key


def multi_scale_discriminator_forward(x_bct, all_params, cfgs):
    """x_bct: (B, 1, T) like torch.  Returns list (scales) of lists (layers),
    each element (B, C, T') in NCT — identical structure to the nn.Module."""
    outs = []
    x = x_bct.astype(jnp.float32)
    n_scales = len(all_params)
    for si, params in enumerate(all_params):
        h = x
        layer_outs = []
        for cfg, (w, bb) in zip(cfgs, params):
            h = conv1d(h, w, bb, stride=cfg['stride'], padding=cfg['pad'],
                       groups=cfg['groups'], apply_act=cfg['act'])
            layer_outs.append(h)
        outs.append(layer_outs)
        if si + 1 < n_scales:          # torch also pools after the last scale,
            x = avg_pool1d(x)          # but that result is never consumed
    return outs


# ----------------------------------------------------------------------------
# Pure-JAX reference with the SAME numerics policy (bf16 operands, f32 accum)
# ----------------------------------------------------------------------------
def ref_conv1d(x, w, b, *, stride, padding, groups, apply_act,
               negative_slope=0.1):
    y = jax.lax.conv_general_dilated(
        x.astype(jnp.bfloat16), w.astype(jnp.bfloat16),
        window_strides=(stride,), padding=[(padding, padding)],
        dimension_numbers=('NCH', 'OIH', 'NCH'),
        feature_group_count=groups,
        preferred_element_type=jnp.float32)
    y = y + b[None, :, None].astype(jnp.float32)
    if apply_act:
        y = jnp.maximum(y, negative_slope * y)
    return y


def ref_multi_scale(x_bct, all_params, cfgs):
    pool_w = jnp.full((1, 1, 4), 0.25, jnp.float32)
    pool_b = jnp.zeros((1,), jnp.float32)
    outs = []
    x = x_bct.astype(jnp.float32)
    n_scales = len(all_params)
    for si, params in enumerate(all_params):
        h = x
        layer_outs = []
        for cfg, (w, bb) in zip(cfgs, params):
            h = ref_conv1d(h, w, bb, stride=cfg['stride'], padding=cfg['pad'],
                           groups=cfg['groups'], apply_act=cfg['act'])
            layer_outs.append(h)
        outs.append(layer_outs)
        if si + 1 < n_scales:
            x = ref_conv1d(x, pool_w, pool_b, stride=2, padding=2, groups=1,
                           apply_act=False)
    return outs


# ----------------------------------------------------------------------------
if __name__ == "__main__":
    key = jax.random.PRNGKey(0)

    # ---- Unit check 1: strided grouped conv, multi-tile grid + halo path ----
    key, k1, k2, k3 = jax.random.split(key, 4)
    xu = jax.random.normal(k1, (1, 8, 4200), jnp.float32)
    wu = jax.random.normal(k2, (8, 4, 41), jnp.float32) * 0.1
    bu = jax.random.normal(k3, (8,), jnp.float32) * 0.01
    yu = jax.jit(functools.partial(conv1d, stride=2, padding=20, groups=2,
                                   apply_act=True))(xu, wu, bu)
    ru = ref_conv1d(xu, wu, bu, stride=2, padding=20, groups=2, apply_act=True)
    yu, ru = jax.block_until_ready((yu, ru))
    assert yu.shape == ru.shape, (yu.shape, ru.shape)
    err = float(jnp.max(jnp.abs(yu - ru)))
    assert err < 2e-3, f"strided grouped conv mismatch: {err}"

    # ---- Unit check 2: stride-1 conv, multi-tile grid + halo path -----------
    key, k1, k2, k3 = jax.random.split(key, 4)
    xv = jax.random.normal(k1, (1, 4, 4300), jnp.float32)
    wv = jax.random.normal(k2, (8, 4, 15), jnp.float32) * 0.2
    bv = jax.random.normal(k3, (8,), jnp.float32) * 0.01
    yv = jax.jit(functools.partial(conv1d, stride=1, padding=7, groups=1,
                                   apply_act=True))(xv, wv, bv)
    rv = ref_conv1d(xv, wv, bv, stride=1, padding=7, groups=1, apply_act=True)
    yv, rv = jax.block_until_ready((yv, rv))
    assert yv.shape == rv.shape, (yv.shape, rv.shape)
    err = float(jnp.max(jnp.abs(yv - rv)))
    assert err < 2e-3, f"stride-1 conv mismatch: {err}"

    # ---- Full multi-scale discriminator forward ------------------------------
    B, T = 2, 1024
    scales = 3

    # Small synthetic widths (architecture logic identical to the defaults).
    cfgs = build_scale_disc_configs(
        in_channels=1, out_channels=1, kernel_sizes=(15, 41, 5, 3),
        channels=16, max_downsample_channels=64, max_groups=4,
        downsample_scales=(2, 2, 4, 4, 1))

    all_params = []
    for _ in range(scales):
        params, key = init_disc_params(key, cfgs)
        all_params.append(params)

    key, kx = jax.random.split(key)
    x = jax.random.normal(kx, (B, 1, T), jnp.float32)      # (B, 1, T) like torch

    fwd = jax.jit(functools.partial(multi_scale_discriminator_forward,
                                    cfgs=cfgs))
    outs = jax.block_until_ready(fwd(x, all_params))

    ref_outs = ref_multi_scale(x, all_params, cfgs)
    assert len(outs) == scales
    for scale_out, scale_ref in zip(outs, ref_outs):
        assert len(scale_out) == len(cfgs)
        for o, r in zip(scale_out, scale_ref):
            assert o.shape == r.shape, (o.shape, r.shape)
            err = float(jnp.max(jnp.abs(o - r)))
            # Both paths use bf16 MXU operands with f32 accumulation; the
            # tolerance covers divergent bf16 rounding of intermediates
            # cascading over the 8-layer chain (accumulation-order effects).
            assert err < 1e-2, f"multi-scale forward mismatch: {err}"

    print("KERNEL_OK")
</pallas_src>

<mosaic_0001>
module attributes {stable_mosaic.version = 11 : i64} {
  func.func @_conv1d_kernel(%arg0: i32, %arg1: i32, %arg2: memref<1x16x1152xbf16, #tpu.memory_space<vmem>>, %arg3: memref<1x16x128xbf16, #tpu.memory_space<vmem>>, %arg4: memref<8x328xbf16, #tpu.memory_space<vmem>>, %arg5: memref<8x1xf32, #tpu.memory_space<vmem>>, %arg6: memref<1x8x1152xf32, #tpu.memory_space<vmem>>, %arg7: memref<16x1280xbf16, #tpu.memory_space<vmem>>, %arg8: memref<328x1152xbf16, #tpu.memory_space<vmem>>) attributes {dimension_semantics = [#tpu.dimension_semantics<parallel>, #tpu.dimension_semantics<parallel>], iteration_bounds = array<i64: 1, 2>, scalar_prefetch = 0 : i64, scratch_operands = 2 : i64, tpu.core_type = #tpu.core_type<tc>, window_params = [{transform_indices = @transform_0, window_bounds = array<i64: 1, 16, 1152>}, {transform_indices = @transform_1, window_bounds = array<i64: 1, 16, 128>}, {pipeline_mode = #tpu.pipeline_mode<synchronous>, transform_indices = @transform_2, window_bounds = array<i64: 8, 328>}, {pipeline_mode = #tpu.pipeline_mode<synchronous>, transform_indices = @transform_3, window_bounds = array<i64: 8, 1>}, {transform_indices = @transform_4, window_bounds = array<i64: 1, 8, 1152>}]} {
    %c0 = arith.constant 0 : index
    %c0_0 = arith.constant 0 : index
    %c0_1 = arith.constant 0 : index
    %0 = vector.load %arg2[%c0, %c0_0, %c0_1] : memref<1x16x1152xbf16, #tpu.memory_space<vmem>>, vector<1x16x1152xbf16>
    %1 = vector.shape_cast %0 : vector<1x16x1152xbf16> to vector<16x1152xbf16>
    %c0_2 = arith.constant 0 : index
    %c0_3 = arith.constant 0 : index
    %2 = vector.load %arg7[%c0_2, %c0_3] : memref<16x1280xbf16, #tpu.memory_space<vmem>>, vector<16x1152xbf16>
    tpu.vector_store %arg7[%c0_2, %c0_3], %1 {strides = array<i32>} : memref<16x1280xbf16, #tpu.memory_space<vmem>>, vector<16x1152xbf16>,
    %c0_4 = arith.constant 0 : index
    %c0_5 = arith.constant 0 : index
    %c0_6 = arith.constant 0 : index
    %3 = vector.load %arg3[%c0_4, %c0_5, %c0_6] : memref<1x16x128xbf16, #tpu.memory_space<vmem>>, vector<1x16x128xbf16>
    %4 = vector.shape_cast %3 : vector<1x16x128xbf16> to vector<16x128xbf16>
    %c0_7 = arith.constant 0 : index
    %c1152 = arith.constant 1152 : index
    %5 = vector.load %arg7[%c0_7, %c1152] : memref<16x1280xbf16, #tpu.memory_space<vmem>>, vector<16x128xbf16>
    tpu.vector_store %arg7[%c0_7, %c1152], %4 {strides = array<i32>} : memref<16x1280xbf16, #tpu.memory_space<vmem>>, vector<16x128xbf16>,
    %c0_8 = arith.constant 0 : index
    %c0_9 = arith.constant 0 : index
    %6 = vector.load %arg7[%c0_8, %c0_9] : memref<16x1280xbf16, #tpu.memory_space<vmem>>, vector<8x1152xbf16>
    %c0_10 = arith.constant 0 : index
    %c0_11 = arith.constant 0 : index
    %7 = vector.load %arg8[%c0_10, %c0_11] : memref<328x1152xbf16, #tpu.memory_space<vmem>>, vector<8x1152xbf16>
    tpu.vector_store %arg8[%c0_10, %c0_11], %6 {strides = array<i32>} : memref<328x1152xbf16, #tpu.memory_space<vmem>>, vector<8x1152xbf16>,
    %c8 = arith.constant 8 : index
    %c0_12 = arith.constant 0 : index
    %8 = vector.load %arg7[%c8, %c0_12] : memref<16x1280xbf16, #tpu.memory_space<vmem>>, vector<8x1152xbf16>
    %c8_13 = arith.constant 8 : index
    %c0_14 = arith.constant 0 : index
    %9 = vector.load %arg8[%c8_13, %c0_14] : memref<328x1152xbf16, #tpu.memory_space<vmem>>, vector<8x1152xbf16>
    tpu.vector_store %arg8[%c8_13, %c0_14], %8 {strides = array<i32>} : memref<328x1152xbf16, #tpu.memory_space<vmem>>, vector<8x1152xbf16>,
    %c0_15 = arith.constant 0 : index
    %c1 = arith.constant 1 : index
    %10 = vector.load %arg7[%c0_15, %c1] : memref<16x1280xbf16, #tpu.memory_space<vmem>>, vector<8x1152xbf16>
    %c16 = arith.constant 16 : index
    %c0_16 = arith.constant 0 : index
    %11 = vector.load %arg8[%c16, %c0_16] : memref<328x1152xbf16, #tpu.memory_space<vmem>>, vector<8x1152xbf16>
    tpu.vector_store %arg8[%c16, %c0_16], %10 {strides = array<i32>} : memref<328x1152xbf16, #tpu.memory_space<vmem>>, vector<8x1152xbf16>,
    %c8_17 = arith.constant 8 : index
    %c1_18 = arith.constant 1 : index
    %12 = vector.load %arg7[%c8_17, %c1_18] : memref<16x1280xbf16, #tpu.memory_space<vmem>>, vector<8x1152xbf16>
    %c24 = arith.constant 24 : index
    %c0_19 = arith.constant 0 : index
    %13 = vector.load %arg8[%c24, %c0_19] : memref<328x1152xbf16, #tpu.memory_space<vmem>>, vector<8x1152xbf16>
    tpu.vector_store %arg8[%c24, %c0_19], %12 {strides = array<i32>} : memref<328x1152xbf16, #tpu.memory_space<vmem>>, vector<8x1152xbf16>,
    %c0_20 = arith.constant 0 : index
    %c2 = arith.constant 2 : index
    %14 = vector.load %arg7[%c0_20, %c2] : memref<16x1280xbf16, #tpu.memory_space<vmem>>, vector<8x1152xbf16>
    %c32 = arith.constant 32 : index
    %c0_21 = arith.constant 0 : index
    %15 = vector.load %arg8[%c32, %c0_21] : memref<328x1152xbf16, #tpu.memory_space<vmem>>, vector<8x1152xbf16>
    tpu.vector_store %arg8[%c32, %c0_21], %14 {strides = array<i32>} : memref<328x1152xbf16, #tpu.memory_space<vmem>>, vector<8x1152xbf16>,
    %c8_22 = arith.constant 8 : index
    %c2_23 = arith.constant 2 : index
    %16 = vector.load %arg7[%c8_22, %c2_23] : memref<16x1280xbf16, #tpu.memory_space<vmem>>, vector<8x1152xbf16>
    %c40 = arith.constant 40 : index
    %c0_24 = arith.constant 0 : index
    %17 = vector.load %arg8[%c40, %c0_24] : memref<328x1152xbf16, #tpu.memory_space<vmem>>, vector<8x1152xbf16>
    tpu.vector_store %arg8[%c40, %c0_24], %16 {strides = array<i32>} : memref<328x1152xbf16, #tpu.memory_space<vmem>>, vector<8x1152xbf16>,
    %c0_25 = arith.constant 0 : index
    %c3 = arith.constant 3 : index
    %18 = vector.load %arg7[%c0_25, %c3] : memref<16x1280xbf16, #tpu.memory_space<vmem>>, vector<8x1152xbf16>
    %c48 = arith.constant 48 : index
    %c0_26 = arith.constant 0 : index
    %19 = vector.load %arg8[%c48, %c0_26] : memref<328x1152xbf16, #tpu.memory_space<vmem>>, vector<8x1152xbf16>
    tpu.vector_store %arg8[%c48, %c0_26], %18 {strides = array<i32>} : memref<328x1152xbf16, #tpu.memory_space<vmem>>, vector<8x1152xbf16>,
    %c8_27 = arith.constant 8 : index
    %c3_28 = arith.constant 3 : index
    %20 = vector.load %arg7[%c8_27, %c3_28] : memref<16x1280xbf16, #tpu.memory_space<vmem>>, vector<8x1152xbf16>
    %c56 = arith.constant 56 : index
    %c0_29 = arith.constant 0 : index
    %21 = vector.load %arg8[%c56, %c0_29] : memref<328x1152xbf16, #tpu.memory_space<vmem>>, vector<8x1152xbf16>
    tpu.vector_store %arg8[%c56, %c0_29], %20 {strides = array<i32>} : memref<328x1152xbf16, #tpu.memory_space<vmem>>, vector<8x1152xbf16>,
    %c0_30 = arith.constant 0 : index
    %c4 = arith.constant 4 : index
    %22 = vector.load %arg7[%c0_30, %c4] : memref<16x1280xbf16, #tpu.memory_space<vmem>>, vector<8x1152xbf16>
    %c64 = arith.constant 64 : index
    %c0_31 = arith.constant 0 : index
    %23 = vector.load %arg8[%c64, %c0_31] : memref<328x1152xbf16, #tpu.memory_space<vmem>>, vector<8x1152xbf16>
    tpu.vector_store %arg8[%c64, %c0_31], %22 {strides = array<i32>} : memref<328x1152xbf16, #tpu.memory_space<vmem>>, vector<8x1152xbf16>,
    %c8_32 = arith.constant 8 : index
    %c4_33 = arith.constant 4 : index
    %24 = vector.load %arg7[%c8_32, %c4_33] : memref<16x1280xbf16, #tpu.memory_space<vmem>>, vector<8x1152xbf16>
    %c72 = arith.constant 72 : index
    %c0_34 = arith.constant 0 : index
    %25 = vector.load %arg8[%c72, %c0_34] : memref<328x1152xbf16, #tpu.memory_space<vmem>>, vector<8x1152xbf16>
    tpu.vector_store %arg8[%c72, %c0_34], %24 {strides = array<i32>} : memref<328x1152xbf16, #tpu.memory_space<vmem>>, vector<8x1152xbf16>,
    %c0_35 = arith.constant 0 : index
    %c5 = arith.constant 5 : index
    %26 = vector.load %arg7[%c0_35, %c5] : memref<16x1280xbf16, #tpu.memory_space<vmem>>, vector<8x1152xbf16>
    %c80 = arith.constant 80 : index
    %c0_36 = arith.constant 0 : index
    %27 = vector.load %arg8[%c80, %c0_36] : memref<328x1152xbf16, #tpu.memory_space<vmem>>, vector<8x1152xbf16>
    tpu.vector_store %arg8[%c80, %c0_36], %26 {strides = array<i32>} : memref<328x1152xbf16, #tpu.memory_space<vmem>>, vector<8x1152xbf16>,
    %c8_37 = arith.constant 8 : index
    %c5_38 = arith.constant 5 : index
    %28 = vector.load %arg7[%c8_37, %c5_38] : memref<16x1280xbf16, #tpu.memory_space<vmem>>, vector<8x1152xbf16>
    %c88 = arith.constant 88 : index
    %c0_39 = arith.constant 0 : index
    %29 = vector.load %arg8[%c88, %c0_39] : memref<328x1152xbf16, #tpu.memory_space<vmem>>, vector<8x1152xbf16>
    tpu.vector_store %arg8[%c88, %c0_39], %28 {strides = array<i32>} : memref<328x1152xbf16, #tpu.memory_space<vmem>>, vector<8x1152xbf16>,
    %c0_40 = arith.constant 0 : index
    %c6 = arith.constant 6 : index
    %30 = vector.load %arg7[%c0_40, %c6] : memref<16x1280xbf16, #tpu.memory_space<vmem>>, vector<8x1152xbf16>
    %c96 = arith.constant 96 : index
    %c0_41 = arith.constant 0 : index
    %31 = vector.load %arg8[%c96, %c0_41] : memref<328x1152xbf16, #tpu.memory_space<vmem>>, vector<8x1152xbf16>
    tpu.vector_store %arg8[%c96, %c0_41], %30 {strides = array<i32>} : memref<328x1152xbf16, #tpu.memory_space<vmem>>, vector<8x1152xbf16>,
    %c8_42 = arith.constant 8 : index
    %c6_43 = arith.constant 6 : index
    %32 = vector.load %arg7[%c8_42, %c6_43] : memref<16x1280xbf16, #tpu.memory_space<vmem>>, vector<8x1152xbf16>
    %c104 = arith.constant 104 : index
    %c0_44 = arith.constant 0 : index
    %33 = vector.load %arg8[%c104, %c0_44] : memref<328x1152xbf16, #tpu.memory_space<vmem>>, vector<8x1152xbf16>
    tpu.vector_store %arg8[%c104, %c0_44], %32 {strides = array<i32>} : memref<328x1152xbf16, #tpu.memory_space<vmem>>, vector<8x1152xbf16>,
    %c0_45 = arith.constant 0 : index
    %c7 = arith.constant 7 : index
    %34 = vector.load %arg7[%c0_45, %c7] : memref<16x1280xbf16, #tpu.memory_space<vmem>>, vector<8x1152xbf16>
    %c112 = arith.constant 112 : index
    %c0_46 = arith.constant 0 : index
    %35 = vector.load %arg8[%c112, %c0_46] : memref<328x1152xbf16, #tpu.memory_space<vmem>>, vector<8x1152xbf16>
    tpu.vector_store %arg8[%c112, %c0_46], %34 {strides = array<i32>} : memref<328x1152xbf16, #tpu.memory_space<vmem>>, vector<8x1152xbf16>,
    %c8_47 = arith.constant 8 : index
    %c7_48 = arith.constant 7 : index
    %36 = vector.load %arg7[%c8_47, %c7_48] : memref<16x1280xbf16, #tpu.memory_space<vmem>>, vector<8x1152xbf16>
    %c120 = arith.constant 120 : index
    %c0_49 = arith.constant 0 : index
    %37 = vector.load %arg8[%c120, %c0_49] : memref<328x1152xbf16, #tpu.memory_space<vmem>>, vector<8x1152xbf16>
    tpu.vector_store %arg8[%c120, %c0_49], %36 {strides = array<i32>} : memref<328x1152xbf16, #tpu.memory_space<vmem>>, vector<8x1152xbf16>,
    %c0_50 = arith.constant 0 : index
    %c8_51 = arith.constant 8 : index
    %38 = vector.load %arg7[%c0_50, %c8_51] : memref<16x1280xbf16, #tpu.memory_space<vmem>>, vector<8x1152xbf16>
    %c128 = arith.constant 128 : index
    %c0_52 = arith.constant 0 : index
    %39 = vector.load %arg8[%c128, %c0_52] : memref<328x1152xbf16, #tpu.memory_space<vmem>>, vector<8x1152xbf16>
    tpu.vector_store %arg8[%c128, %c0_52], %38 {strides = array<i32>} : memref<328x1152xbf16, #tpu.memory_space<vmem>>, vector<8x1152xbf16>,
    %c8_53 = arith.constant 8 : index
    %c8_54 = arith.constant 8 : index
    %40 = vector.load %arg7[%c8_53, %c8_54] : memref<16x1280xbf16, #tpu.memory_space<vmem>>, vector<8x1152xbf16>
    %c136 = arith.constant 136 : index
    %c0_55 = arith.constant 0 : index
    %41 = vector.load %arg8[%c136, %c0_55] : memref<328x1152xbf16, #tpu.memory_space<vmem>>, vector<8x1152xbf16>
    tpu.vector_store %arg8[%c136, %c0_55], %40 {strides = array<i32>} : memref<328x1152xbf16, #tpu.memory_space<vmem>>, vector<8x1152xbf16>,
    %c0_56 = arith.constant 0 : index
    %c9 = arith.constant 9 : index
    %42 = vector.load %arg7[%c0_56, %c9] : memref<16x1280xbf16, #tpu.memory_space<vmem>>, vector<8x1152xbf16>
    %c144 = arith.constant 144 : index
    %c0_57 = arith.constant 0 : index
    %43 = vector.load %arg8[%c144, %c0_57] : memref<328x1152xbf16, #tpu.memory_space<vmem>>, vector<8x1152xbf16>
    tpu.vector_store %arg8[%c144, %c0_57], %42 {strides = array<i32>} : memref<328x1152xbf16, #tpu.memory_space<vmem>>, vector<8x1152xbf16>,
    %c8_58 = arith.constant 8 : index
    %c9_59 = arith.constant 9 : index
    %44 = vector.load %arg7[%c8_58, %c9_59] : memref<16x1280xbf16, #tpu.memory_space<vmem>>, vector<8x1152xbf16>
    %c152 = arith.constant 152 : index
    %c0_60 = arith.constant 0 : index
    %45 = vector.load %arg8[%c152, %c0_60] : memref<328x1152xbf16, #tpu.memory_space<vmem>>, vector<8x1152xbf16>
    tpu.vector_store %arg8[%c152, %c0_60], %44 {strides = array<i32>} : memref<328x1152xbf16, #tpu.memory_space<vmem>>, vector<8x1152xbf16>,
    %c0_61 = arith.constant 0 : index
    %c10 = arith.constant 10 : index
    %46 = vector.load %arg7[%c0_61, %c10] : memref<16x1280xbf16, #tpu.memory_space<vmem>>, vector<8x1152xbf16>
    %c160 = arith.constant 160 : index
    %c0_62 = arith.constant 0 : index
    %47 = vector.load %arg8[%c160, %c0_62] : memref<328x1152xbf16, #tpu.memory_space<vmem>>, vector<8x1152xbf16>
    tpu.vector_store %arg8[%c160, %c0_62], %46 {strides = array<i32>} : memref<328x1152xbf16, #tpu.memory_space<vmem>>, vector<8x1152xbf16>,
    %c8_63 = arith.constant 8 : index
    %c10_64 = arith.constant 10 : index
    %48 = vector.load %arg7[%c8_63, %c10_64] : memref<16x1280xbf16, #tpu.memory_space<vmem>>, vector<8x1152xbf16>
    %c168 = arith.constant 168 : index
    %c0_65 = arith.constant 0 : index
    %49 = vector.load %arg8[%c168, %c0_65] : memref<328x1152xbf16, #tpu.memory_space<vmem>>, vector<8x1152xbf16>
    tpu.vector_store %arg8[%c168, %c0_65], %48 {strides = array<i32>} : memref<328x1152xbf16, #tpu.memory_space<vmem>>, vector<8x1152xbf16>,
    %c0_66 = arith.constant 0 : index
    %c11 = arith.constant 11 : index
    %50 = vector.load %arg7[%c0_66, %c11] : memref<16x1280xbf16, #tpu.memory_space<vmem>>, vector<8x1152xbf16>
    %c176 = arith.constant 176 : index
    %c0_67 = arith.constant 0 : index
    %51 = vector.load %arg8[%c176, %c0_67] : memref<328x1152xbf16, #tpu.memory_space<vmem>>, vector<8x1152xbf16>
    tpu.vector_store %arg8[%c176, %c0_67], %50 {strides = array<i32>} : memref<328x1152xbf16, #tpu.memory_space<vmem>>, vector<8x1152xbf16>,
    %c8_68 = arith.constant 8 : index
    %c11_69 = arith.constant 11 : index
    %52 = vector.load %arg7[%c8_68, %c11_69] : memref<16x1280xbf16, #tpu.memory_space<vmem>>, vector<8x1152xbf16>
    %c184 = arith.constant 184 : index
    %c0_70 = arith.constant 0 : index
    %53 = vector.load %arg8[%c184, %c0_70] : memref<328x1152xbf16, #tpu.memory_space<vmem>>, vector<8x1152xbf16>
    tpu.vector_store %arg8[%c184, %c0_70], %52 {strides = array<i32>} : memref<328x1152xbf16, #tpu.memory_space<vmem>>, vector<8x1152xbf16>,
    %c0_71 = arith.constant 0 : index
    %c12 = arith.constant 12 : index
    %54 = vector.load %arg7[%c0_71, %c12] : memref<16x1280xbf16, #tpu.memory_space<vmem>>, vector<8x1152xbf16>
    %c192 = arith.constant 192 : index
    %c0_72 = arith.constant 0 : index
    %55 = vector.load %arg8[%c192, %c0_72] : memref<328x1152xbf16, #tpu.memory_space<vmem>>, vector<8x1152xbf16>
    tpu.vector_store %arg8[%c192, %c0_72], %54 {strides = array<i32>} : memref<328x1152xbf16, #tpu.memory_space<vmem>>, vector<8x1152xbf16>,
    %c8_73 = arith.constant 8 : index
    %c12_74 = arith.constant 12 : index
    %56 = vector.load %arg7[%c8_73, %c12_74] : memref<16x1280xbf16, #tpu.memory_space<vmem>>, vector<8x1152xbf16>
    %c200 = arith.constant 200 : index
    %c0_75 = arith.constant 0 : index
    %57 = vector.load %arg8[%c200, %c0_75] : memref<328x1152xbf16, #tpu.memory_space<vmem>>, vector<8x1152xbf16>
    tpu.vector_store %arg8[%c200, %c0_75], %56 {strides = array<i32>} : memref<328x1152xbf16, #tpu.memory_space<vmem>>, vector<8x1152xbf16>,
    %c0_76 = arith.constant 0 : index
    %c13 = arith.constant 13 : index
    %58 = vector.load %arg7[%c0_76, %c13] : memref<16x1280xbf16, #tpu.memory_space<vmem>>, vector<8x1152xbf16>
    %c208 = arith.constant 208 : index
    %c0_77 = arith.constant 0 : index
    %59 = vector.load %arg8[%c208, %c0_77] : memref<328x1152xbf16, #tpu.memory_space<vmem>>, vector<8x1152xbf16>
    tpu.vector_store %arg8[%c208, %c0_77], %58 {strides = array<i32>} : memref<328x1152xbf16, #tpu.memory_space<vmem>>, vector<8x1152xbf16>,
    %c8_78 = arith.constant 8 : index
    %c13_79 = arith.constant 13 : index
    %60 = vector.load %arg7[%c8_78, %c13_79] : memref<16x1280xbf16, #tpu.memory_space<vmem>>, vector<8x1152xbf16>
    %c216 = arith.constant 216 : index
    %c0_80 = arith.constant 0 : index
    %61 = vector.load %arg8[%c216, %c0_80] : memref<328x1152xbf16, #tpu.memory_space<vmem>>, vector<8x1152xbf16>
    tpu.vector_store %arg8[%c216, %c0_80], %60 {strides = array<i32>} : memref<328x1152xbf16, #tpu.memory_space<vmem>>, vector<8x1152xbf16>,
    %c0_81 = arith.constant 0 : index
    %c14 = arith.constant 14 : index
    %62 = vector.load %arg7[%c0_81, %c14] : memref<16x1280xbf16, #tpu.memory_space<vmem>>, vector<8x1152xbf16>
    %c224 = arith.constant 224 : index
    %c0_82 = arith.constant 0 : index
    %63 = vector.load %arg8[%c224, %c0_82] : memref<328x1152xbf16, #tpu.memory_space<vmem>>, vector<8x1152xbf16>
    tpu.vector_store %arg8[%c224, %c0_82], %62 {strides = array<i32>} : memref<328x1152xbf16, #tpu.memory_space<vmem>>, vector<8x1152xbf16>,
    %c8_83 = arith.constant 8 : index
    %c14_84 = arith.constant 14 : index
    %64 = vector.load %arg7[%c8_83, %c14_84] : memref<16x1280xbf16, #tpu.memory_space<vmem>>, vector<8x1152xbf16>
    %c232 = arith.constant 232 : index
    %c0_85 = arith.constant 0 : index
    %65 = vector.load %arg8[%c232, %c0_85] : memref<328x1152xbf16, #tpu.memory_space<vmem>>, vector<8x1152xbf16>
    tpu.vector_store %arg8[%c232, %c0_85], %64 {strides = array<i32>} : memref<328x1152xbf16, #tpu.memory_space<vmem>>, vector<8x1152xbf16>,
    %c0_86 = arith.constant 0 : index
    %c15 = arith.constant 15 : index
    %66 = vector.load %arg7[%c0_86, %c15] : memref<16x1280xbf16, #tpu.memory_space<vmem>>, vector<8x1152xbf16>
    %c240 = arith.constant 240 : index
    %c0_87 = arith.constant 0 : index
    %67 = vector.load %arg8[%c240, %c0_87] : memref<328x1152xbf16, #tpu.memory_space<vmem>>, vector<8x1152xbf16>
    tpu.vector_store %arg8[%c240, %c0_87], %66 {strides = array<i32>} : memref<328x1152xbf16, #tpu.memory_space<vmem>>, vector<8x1152xbf16>,
    %c8_88 = arith.constant 8 : index
    %c15_89 = arith.constant 15 : index
    %68 = vector.load %arg7[%c8_88, %c15_89] : memref<16x1280xbf16, #tpu.memory_space<vmem>>, vector<8x1152xbf16>
    %c248 = arith.constant 248 : index
    %c0_90 = arith.constant 0 : index
    %69 = vector.load %arg8[%c248, %c0_90] : memref<328x1152xbf16, #tpu.memory_space<vmem>>, vector<8x1152xbf16>
    tpu.vector_store %arg8[%c248, %c0_90], %68 {strides = array<i32>} : memref<328x1152xbf16, #tpu.memory_space<vmem>>, vector<8x1152xbf16>,
    %c0_91 = arith.constant 0 : index
    %c16_92 = arith.constant 16 : index
    %70 = vector.load %arg7[%c0_91, %c16_92] : memref<16x1280xbf16, #tpu.memory_space<vmem>>, vector<8x1152xbf16>
    %c256 = arith.constant 256 : index
    %c0_93 = arith.constant 0 : index
    %71 = vector.load %arg8[%c256, %c0_93] : memref<328x1152xbf16, #tpu.memory_space<vmem>>, vector<8x1152xbf16>
    tpu.vector_store %arg8[%c256, %c0_93], %70 {strides = array<i32>} : memref<328x1152xbf16, #tpu.memory_space<vmem>>, vector<8x1152xbf16>,
    %c8_94 = arith.constant 8 : index
    %c16_95 = arith.constant 16 : index
    %72 = vector.load %arg7[%c8_94, %c16_95] : memref<16x1280xbf16, #tpu.memory_space<vmem>>, vector<8x1152xbf16>
    %c264 = arith.constant 264 : index
    %c0_96 = arith.constant 0 : index
    %73 = vector.load %arg8[%c264, %c0_96] : memref<328x1152xbf16, #tpu.memory_space<vmem>>, vector<8x1152xbf16>
    tpu.vector_store %arg8[%c264, %c0_96], %72 {strides = array<i32>} : memref<328x1152xbf16, #tpu.memory_space<vmem>>, vector<8x1152xbf16>,
    %c0_97 = arith.constant 0 : index
    %c17 = arith.constant 17 : index
    %74 = vector.load %arg7[%c0_97, %c17] : memref<16x1280xbf16, #tpu.memory_space<vmem>>, vector<8x1152xbf16>
    %c272 = arith.constant 272 : index
    %c0_98 = arith.constant 0 : index
    %75 = vector.load %arg8[%c272, %c0_98] : memref<328x1152xbf16, #tpu.memory_space<vmem>>, vector<8x1152xbf16>
    tpu.vector_store %arg8[%c272, %c0_98], %74 {strides = array<i32>} : memref<328x1152xbf16, #tpu.memory_space<vmem>>, vector<8x1152xbf16>,
    %c8_99 = arith.constant 8 : index
    %c17_100 = arith.constant 17 : index
    %76 = vector.load %arg7[%c8_99, %c17_100] : memref<16x1280xbf16, #tpu.memory_space<vmem>>, vector<8x1152xbf16>
    %c280 = arith.constant 280 : index
    %c0_101 = arith.constant 0 : index
    %77 = vector.load %arg8[%c280, %c0_101] : memref<328x1152xbf16, #tpu.memory_space<vmem>>, vector<8x1152xbf16>
    tpu.vector_store %arg8[%c280, %c0_101], %76 {strides = array<i32>} : memref<328x1152xbf16, #tpu.memory_space<vmem>>, vector<8x1152xbf16>,
    %c0_102 = arith.constant 0 : index
    %c18 = arith.constant 18 : index
    %78 = vector.load %arg7[%c0_102, %c18] : memref<16x1280xbf16, #tpu.memory_space<vmem>>, vector<8x1152xbf16>
    %c288 = arith.constant 288 : index
    %c0_103 = arith.constant 0 : index
    %79 = vector.load %arg8[%c288, %c0_103] : memref<328x1152xbf16, #tpu.memory_space<vmem>>, vector<8x1152xbf16>
    tpu.vector_store %arg8[%c288, %c0_103], %78 {strides = array<i32>} : memref<328x1152xbf16, #tpu.memory_space<vmem>>, vector<8x1152xbf16>,
    %c8_104 = arith.constant 8 : index
    %c18_105 = arith.constant 18 : index
    %80 = vector.load %arg7[%c8_104, %c18_105] : memref<16x1280xbf16, #tpu.memory_space<vmem>>, vector<8x1152xbf16>
    %c296 = arith.constant 296 : index
    %c0_106 = arith.constant 0 : index
    %81 = vector.load %arg8[%c296, %c0_106] : memref<328x1152xbf16, #tpu.memory_space<vmem>>, vector<8x1152xbf16>
    tpu.vector_store %arg8[%c296, %c0_106], %80 {strides = array<i32>} : memref<328x1152xbf16, #tpu.memory_space<vmem>>, vector<8x1152xbf16>,
    %c0_107 = arith.constant 0 : index
    %c19 = arith.constant 19 : index
    %82 = vector.load %arg7[%c0_107, %c19] : memref<16x1280xbf16, #tpu.memory_space<vmem>>, vector<8x1152xbf16>
    %c304 = arith.constant 304 : index
    %c0_108 = arith.constant 0 : index
    %83 = vector.load %arg8[%c304, %c0_108] : memref<328x1152xbf16, #tpu.memory_space<vmem>>, vector<8x1152xbf16>
    tpu.vector_store %arg8[%c304, %c0_108], %82 {strides = array<i32>} : memref<328x1152xbf16, #tpu.memory_space<vmem>>, vector<8x1152xbf16>,
    %c8_109 = arith.constant 8 : index
    %c19_110 = arith.constant 19 : index
    %84 = vector.load %arg7[%c8_109, %c19_110] : memref<16x1280xbf16, #tpu.memory_space<vmem>>, vector<8x1152xbf16>
    %c312 = arith.constant 312 : index
    %c0_111 = arith.constant 0 : index
    %85 = vector.load %arg8[%c312, %c0_111] : memref<328x1152xbf16, #tpu.memory_space<vmem>>, vector<8x1152xbf16>
    tpu.vector_store %arg8[%c312, %c0_111], %84 {strides = array<i32>} : memref<328x1152xbf16, #tpu.memory_space<vmem>>, vector<8x1152xbf16>,
    %c0_112 = arith.constant 0 : index
    %c20 = arith.constant 20 : index
    %86 = vector.load %arg7[%c0_112, %c20] : memref<16x1280xbf16, #tpu.memory_space<vmem>>, vector<8x1152xbf16>
    %c320 = arith.constant 320 : index
    %c0_113 = arith.constant 0 : index
    %87 = vector.load %arg8[%c320, %c0_113] : memref<328x1152xbf16, #tpu.memory_space<vmem>>, vector<8x1152xbf16>
    tpu.vector_store %arg8[%c320, %c0_113], %86 {strides = array<i32>} : memref<328x1152xbf16, #tpu.memory_space<vmem>>, vector<8x1152xbf16>,
    %c0_114 = arith.constant 0 : index
    %c0_115 = arith.constant 0 : index
    %88 = vector.load %arg4[%c0_114, %c0_115] : memref<8x328xbf16, #tpu.memory_space<vmem>>, vector<8x328xbf16>
    %c0_116 = arith.constant 0 : index
    %c0_117 = arith.constant 0 : index
    %89 = vector.load %arg8[%c0_116, %c0_117] : memref<328x1152xbf16, #tpu.memory_space<vmem>>, vector<328x1152xbf16>
    %cst = arith.constant dense<0.000000e+00> : vector<8x1152xf32>
    %90 = tpu.matmul %88, %89, %cst {dimension_numbers = #tpu.dot_dimension_numbers<[1], [0], [0], [1], [0, 0, 1, 1], [], []>} : vector<8x328xbf16>, vector<328x1152xbf16>, vector<8x1152xf32> -> vector<8x1152xf32>
    %c0_118 = arith.constant 0 : index
    %c0_119 = arith.constant 0 : index
    %91 = vector.load %arg5[%c0_118, %c0_119] : memref<8x1xf32, #tpu.memory_space<vmem>>, vector<8x1xf32>
    %92 = vector.broadcast %91 : vector<8x1xf32> to vector<8x1152xf32>
    %93 = arith.addf %90, %92 : vector<8x1152xf32>
    %cst_120 = arith.constant 1.000000e-01 : f32
    %94 = vector.broadcast %cst_120 : f32 to vector<8x1152xf32>
    %95 = arith.mulf %94, %93 : vector<8x1152xf32>
    %96 = arith.maximumf %93, %95 : vector<8x1152xf32>
    %c0_121 = arith.constant 0 : index
    %c0_122 = arith.constant 0 : index
    %c0_123 = arith.constant 0 : index
    %97 = vector.load %arg6[%c0_121, %c0_122, %c0_123] : memref<1x8x1152xf32, #tpu.memory_space<vmem>>, vector<1x8x1152xf32>
    %98 = vector.shape_cast %97 : vector<1x8x1152xf32> to vector<8x1152xf32>
    %99 = vector.shape_cast %96 : vector<8x1152xf32> to vector<1x8x1152xf32>
    tpu.vector_store %arg6[%c0_121, %c0_122, %c0_123], %99 {strides = array<i32>} : memref<1x8x1152xf32, #tpu.memory_space<vmem>>, vector<1x8x1152xf32>,
    return
  }
  func.func @transform_0(%arg0: i32, %arg1: i32) -> (i32, i32, i32) {
    %c0_i32 = arith.constant 0 : i32
    %c0_i32_0 = arith.constant 0 : i32
    return %arg0, %c0_i32, %arg1 : i32, i32, i32
  }
  func.func @transform_1(%arg0: i32, %arg1: i32) -> (i32, i32, i32) {
    %c1_i32 = arith.constant 1 : i32
    %0 = arith.addi %arg1, %c1_i32 : i32
    %c9_i32 = arith.constant 9 : i32
    %1 = arith.muli %0, %c9_i32 : i32
    %c0_i32 = arith.constant 0 : i32
    %c0_i32_0 = arith.constant 0 : i32
    return %arg0, %c0_i32, %1 : i32, i32, i32
  }
  func.func @transform_2(%arg0: i32, %arg1: i32) -> (i32, i32) {
    %c0_i32 = arith.constant 0 : i32
    %c0_i32_0 = arith.constant 0 : i32
    %c0_i32_1 = arith.constant 0 : i32
    return %c0_i32, %c0_i32_0 : i32, i32
  }
  func.func @transform_3(%arg0: i32, %arg1: i32) -> (i32, i32) {
    %c0_i32 = arith.constant 0 : i32
    %c0_i32_0 = arith.constant 0 : i32
    %c0_i32_1 = arith.constant 0 : i32
    return %c0_i32, %c0_i32_0 : i32, i32
  }
  func.func @transform_4(%arg0: i32, %arg1: i32) -> (i32, i32, i32) {
    %c0_i32 = arith.constant 0 : i32
    %c0_i32_0 = arith.constant 0 : i32
    return %arg0, %c0_i32, %arg1 : i32, i32, i32
  }
}

</mosaic_0001>

<llo_original>
// kernel: conv1d.1
$region0: #{conv1d.1}
  #allocation0 [shape = 'u32[]', space=smem, size = 0x4, offset = 0x4, fixed_abs, tag = 'smem constant byte address 0x4 - core index']
  #allocation1 [shape = 'u32[144,128]{1,0:T(1,128)}', space=vmem, size = 0x12000, scoped, tag = 'internal scratch']
  #allocation2 [shape = 'bf16[16,1280]{1,0:T(16,128)(2,1)}', space=vmem, size = 0xa000, scoped, tag = 'scratch operand']
  #allocation3 [shape = 'bf16[328,1152]{1,0:T(8,128)(2,1)}', space=vmem, size = 0xb8800, scoped, tag = 'scratch operand']
  %s0 = inlined_call_operand.vmem [shape: bf16[1,16,3456], index: 0, kind: input, shape index: {}, may-alias: {0,1}]
  %s1 = inlined_call_operand.vmem [shape: bf16[1,16,3456], index: 1, kind: input, shape index: {}, may-alias: {0,1}]
  %s2 = inlined_call_operand.vmem [shape: bf16[8,328], index: 2, kind: input, shape index: {}]
  %s3 = inlined_call_operand.vmem [shape: f32[8,1], index: 3, kind: input, shape index: {}]
  %s4 = inlined_call_operand.vmem [shape: f32[1,8,2304], index: 4, kind: output, shape index: {}]
  %s5 = sld [smem:[#allocation0]]
  $region116: #{conv1d.1} parent=0
    _
  %s7 = ssub.s32 1, %s5
  %s8 = scalar_select 0, %s7, %s5
  $region1: #{conv1d.1} parent=0
    #allocation4 [shape = 'u8[73728]{0}', space=vmem, size = 0x12000, scoped, tag = 'input window, operand 0']
    #allocation5 [shape = 'u8[8192]{0}', space=vmem, size = 0x2000, scoped, tag = 'input window, operand 1']
    loop: start=0, step=1, limit=4
    $region2: #{conv1d.1} parent=1 // loop_pre_header
      _
    $region3: #{conv1d.1} parent=1 // loop_header
      %s10 = sphi 0, %s14
      %p11 = scmp.ge.s32.totalorder %s10, 4
      %s17 = sphi 0, %s29
      %s18 = sphi 0, %s25
      %s19 = sphi 0, %s17
      %s20 = sphi 0, %s18
      %s21 = sphi 0, %s19
      %s22 = sphi 0, %s20
      %s34 = sphi 0, %s36
      %s37 = sphi 0, %s34
      %s38 = sphi 0, %s37
      %s54 = sphi 0, %s38
      %s66 = sphi 0, %s68
      %s69 = sphi 0, %s66
      %s70 = sphi 0, %s69
      %s86 = sphi 0, %s70
      %s90 = sphi 0, %s90
      %s92 = sphi 0, %s90
      %s93 = sphi 0, %s92
      %s107 = sphi 0, %s93
      %s111 = sphi 0, %s111
      %s113 = sphi 0, %s111
      %s114 = sphi 0, %s113
      %s128 = sphi 0, %s114
      %s136 = sphi 0, %s138
      %s139 = sphi 0, %s136
      %s140 = sphi 0, %s139
      %s156 = sphi 0, %s140
    $region4: #{conv1d.1} parent=1 // loop_header_branch
      %13 = sbr.rel (%p11) target = $region8
    $region5: #{conv1d.1} parent=1 // loop_body
      %s15 = ssub.s32 %s10, 1
      %s16 = ssub.s32 %s10, 2
      %s23 = sadd.s32 1, %s18
      %p24 = scmp.ge.s32.totalorder %s23, 2
      %s25 = scalar_select %p24, 0, %s23
      %s26 = sadd.s32 1, %s17
      %s27 = scalar_select %p24, %s26, %s17
      %p28 = scmp.ge.s32.totalorder %s27, 1
      %s29 = scalar_select %p28, 0, %s27
      %s30 = ssub.s32 %s17, %s29
      %s31 = ssub.s32 %s18, %s25
      %s32 = sor.u32 %s30, %s31
      %p33 = scmp.eq.s32.totalorder %s32, 0
      %s35 = sadd.s32 %s34, 1
      %s36 = scalar_select %p33, %s34, %s35
      %p39 = pneg %p33
      %p40 = scmp.eq.s32.totalorder %s10, 1
      %p41 = por %p39, %p40
      %p42 = scmp.ne.s32.totalorder %s34, %s37
      %p43 = scmp.eq.s32.totalorder %s10, 0
      %p44 = por %p42, %p43
      %p45 = scmp.ne.s32.totalorder %s34, %s37
      %p46 = scmp.eq.s32.totalorder %s15, 1
      %p47 = por %p45, %p46
      %p48 = scmp.ne.s32.totalorder %s37, %s38
      %p49 = scmp.eq.s32.totalorder %s15, 0
      %p50 = por %p48, %p49
      %p51 = scmp.ne.s32.totalorder %s37, %s38
      %p52 = scmp.eq.s32.totalorder %s16, 1
      %p53 = por %p51, %p52
      %p55 = scmp.ne.s32.totalorder %s38, %s54
      %p56 = scmp.eq.s32.totalorder %s16, 0
      %p57 = por %p55, %p56
      %s58 = sadd.s32 %s18, 1
      %s59 = smul.u32 %s58, 9
      %s60 = sadd.s32 %s25, 1
      %s61 = smul.u32 %s60, 9
      %s62 = ssub.s32 %s17, %s29
      %s63 = ssub.s32 %s59, %s61
      %s64 = sor.u32 %s62, %s63
      %p65 = scmp.eq.s32.totalorder %s64, 0
      %s67 = sadd.s32 %s66, 1
      %s68 = scalar_select %p65, %s66, %s67
      %p71 = pneg %p65
      %p72 = scmp.eq.s32.totalorder %s10, 1
      %p73 = por %p71, %p72
      %p74 = scmp.ne.s32.totalorder %s66, %s69
      %p75 = scmp.eq.s32.totalorder %s10, 0
      %p76 = por %p74, %p75
      %p77 = scmp.ne.s32.totalorder %s66, %s69
      %p78 = scmp.eq.s32.totalorder %s15, 1
      %p79 = por %p77, %p78
      %p80 = scmp.ne.s32.totalorder %s69, %s70
      %p81 = scmp.eq.s32.totalorder %s15, 0
      %p82 = por %p80, %p81
      %p83 = scmp.ne.s32.totalorder %s69, %s70
      %p84 = scmp.eq.s32.totalorder %s16, 1
      %p85 = por %p83, %p84
      %p87 = scmp.ne.s32.totalorder %s70, %s86
      %p88 = scmp.eq.s32.totalorder %s16, 0
      %p89 = por %p87, %p88
      %s91 = sadd.s32 %s90, 1
      %p94 = scmp.eq.s32.totalorder %s10, 1
      %p95 = scmp.ne.s32.totalorder %s90, %s92
      %p96 = scmp.eq.s32.totalorder %s10, 0
      %p97 = por %p95, %p96
      %p98 = scmp.ne.s32.totalorder %s90, %s92
      %p99 = scmp.eq.s32.totalorder %s15, 1
      %p100 = por %p98, %p99
      %p101 = scmp.ne.s32.totalorder %s92, %s93
      %p102 = scmp.eq.s32.totalorder %s15, 0
      %p103 = por %p101, %p102
      %p104 = scmp.ne.s32.totalorder %s92, %s93
      %p105 = scmp.eq.s32.totalorder %s16, 1
      %p106 = por %p104, %p105
      %p108 = scmp.ne.s32.totalorder %s93, %s107
      %p109 = scmp.eq.s32.totalorder %s16, 0
      %p110 = por %p108, %p109
      %s112 = sadd.s32 %s111, 1
      %p115 = scmp.eq.s32.totalorder %s10, 1
      %p116 = scmp.ne.s32.totalorder %s111, %s113
      %p117 = scmp.eq.s32.totalorder %s10, 0
      %p118 = por %p116, %p117
      %p119 = scmp.ne.s32.totalorder %s111, %s113
      %p120 = scmp.eq.s32.totalorder %s15, 1
      %p121 = por %p119, %p120
      %p122 = scmp.ne.s32.totalorder %s113, %s114
      %p123 = scmp.eq.s32.totalorder %s15, 0
      %p124 = por %p122, %p123
      %p125 = scmp.ne.s32.totalorder %s113, %s114
      %p126 = scmp.eq.s32.totalorder %s16, 1
      %p127 = por %p125, %p126
      %p129 = scmp.ne.s32.totalorder %s114, %s128
      %p130 = scmp.eq.s32.totalorder %s16, 0
      %p131 = por %p129, %p130
      %s132 = ssub.s32 %s17, %s29
      %s133 = ssub.s32 %s18, %s25
      %s134 = sor.u32 %s132, %s133
      %p135 = scmp.eq.s32.totalorder %s134, 0
      %s137 = sadd.s32 %s136, 1
      %s138 = scalar_select %p135, %s136, %s137
      %p141 = pneg %p135
      %p142 = scmp.eq.s32.totalorder %s10, 1
      %p143 = por %p141, %p142
      %p144 = scmp.ne.s32.totalorder %s136, %s139
      %p145 = scmp.eq.s32.totalorder %s10, 0
      %p146 = por %p144, %p145
      %p147 = scmp.ne.s32.totalorder %s136, %s139
      %p148 = scmp.eq.s32.totalorder %s15, 1
      %p149 = por %p147, %p148
      %p150 = scmp.ne.s32.totalorder %s139, %s140
      %p151 = scmp.eq.s32.totalorder %s15, 0
      %p152 = por %p150, %p151
      %p153 = scmp.ne.s32.totalorder %s139, %s140
      %p154 = scmp.eq.s32.totalorder %s16, 1
      %p155 = por %p153, %p154
      %p157 = scmp.ne.s32.totalorder %s140, %s156
      %p158 = scmp.eq.s32.totalorder %s16, 0
      %p159 = por %p157, %p158
      %p160 = scmp.le.s32.totalorder 1, %s10
      %p161 = scmp.lt.s32.totalorder %s10, 3
      %p162 = pnand %p160, %p161
      %p163 = pneg %p162
      // Predicated region
      $region9: #{conv1d.1} parent=5 // pred_check
        _
      $region10: #{conv1d.1} parent=5 // pred_check_branch
        %165 = sbr.rel (%p162) target = $region12
      $region11: #{conv1d.1} parent=5 // pred_region
        %s166 = ssub.s32 %s10, 1
        // Predicated region
        $region13: #{conv1d.1} parent=11 // pred_check
          %p167 = pneg %p103
        $region14: #{conv1d.1} parent=11 // pred_check_branch
          %169 = sbr.rel (%p167) target = $region16
        $region15: #{conv1d.1} parent=11 // pred_region
          _
        $region16: #{conv1d.1} parent=11 // pred_fallthru
          _
        // Predicated region
        $region17: #{conv1d.1} parent=11 // pred_check
          %p170 = pneg %p124
        $region18: #{conv1d.1} parent=11 // pred_check_branch
          %172 = sbr.rel (%p170) target = $region20
        $region19: #{conv1d.1} parent=11 // pred_region
          _
        $region20: #{conv1d.1} parent=11 // pred_fallthru
          _
      $region12: #{conv1d.1} parent=5 // pred_fallthru
        _
      %p173 = scmp.lt.s32.totalorder %s10, 2
      // Predicated region
      $region21: #{conv1d.1} parent=5 // pred_check
        %p174 = pneg %p173
      $region22: #{conv1d.1} parent=5 // pred_check_branch
        %176 = sbr.rel (%p174) target = $region24
      $region23: #{conv1d.1} parent=5 // pred_region
        // Predicated region
        $region25: #{conv1d.1} parent=23 // pred_check
          %p177 = pneg %p44
        $region26: #{conv1d.1} parent=23 // pred_check_branch
          %179 = sbr.rel (%p177) target = $region28
        $region27: #{conv1d.1} parent=23 // pred_region
          %s180 = sand.u32 %s34, 1
          %s181 = sand.u32 %s34, 1
          %s182 = smul.addr %s181, 72
          %s183 = scalar_lea.vmem [#allocation4], %s182
          %s184 = smul.u32 9, %s18
          %s185 = smul.addr %s17, 54
          %s186 = sadd.s32 %s184, %s185
          %s187 = smul.addr %s186, 4
          %s188 = scalar_lea.vmem %s0, %s187
          // Predicated region
          $region29: #{conv1d.1} parent=27 // pred_check
            _
          $region30: #{conv1d.1} parent=27 // pred_check_branch
            %190 = sbr.rel (0) target = $region32
          $region31: #{conv1d.1} parent=27 // pred_region
            // Predicated region
            $region33: #{conv1d.1} parent=31 // pred_check
              _
            $region34: #{conv1d.1} parent=31 // pred_check_branch
              %192 = sbr.rel (0) target = $region36
            $region35: #{conv1d.1} parent=31 // pred_region
              %s193 = scalar_lea.vmem %s188, 32
              %s194 = scalar_lea.vmem %s183, 32 [#allocation4]
              loop: start=0, step=1, limit=1
              $region37: #{conv1d.1} parent=35 // loop_pre_header
                _
              $region38: #{conv1d.1} parent=35 // loop_header
                %s196 = sphi 0, %s200
                %p197 = scmp.ge.s32.totalorder %s196, 1
                %s201 = sphi %s188, %s188
                %s202 = sphi %s183, %s183
              $region39: #{conv1d.1} parent=35 // loop_header_branch
                %199 = sbr.rel (%p197) target = $region43
              $region40: #{conv1d.1} parent=35 // loop_body
                %v203 = vld [vmem:[%s201] sm:$0xff]
                %204 = vst [vmem:[%s202] sm:$0xff] %v203
                %v205 = vld [vmem:[%s201 + $0x8] sm:$0xff]
                %206 = vst [vmem:[%s202 + $0x8] sm:$0xff] %v205
                %v207 = vld [vmem:[%s201 + $0x10] sm:$0xff]
                %208 = vst [vmem:[%s202 + $0x10] sm:$0xff] %v207
                %v209 = vld [vmem:[%s201 + $0x18] sm:$0xff]
                %210 = vst [vmem:[%s202 + $0x18] sm:$0xff] %v209
                %v211 = vld [vmem:[%s201 + $0x6c] sm:$0xff]
                %212 = vst [vmem:[%s202 + $0x24] sm:$0xff] %v211
                %v213 = vld [vmem:[%s201 + $0x74] sm:$0xff]
                %214 = vst [vmem:[%s202 + $0x2c] sm:$0xff] %v213
                %v215 = vld [vmem:[%s201 + $0x7c] sm:$0xff]
                %216 = vst [vmem:[%s202 + $0x34] sm:$0xff] %v215
                %v217 = vld [vmem:[%s201 + $0x84] sm:$0xff]
                %218 = vst [vmem:[%s202 + $0x3c] sm:$0xff] %v217
              $region41: #{conv1d.1} parent=35 // loop_footer
                %s200 = sadd.s32 1, %s196
              $region42: #{conv1d.1} parent=35 // loop_footer_branch
                %195 = sbr.rel target = $region38
              $region43: #{conv1d.1} parent=35 // loop_exit
                _
              loop: start=0, step=1, limit=1
              $region44: #{conv1d.1} parent=35 // loop_pre_header
                _
              $region45: #{conv1d.1} parent=35 // loop_header
                %s221 = sphi 0, %s225
                %p222 = scmp.ge.s32.totalorder %s221, 1
                %s226 = sphi %s193, %s193
                %s227 = sphi %s194, %s194
              $region46: #{conv1d.1} parent=35 // loop_header_branch
                %224 = sbr.rel (%p222) target = $region50
              $region47: #{conv1d.1} parent=35 // loop_body
                %v228 = vld [vmem:[%s226] sm:$0xf]
                %229 = vst [vmem:[%s227] sm:$0xf] %v228
                %v230 = vld [vmem:[%s226 + $0x6c] sm:$0xf]
                %231 = vst [vmem:[%s227 + $0x24] sm:$0xf] %v230
              $region48: #{conv1d.1} parent=35 // loop_footer
                %s225 = sadd.s32 1, %s221
              $region49: #{conv1d.1} parent=35 // loop_footer_branch
                %220 = sbr.rel target = $region45
              $region50: #{conv1d.1} parent=35 // loop_exit
                _
            $region36: #{conv1d.1} parent=31 // pred_fallthru
              _
          $region32: #{conv1d.1} parent=27 // pred_fallthru
            _
          %232 = vnop
        $region28: #{conv1d.1} parent=23 // pred_fallthru
          _
        // Predicated region
        $region51: #{conv1d.1} parent=23 // pred_check
          %p233 = pneg %p76
        $region52: #{conv1d.1} parent=23 // pred_check_branch
          %235 = sbr.rel (%p233) target = $region54
        $region53: #{conv1d.1} parent=23 // pred_region
          %s236 = sand.u32 %s66, 1
          %s237 = sand.u32 %s66, 1
          %s238 = smul.addr %s237, 8
          %s239 = scalar_lea.vmem [#allocation5], %s238
          %s240 = sadd.s32 %s18, 1
          %s241 = smul.u32 %s240, 9
          %s242 = smul.addr %s17, 54
          %s243 = sadd.s32 %s241, %s242
          %s244 = smul.addr %s243, 4
          %s245 = scalar_lea.vmem %s1, %s244
          // Predicated region
          $region55: #{conv1d.1} parent=53 // pred_check
            _
          $region56: #{conv1d.1} parent=53 // pred_check_branch
            %247 = sbr.rel (0) target = $region58
          $region57: #{conv1d.1} parent=53 // pred_region
            // Predicated region
            $region59: #{conv1d.1} parent=57 // pred_check
              _
            $region60: #{conv1d.1} parent=57 // pred_check_branch
              %249 = sbr.rel target = $region62
            $region61: #{conv1d.1} parent=57 // pred_region
              // Predicated region
              $region74: #{conv1d.1} parent=61 // pred_check
                _
              $region75: #{conv1d.1} parent=61 // pred_check_branch
                %266 = sbr.rel (0) target = $region77
              $region76: #{conv1d.1} parent=61 // pred_region
                loop: start=0, step=1, limit=1
                $region78: #{conv1d.1} parent=76 // loop_pre_header
                  _
                $region79: #{conv1d.1} parent=76 // loop_header
                  %s268 = sphi 0, %s272
                  %p269 = scmp.ge.s32.totalorder %s268, 1
                  %s273 = sphi %s245, %s245
                  %s274 = sphi %s239, %s239
                $region80: #{conv1d.1} parent=76 // loop_header_branch
                  %271 = sbr.rel (%p269) target = $region84
                $region81: #{conv1d.1} parent=76 // loop_body
                  _
                $region82: #{conv1d.1} parent=76 // loop_footer
                  %s272 = sadd.s32 1, %s268
                $region83: #{conv1d.1} parent=76 // loop_footer_branch
                  %267 = sbr.rel target = $region79
                $region84: #{conv1d.1} parent=76 // loop_exit
                  _
                loop: start=0, step=1, limit=1
                $region85: #{conv1d.1} parent=76 // loop_pre_header
                  _
                $region86: #{conv1d.1} parent=76 // loop_header
                  %s277 = sphi 0, %s281
                  %p278 = scmp.ge.s32.totalorder %s277, 1
                  %s282 = sphi %s245, %s245
                  %s283 = sphi %s239, %s239
                $region87: #{conv1d.1} parent=76 // loop_header_branch
                  %280 = sbr.rel (%p278) target = $region91
                $region88: #{conv1d.1} parent=76 // loop_body
                  %v284 = vld [vmem:[%s282] sm:$0xf]
                  %285 = vst [vmem:[%s283] sm:$0xf] %v284
                  %v286 = vld [vmem:[%s282 + $0x6c] sm:$0xf]
                  %287 = vst [vmem:[%s283 + $0x4] sm:$0xf] %v286
                $region89: #{conv1d.1} parent=76 // loop_footer
                  %s281 = sadd.s32 1, %s277
                $region90: #{conv1d.1} parent=76 // loop_footer_branch
                  %276 = sbr.rel target = $region86
                $region91: #{conv1d.1} parent=76 // loop_exit
                  _
              $region77: #{conv1d.1} parent=61 // pred_fallthru
                _
            $region62: #{conv1d.1} parent=57 // pred_fallthru
              _
            // Predicated region
            $region63: #{conv1d.1} parent=57 // pred_check
              _
            $region64: #{conv1d.1} parent=57 // pred_check_branch
              %251 = sbr.rel (0) target = $region66
            $region65: #{conv1d.1} parent=57 // pred_region
              loop: start=0, step=1, limit=1
              $region67: #{conv1d.1} parent=65 // loop_pre_header
                _
              $region68: #{conv1d.1} parent=65 // loop_header
                %s254 = sphi 0, %s258
                %p255 = scmp.ge.s32.totalorder %s254, 1
                %s259 = sphi %s245, %s245
                %s260 = sphi %s239, %s239
              $region69: #{conv1d.1} parent=65 // loop_header_branch
                %257 = sbr.rel (%p255) target = $region73
              $region70: #{conv1d.1} parent=65 // loop_body
                %v261 = vld [vmem:[%s259] sm:$0xf]
                %262 = vst [vmem:[%s260] sm:$0xf] %v261
                %v263 = vld [vmem:[%s259 + $0x6c] sm:$0xf]
                %264 = vst [vmem:[%s260 + $0x4] sm:$0xf] %v263
              $region71: #{conv1d.1} parent=65 // loop_footer
                %s258 = sadd.s32 1, %s254
              $region72: #{conv1d.1} parent=65 // loop_footer_branch
                %253 = sbr.rel target = $region68
              $region73: #{conv1d.1} parent=65 // loop_exit
                _
            $region66: #{conv1d.1} parent=57 // pred_fallthru
              _
          $region58: #{conv1d.1} parent=53 // pred_fallthru
            _
          %288 = vnop
        $region54: #{conv1d.1} parent=23 // pred_fallthru
          _
      $region24: #{conv1d.1} parent=5 // pred_fallthru
        _
      %p289 = scmp.le.s32.totalorder 1, %s10
      %p290 = scmp.lt.s32.totalorder %s10, 3
      %p291 = pnand %p289, %p290
      %p292 = pneg %p291
      // Predicated region
      $region92: #{conv1d.1} parent=5 // pred_check
        _
      $region93: #{conv1d.1} parent=5 // pred_check_branch
        %294 = sbr.rel (%p291) target = $region95
      $region94: #{conv1d.1} parent=5 // pred_region
        %s295 = ssub.s32 %s10, 1
        %s296 = sand.u32 %s37, 1
        %s297 = sand.u32 %s37, 1
        %s298 = smul.addr %s297, 72
        %s299 = scalar_lea.vmem [#allocation4], %s298
        // Predicated region
        $region96: #{conv1d.1} parent=94 // pred_check
          %p300 = pneg %p50
        $region97: #{conv1d.1} parent=94 // pred_check_branch
          %302 = sbr.rel (%p300) target = $region99
        $region98: #{conv1d.1} parent=94 // pred_region
          _
        $region99: #{conv1d.1} parent=94 // pred_fallthru
          _
        %s303 = sand.u32 %s69, 1
        %s304 = sand.u32 %s69, 1
        %s305 = smul.addr %s304, 8
        %s306 = scalar_lea.vmem [#allocation5], %s305
        // Predicated region
        $region100: #{conv1d.1} parent=94 // pred_check
          %p307 = pneg %p82
        $region101: #{conv1d.1} parent=94 // pred_check_branch
          %309 = sbr.rel (%p307) target = $region103
        $region102: #{conv1d.1} parent=94 // pred_region
          _
        $region103: #{conv1d.1} parent=94 // pred_fallthru
          _
        %s310 = sand.u32 %s37, 1
        %s311 = sand.u32 %s37, 1
        %s312 = smul.addr %s311, 72
        %s313 = scalar_lea.vmem [#allocation4], %s312
        %p314 = pneg %p50
        %p315 = pneg %p47
        %s316 = sand.u32 %s69, 1
        %s317 = sand.u32 %s69, 1
        %s318 = smul.addr %s317, 8
        %s319 = scalar_lea.vmem [#allocation5], %s318
        %p320 = pneg %p82
        %p321 = pneg %p79
        %p322 = pneg %p103
        %p323 = pneg %p100
        %p324 = pneg %p124
        %p325 = pneg %p121
        %p326 = pneg %p152
        %p327 = pneg %p149
        %s328 = smul.u32 9, %s20
        %p329 = scmp.lt.s32.totalorder %s19, 0
        %s330 = scalar_select %p329, %s19, 0
        %p331 = scmp.lt.s32.totalorder %s328, 17
        %s332 = scalar_select %p331, %s328, 17
        %s333 = smul.addr %s330, 18
        %s334 = sadd.s32 %s332, %s333
        %s335 = smul.addr %s334, 8
        %s336 = scalar_lea.vmem %s4, %s335
        %s337 = smul.u32 9, %s20
        %s338 = sadd.s32 %s20, 1
        %s339 = smul.u32 %s338, 9
        %s340 = smul.u32 9, %s20
        %p341 = scmp.lt.s32.totalorder %s19, 0
        %s342 = scalar_select %p341, %s19, 0
        %p343 = scmp.lt.s32.totalorder %s340, 17
        %s344 = scalar_select %p343, %s340, 17
        %s345 = smul.addr %s342, 18
        %s346 = sadd.s32 %s344, %s345
        %s347 = smul.addr %s346, 8
        %s348 = scalar_lea.vmem %s4, %s347
        %s349 = smul.u32 9, %s20
        %v351 = vld [vmem:[%s299] sm:$0xff]
        %v352 = vld [vmem:[%s299 + $0x8] sm:$0xff]
        %v353 = vld [vmem:[%s299 + $0x10] sm:$0xff]
        %v354 = vld [vmem:[%s299 + $0x18] sm:$0xff]
        %v355 = vld [vmem:[%s299 + $0x20] sm:$0xf]
        %v356 = vld [vmem:[%s299 + $0x24] sm:$0xff]
        %v357 = vld [vmem:[%s299 + $0x2c] sm:$0xff]
        %v358 = vld [vmem:[%s299 + $0x34] sm:$0xff]
        %v359 = vld [vmem:[%s299 + $0x3c] sm:$0xff]
        %v360 = vld [vmem:[%s299 + $0x44] sm:$0xf]
        %v371 = vunpack.c.l.b16 %v351
        %v372 = vunpack.c.h.b16 %v351
        %v373 = vunpack.c.l.b16 %v352
        %v374 = vunpack.c.h.b16 %v352
        %v375 = vunpack.c.l.b16 %v353
        %v376 = vunpack.c.h.b16 %v353
        %v377 = vunpack.c.l.b16 %v354
        %v378 = vunpack.c.h.b16 %v354
        %v379 = vunpack.c.l.b16 %v355
        %v380 = vunpack.c.l.b16 %v356
        %v381 = vunpack.c.h.b16 %v356
        %v382 = vunpack.c.l.b16 %v357
        %v383 = vunpack.c.h.b16 %v357
        %v384 = vunpack.c.l.b16 %v358
        %v385 = vunpack.c.h.b16 %v358
        %v386 = vunpack.c.l.b16 %v359
        %v387 = vunpack.c.h.b16 %v359
        %v388 = vunpack.c.l.b16 %v360
        %v389 = vpack.c.b16 %v380, %v371
        %v390 = vpack.c.b16 %v381, %v372
        %v391 = vpack.c.b16 %v382, %v373
        %v392 = vpack.c.b16 %v383, %v374
        %v393 = vpack.c.b16 %v384, %v375
        %v394 = vpack.c.b16 %v385, %v376
        %v395 = vpack.c.b16 %v386, %v377
        %v396 = vpack.c.b16 %v387, %v378
        %v397 = vpack.c.b16 %v388, %v379
        %407 = vst [vmem:[#allocation2] sm:$0xff] %v389
        %408 = vst [vmem:[#allocation2 + $0x8] sm:$0xff] %v390
        %409 = vst [vmem:[#allocation2 + $0x10] sm:$0xff] %v391
        %410 = vst [vmem:[#allocation2 + $0x18] sm:$0xff] %v392
        %411 = vst [vmem:[#allocation2 + $0x20] sm:$0xff] %v393
        %412 = vst [vmem:[#allocation2 + $0x28] sm:$0xff] %v394
        %413 = vst [vmem:[#allocation2 + $0x30] sm:$0xff] %v395
        %414 = vst [vmem:[#allocation2 + $0x38] sm:$0xff] %v396
        %415 = vst [vmem:[#allocation2 + $0x40] sm:$0xff] %v397
        %v416 = vld [vmem:[%s306] sm:$0xf]
        %v417 = vld [vmem:[%s306 + $0x4] sm:$0xf]
        %v420 = vunpack.c.l.b16 %v416
        %v421 = vunpack.c.l.b16 %v417
        %v422 = vpack.c.b16 %v421, %v420
        %424 = vst [vmem:[#allocation2 + $0x48] sm:$0xff] %v422
        %v425 = vld [vmem:[#allocation2] sm:$0xf]
        %v426 = vld [vmem:[#allocation2 + $0x8] sm:$0xf]
        %v427 = vld [vmem:[#allocation2 + $0x10] sm:$0xf]
        %v428 = vld [vmem:[#allocation2 + $0x18] sm:$0xf]
        %v429 = vld [vmem:[#allocation2 + $0x20] sm:$0xf]
        %v430 = vld [vmem:[#allocation2 + $0x28] sm:$0xf]
        %v431 = vld [vmem:[#allocation2 + $0x30] sm:$0xf]
        %v432 = vld [vmem:[#allocation2 + $0x38] sm:$0xf]
        %v433 = vld [vmem:[#allocation2 + $0x40] sm:$0xf]
        %v443 = vunpack.c.l.b16 %v425
        %v444 = vunpack.c.l.b16 %v426
        %v445 = vunpack.c.l.b16 %v427
        %v446 = vunpack.c.l.b16 %v428
        %v447 = vunpack.c.l.b16 %v429
        %v448 = vunpack.c.l.b16 %v430
        %v449 = vunpack.c.l.b16 %v431
        %v450 = vunpack.c.l.b16 %v432
        %v451 = vunpack.c.l.b16 %v433
        %v452 = vpack.c.b16 %v444, %v443
        %v453 = vpack.c.b16 %v446, %v445
        %v454 = vpack.c.b16 %v448, %v447
        %v455 = vpack.c.b16 %v450, %v449
        %v456 = vpack.c.b16 %v451, %v451
        %462 = vst [vmem:[#allocation3] sm:$0xff] %v452
        %463 = vst [vmem:[#allocation3 + $0x8] sm:$0xff] %v453
        %464 = vst [vmem:[#allocation3 + $0x10] sm:$0xff] %v454
        %465 = vst [vmem:[#allocation3 + $0x18] sm:$0xff] %v455
        %466 = vst [vmem:[#allocation3 + $0x20] sm:$0xf] %v456
        %v467 = vld [vmem:[#allocation2] sm:$0xf0]
        %v468 = vld [vmem:[#allocation2 + $0x8] sm:$0xf0]
        %v469 = vld [vmem:[#allocation2 + $0x10] sm:$0xf0]
        %v470 = vld [vmem:[#allocation2 + $0x18] sm:$0xf0]
        %v471 = vld [vmem:[#allocation2 + $0x20] sm:$0xf0]
        %v472 = vld [vmem:[#allocation2 + $0x28] sm:$0xf0]
        %v473 = vld [vmem:[#allocation2 + $0x30] sm:$0xf0]
        %v474 = vld [vmem:[#allocation2 + $0x38] sm:$0xf0]
        %v475 = vld [vmem:[#allocation2 + $0x40] sm:$0xf0]
        %v485 = vunpack.c.h.b16 %v467
        %v486 = vunpack.c.h.b16 %v468
        %v487 = vunpack.c.h.b16 %v469
        %v488 = vunpack.c.h.b16 %v470
        %v489 = vunpack.c.h.b16 %v471
        %v490 = vunpack.c.h.b16 %v472
        %v491 = vunpack.c.h.b16 %v473
        %v492 = vunpack.c.h.b16 %v474
        %v493 = vunpack.c.h.b16 %v475
        %v494 = vpack.c.b16 %v486, %v485
        %v495 = vpack.c.b16 %v488, %v487
        %v496 = vpack.c.b16 %v490, %v489
        %v497 = vpack.c.b16 %v492, %v491
        %v498 = vpack.c.b16 %v493, %v493
        %504 = vst [vmem:[#allocation3 + $0x24] sm:$0xff] %v494
        %505 = vst [vmem:[#allocation3 + $0x2c] sm:$0xff] %v495
        %506 = vst [vmem:[#allocation3 + $0x34] sm:$0xff] %v496
        %507 = vst [vmem:[#allocation3 + $0x3c] sm:$0xff] %v497
        %508 = vst [vmem:[#allocation3 + $0x44] sm:$0xf] %v498
        %v509 = vld [vmem:[#allocation2] sm:$0xf]
        %v510 = vld [vmem:[#allocation2 + $0x8] sm:$0xf]
        %v511 = vld [vmem:[#allocation2 + $0x10] sm:$0xf]
        %v512 = vld [vmem:[#allocation2 + $0x18] sm:$0xf]
        %v513 = vld [vmem:[#allocation2 + $0x20] sm:$0xf]
        %v514 = vld [vmem:[#allocation2 + $0x28] sm:$0xf]
        %v515 = vld [vmem:[#allocation2 + $0x30] sm:$0xf]
        %v516 = vld [vmem:[#allocation2 + $0x38] sm:$0xf]
        %v517 = vld [vmem:[#allocation2 + $0x40] sm:$0xf]
        %v518 = vld [vmem:[#allocation2 + $0x48] sm:$0xf]
        %v529 = vunpack.c.l.b16 %v509
        %v530 = vunpack.c.l.b16 %v510
        %v531 = vunpack.c.l.b16 %v511
        %v532 = vunpack.c.l.b16 %v512
        %v533 = vunpack.c.l.b16 %v513
        %v534 = vunpack.c.l.b16 %v514
        %v535 = vunpack.c.l.b16 %v515
        %v536 = vunpack.c.l.b16 %v516
        %v537 = vunpack.c.l.b16 %v517
        %v538 = vunpack.c.l.b16 %v518
        %v539 = vpack.c.b16 %v530, %v529
        %v540 = vpack.c.b16 %v532, %v531
        %v541 = vpack.c.b16 %v534, %v533
        %v542 = vpack.c.b16 %v536, %v535
        %v543 = vpack.c.b16 %v538, %v537
        %544 = vrot.lane.b32.xlu0 %v539, 127
        %v545 = vpop.permute.xlu0 %544
        %546 = vrot.lane.b32.xlu0 %v540, 127
        %v547 = vpop.permute.xlu0 %546
        %548 = vrot.lane.b32.xlu0 %v541, 127
        %v549 = vpop.permute.xlu0 %548
        %550 = vrot.lane.b32.xlu0 %v542, 127
        %v551 = vpop.permute.xlu0 %550
        %552 = vrot.lane.b32.xlu0 %v543, 127
        %v553 = vpop.permute.xlu0 %552
        %v554 = vrot.slane %v545, 4
        %v555 = vrot.slane %v547, 4
        %v556 = vrot.slane %v549, 4
        %v557 = vrot.slane %v551, 4
        %v558 = vrot.slane %v553, 4
        %vm559 = vcmask 1043456
        %v560 = vsel %vm559, %v554, %v555
        %vm561 = vcmask 1039360
        %v562 = vsel %vm561, %v545, %v560
        %v563 = vsel %vm559, %v555, %v556
        %v564 = vsel %vm561, %v547, %v563
        %v565 = vsel %vm559, %v556, %v557
        %v566 = vsel %vm561, %v549, %v565
        %v567 = vsel %vm559, %v557, %v558
        %v568 = vsel %vm561, %v551, %v567
        %v569 = vsel %vm561, %v553, %v558
        %575 = vst [vmem:[#allocation3 + $0x48] sm:$0xff] %v562
        %576 = vst [vmem:[#allocation3 + $0x50] sm:$0xff] %v564
        %577 = vst [vmem:[#allocation3 + $0x58] sm:$0xff] %v566
        %578 = vst [vmem:[#allocation3 + $0x60] sm:$0xff] %v568
        %579 = vst [vmem:[#allocation3 + $0x68] sm:$0xf] %v569
        %v580 = vld [vmem:[#allocation2] sm:$0xf0]
        %v581 = vld [vmem:[#allocation2 + $0x8] sm:$0xf0]
        %v582 = vld [vmem:[#allocation2 + $0x10] sm:$0xf0]
        %v583 = vld [vmem:[#allocation2 + $0x18] sm:$0xf0]
        %v584 = vld [vmem:[#allocation2 + $0x20] sm:$0xf0]
        %v585 = vld [vmem:[#allocation2 + $0x28] sm:$0xf0]
        %v586 = vld [vmem:[#allocation2 + $0x30] sm:$0xf0]
        %v587 = vld [vmem:[#allocation2 + $0x38] sm:$0xf0]
        %v588 = vld [vmem:[#allocation2 + $0x40] sm:$0xf0]
        %v589 = vld [vmem:[#allocation2 + $0x48] sm:$0xf0]
        %v600 = vunpack.c.h.b16 %v580
        %v601 = vunpack.c.h.b16 %v581
        %v602 = vunpack.c.h.b16 %v582
        %v603 = vunpack.c.h.b16 %v583
        %v604 = vunpack.c.h.b16 %v584
        %v605 = vunpack.c.h.b16 %v585
        %v606 = vunpack.c.h.b16 %v586
        %v607 = vunpack.c.h.b16 %v587
        %v608 = vunpack.c.h.b16 %v588
        %v609 = vunpack.c.h.b16 %v589
        %v610 = vpack.c.b16 %v601, %v600
        %v611 = vpack.c.b16 %v603, %v602
        %v612 = vpack.c.b16 %v605, %v604
        %v613 = vpack.c.b16 %v607, %v606
        %v614 = vpack.c.b16 %v609, %v608
        %615 = vrot.lane.b32.xlu0 %v610, 127
        %v616 = vpop.permute.xlu0 %615
        %617 = vrot.lane.b32.xlu0 %v611, 127
        %v618 = vpop.permute.xlu0 %617
        %619 = vrot.lane.b32.xlu0 %v612, 127
        %v620 = vpop.permute.xlu0 %619
        %621 = vrot.lane.b32.xlu0 %v613, 127
        %v622 = vpop.permute.xlu0 %621
        %623 = vrot.lane.b32.xlu0 %v614, 127
        %v624 = vpop.permute.xlu0 %623
        %v625 = vrot.slane %v616, 4
        %v626 = vrot.slane %v618, 4
        %v627 = vrot.slane %v620, 4
        %v628 = vrot.slane %v622, 4
        %v629 = vrot.slane %v624, 4
        %v630 = vsel %vm559, %v625, %v626
        %v631 = vsel %vm561, %v616, %v630
        %v632 = vsel %vm559, %v626, %v627
        %v633 = vsel %vm561, %v618, %v632
        %v634 = vsel %vm559, %v627, %v628
        %v635 = vsel %vm561, %v620, %v634
        %v636 = vsel %vm559, %v628, %v629
        %v637 = vsel %vm561, %v622, %v636
        %v638 = vsel %vm561, %v624, %v629
        %644 = vst [vmem:[#allocation3 + $0x6c] sm:$0xff] %v631
        %645 = vst [vmem:[#allocation3 + $0x74] sm:$0xff] %v633
        %646 = vst [vmem:[#allocation3 + $0x7c] sm:$0xff] %v635
        %647 = vst [vmem:[#allocation3 + $0x84] sm:$0xff] %v637
        %648 = vst [vmem:[#allocation3 + $0x8c] sm:$0xf] %v638
        %v649 = vld [vmem:[#allocation2] sm:$0xf]
        %v650 = vld [vmem:[#allocation2 + $0x8] sm:$0xf]
        %v651 = vld [vmem:[#allocation2 + $0x10] sm:$0xf]
        %v652 = vld [vmem:[#allocation2 + $0x18] sm:$0xf]
        %v653 = vld [vmem:[#allocation2 + $0x20] sm:$0xf]
        %v654 = vld [vmem:[#allocation2 + $0x28] sm:$0xf]
        %v655 = vld [vmem:[#allocation2 + $0x30] sm:$0xf]
        %v656 = vld [vmem:[#allocation2 + $0x38] sm:$0xf]
        %v657 = vld [vmem:[#allocation2 + $0x40] sm:$0xf]
        %v658 = vld [vmem:[#allocation2 + $0x48] sm:$0xf]
        %v669 = vunpack.c.l.b16 %v649
        %v670 = vunpack.c.l.b16 %v650
        %v671 = vunpack.c.l.b16 %v651
        %v672 = vunpack.c.l.b16 %v652
        %v673 = vunpack.c.l.b16 %v653
        %v674 = vunpack.c.l.b16 %v654
        %v675 = vunpack.c.l.b16 %v655
        %v676 = vunpack.c.l.b16 %v656
        %v677 = vunpack.c.l.b16 %v657
        %v678 = vunpack.c.l.b16 %v658
        %v679 = vpack.c.b16 %v670, %v669
        %v680 = vpack.c.b16 %v672, %v671
        %v681 = vpack.c.b16 %v674, %v673
        %v682 = vpack.c.b16 %v676, %v675
        %v683 = vpack.c.b16 %v678, %v677
        %684 = vrot.lane.b32.xlu0 %v679, 126
        %v685 = vpop.permute.xlu0 %684
        %686 = vrot.lane.b32.xlu0 %v680, 126
        %v687 = vpop.permute.xlu0 %686
        %688 = vrot.lane.b32.xlu0 %v681, 126
        %v689 = vpop.permute.xlu0 %688
        %690 = vrot.lane.b32.xlu0 %v682, 126
        %v691 = vpop.permute.xlu0 %690
        %692 = vrot.lane.b32.xlu0 %v683, 126
        %v693 = vpop.permute.xlu0 %692
        %v694 = vrot.slane %v685, 4
        %v695 = vrot.slane %v687, 4
        %v696 = vrot.slane %v689, 4
        %v697 = vrot.slane %v691, 4
        %v698 = vrot.slane %v693, 4
        %v699 = vsel %vm559, %v694, %v695
        %vm700 = vcmask 1031168
        %v701 = vsel %vm700, %v685, %v699
        %v702 = vsel %vm559, %v695, %v696
        %v703 = vsel %vm700, %v687, %v702
        %v704 = vsel %vm559, %v696, %v697
        %v705 = vsel %vm700, %v689, %v704
        %v706 = vsel %vm559, %v697, %v698
        %v707 = vsel %vm700, %v691, %v706
        %v708 = vsel %vm700, %v693, %v698
        %714 = vst [vmem:[#allocation3 + $0x90] sm:$0xff] %v701
        %715 = vst [vmem:[#allocation3 + $0x98] sm:$0xff] %v703
        %716 = vst [vmem:[#allocation3 + $0xa0] sm:$0xff] %v705
        %717 = vst [vmem:[#allocation3 + $0xa8] sm:$0xff] %v707
        %718 = vst [vmem:[#allocation3 + $0xb0] sm:$0xf] %v708
        %v719 = vld [vmem:[#allocation2] sm:$0xf0]
        %v720 = vld [vmem:[#allocation2 + $0x8] sm:$0xf0]
        %v721 = vld [vmem:[#allocation2 + $0x10] sm:$0xf0]
        %v722 = vld [vmem:[#allocation2 + $0x18] sm:$0xf0]
        %v723 = vld [vmem:[#allocation2 + $0x20] sm:$0xf0]
        %v724 = vld [vmem:[#allocation2 + $0x28] sm:$0xf0]
        %v725 = vld [vmem:[#allocation2 + $0x30] sm:$0xf0]
        %v726 = vld [vmem:[#allocation2 + $0x38] sm:$0xf0]
        %v727 = vld [vmem:[#allocation2 + $0x40] sm:$0xf0]
        %v728 = vld [vmem:[#allocation2 + $0x48] sm:$0xf0]
        %v739 = vunpack.c.h.b16 %v719
        %v740 = vunpack.c.h.b16 %v720
        %v741 = vunpack.c.h.b16 %v721
        %v742 = vunpack.c.h.b16 %v722
        %v743 = vunpack.c.h.b16 %v723
        %v744 = vunpack.c.h.b16 %v724
        %v745 = vunpack.c.h.b16 %v725
        %v746 = vunpack.c.h.b16 %v726
        %v747 = vunpack.c.h.b16 %v727
        %v748 = vunpack.c.h.b16 %v728
        %v749 = vpack.c.b16 %v740, %v739
        %v750 = vpack.c.b16 %v742, %v741
        %v751 = vpack.c.b16 %v744, %v743
        %v752 = vpack.c.b16 %v746, %v745
        %v753 = vpack.c.b16 %v748, %v747
        %754 = vrot.lane.b32.xlu0 %v749, 126
        %v755 = vpop.permute.xlu0 %754
        %756 = vrot.lane.b32.xlu0 %v750, 126
        %v757 = vpop.permute.xlu0 %756
        %758 = vrot.lane.b32.xlu0 %v751, 126
        %v759 = vpop.permute.xlu0 %758
        %760 = vrot.lane.b32.xlu0 %v752, 126
        %v761 = vpop.permute.xlu0 %760
        %762 = vrot.lane.b32.xlu0 %v753, 126
        %v763 = vpop.permute.xlu0 %762
        %v764 = vrot.slane %v755, 4
        %v765 = vrot.slane %v757, 4
        %v766 = vrot.slane %v759, 4
        %v767 = vrot.slane %v761, 4
        %v768 = vrot.slane %v763, 4
        %v769 = vsel %vm559, %v764, %v765
        %v770 = vsel %vm700, %v755, %v769
        %v771 = vsel %vm559, %v765, %v766
        %v772 = vsel %vm700, %v757, %v771
        %v773 = vsel %vm559, %v766, %v767
        %v774 = vsel %vm700, %v759, %v773
        %v775 = vsel %vm559, %v767, %v768
        %v776 = vsel %vm700, %v761, %v775
        %v777 = vsel %vm700, %v763, %v768
        %783 = vst [vmem:[#allocation3 + $0xb4] sm:$0xff] %v770
        %784 = vst [vmem:[#allocation3 + $0xbc] sm:$0xff] %v772
        %785 = vst [vmem:[#allocation3 + $0xc4] sm:$0xff] %v774
        %786 = vst [vmem:[#allocation3 + $0xcc] sm:$0xff] %v776
        %787 = vst [vmem:[#allocation3 + $0xd4] sm:$0xf] %v777
        %v788 = vld [vmem:[#allocation2] sm:$0xf]
        %v789 = vld [vmem:[#allocation2 + $0x8] sm:$0xf]
        %v790 = vld [vmem:[#allocation2 + $0x10] sm:$0xf]
        %v791 = vld [vmem:[#allocation2 + $0x18] sm:$0xf]
        %v792 = vld [vmem:[#allocation2 + $0x20] sm:$0xf]
        %v793 = vld [vmem:[#allocation2 + $0x28] sm:$0xf]
        %v794 = vld [vmem:[#allocation2 + $0x30] sm:$0xf]
        %v795 = vld [vmem:[#allocation2 + $0x38] sm:$0xf]
        %v796 = vld [vmem:[#allocation2 + $0x40] sm:$0xf]
        %v797 = vld [vmem:[#allocation2 + $0x48] sm:$0xf]
        %v808 = vunpack.c.l.b16 %v788
        %v809 = vunpack.c.l.b16 %v789
        %v810 = vunpack.c.l.b16 %v790
        %v811 = vunpack.c.l.b16 %v791
        %v812 = vunpack.c.l.b16 %v792
        %v813 = vunpack.c.l.b16 %v793
        %v814 = vunpack.c.l.b16 %v794
        %v815 = vunpack.c.l.b16 %v795
        %v816 = vunpack.c.l.b16 %v796
        %v817 = vunpack.c.l.b16 %v797
        %v818 = vpack.c.b16 %v809, %v808
        %v819 = vpack.c.b16 %v811, %v810
        %v820 = vpack.c.b16 %v813, %v812
        %v821 = vpack.c.b16 %v815, %v814
        %v822 = vpack.c.b16 %v817, %v816
        %823 = vrot.lane.b32.xlu0 %v818, 125
        %v824 = vpop.permute.xlu0 %823
        %825 = vrot.lane.b32.xlu0 %v819, 125
        %v826 = vpop.permute.xlu0 %825
        %827 = vrot.lane.b32.xlu0 %v820, 125
        %v828 = vpop.permute.xlu0 %827
        %829 = vrot.lane.b32.xlu0 %v821, 125
        %v830 = vpop.permute.xlu0 %829
        %831 = vrot.lane.b32.xlu0 %v822, 125
        %v832 = vpop.permute.xlu0 %831
        %v833 = vrot.slane %v824, 4
        %v834 = vrot.slane %v826, 4
        %v835 = vrot.slane %v828, 4
        %v836 = vrot.slane %v830, 4
        %v837 = vrot.slane %v832, 4
        %v838 = vsel %vm559, %v833, %v834
        %vm839 = vcmask 1022976
        %v840 = vsel %vm839, %v824, %v838
        %v841 = vsel %vm559, %v834, %v835
        %v842 = vsel %vm839, %v826, %v841
        %v843 = vsel %vm559, %v835, %v836
        %v844 = vsel %vm839, %v828, %v843
        %v845 = vsel %vm559, %v836, %v837
        %v846 = vsel %vm839, %v830, %v845
        %v847 = vsel %vm839, %v832, %v837
        %853 = vst [vmem:[#allocation3 + $0xd8] sm:$0xff] %v840
        %854 = vst [vmem:[#allocation3 + $0xe0] sm:$0xff] %v842
        %855 = vst [vmem:[#allocation3 + $0xe8] sm:$0xff] %v844
        %856 = vst [vmem:[#allocation3 + $0xf0] sm:$0xff] %v846
        %857 = vst [vmem:[#allocation3 + $0xf8] sm:$0xf] %v847
        %v858 = vld [vmem:[#allocation2] sm:$0xf0]
        %v859 = vld [vmem:[#allocation2 + $0x8] sm:$0xf0]
        %v860 = vld [vmem:[#allocation2 + $0x10] sm:$0xf0]
        %v861 = vld [vmem:[#allocation2 + $0x18] sm:$0xf0]
        %v862 = vld [vmem:[#allocation2 + $0x20] sm:$0xf0]
        %v863 = vld [vmem:[#allocation2 + $0x28] sm:$0xf0]
        %v864 = vld [vmem:[#allocation2 + $0x30] sm:$0xf0]
        %v865 = vld [vmem:[#allocation2 + $0x38] sm:$0xf0]
        %v866 = vld [vmem:[#allocation2 + $0x40] sm:$0xf0]
        %v867 = vld [vmem:[#allocation2 + $0x48] sm:$0xf0]
        %v878 = vunpack.c.h.b16 %v858
        %v879 = vunpack.c.h.b16 %v859
        %v880 = vunpack.c.h.b16 %v860
        %v881 = vunpack.c.h.b16 %v861
        %v882 = vunpack.c.h.b16 %v862
        %v883 = vunpack.c.h.b16 %v863
        %v884 = vunpack.c.h.b16 %v864
        %v885 = vunpack.c.h.b16 %v865
        %v886 = vunpack.c.h.b16 %v866
        %v887 = vunpack.c.h.b16 %v867
        %v888 = vpack.c.b16 %v879, %v878
        %v889 = vpack.c.b16 %v881, %v880
        %v890 = vpack.c.b16 %v883, %v882
        %v891 = vpack.c.b16 %v885, %v884
        %v892 = vpack.c.b16 %v887, %v886
        %893 = vrot.lane.b32.xlu0 %v888, 125
        %v894 = vpop.permute.xlu0 %893
        %895 = vrot.lane.b32.xlu0 %v889, 125
        %v896 = vpop.permute.xlu0 %895
        %897 = vrot.lane.b32.xlu0 %v890, 125
        %v898 = vpop.permute.xlu0 %897
        %899 = vrot.lane.b32.xlu0 %v891, 125
        %v900 = vpop.permute.xlu0 %899
        %901 = vrot.lane.b32.xlu0 %v892, 125
        %v902 = vpop.permute.xlu0 %901
        %v903 = vrot.slane %v894, 4
        %v904 = vrot.slane %v896, 4
        %v905 = vrot.slane %v898, 4
        %v906 = vrot.slane %v900, 4
        %v907 = vrot.slane %v902, 4
        %v908 = vsel %vm559, %v903, %v904
        %v909 = vsel %vm839, %v894, %v908
        %v910 = vsel %vm559, %v904, %v905
        %v911 = vsel %vm839, %v896, %v910
        %v912 = vsel %vm559, %v905, %v906
        %v913 = vsel %vm839, %v898, %v912
        %v914 = vsel %vm559, %v906, %v907
        %v915 = vsel %vm839, %v900, %v914
        %v916 = vsel %vm839, %v902, %v907
        %922 = vst [vmem:[#allocation3 + $0xfc] sm:$0xff] %v909
        %923 = vst [vmem:[#allocation3 + $0x104] sm:$0xff] %v911
        %924 = vst [vmem:[#allocation3 + $0x10c] sm:$0xff] %v913
        %925 = vst [vmem:[#allocation3 + $0x114] sm:$0xff] %v915
        %926 = vst [vmem:[#allocation3 + $0x11c] sm:$0xf] %v916
        %v927 = vld [vmem:[#allocation2] sm:$0xf]
        %v928 = vld [vmem:[#allocation2 + $0x8] sm:$0xf]
        %v929 = vld [vmem:[#allocation2 + $0x10] sm:$0xf]
        %v930 = vld [vmem:[#allocation2 + $0x18] sm:$0xf]
        %v931 = vld [vmem:[#allocation2 + $0x20] sm:$0xf]
        %v932 = vld [vmem:[#allocation2 + $0x28] sm:$0xf]
        %v933 = vld [vmem:[#allocation2 + $0x30] sm:$0xf]
        %v934 = vld [vmem:[#allocation2 + $0x38] sm:$0xf]
        %v935 = vld [vmem:[#allocation2 + $0x40] sm:$0xf]
        %v936 = vld [vmem:[#allocation2 + $0x48] sm:$0xf]
        %v947 = vunpack.c.l.b16 %v927
        %v948 = vunpack.c.l.b16 %v928
        %v949 = vunpack.c.l.b16 %v929
        %v950 = vunpack.c.l.b16 %v930
        %v951 = vunpack.c.l.b16 %v931
        %v952 = vunpack.c.l.b16 %v932
        %v953 = vunpack.c.l.b16 %v933
        %v954 = vunpack.c.l.b16 %v934
        %v955 = vunpack.c.l.b16 %v935
        %v956 = vunpack.c.l.b16 %v936
        %v957 = vpack.c.b16 %v948, %v947
        %v958 = vpack.c.b16 %v950, %v949
        %v959 = vpack.c.b16 %v952, %v951
        %v960 = vpack.c.b16 %v954, %v953
        %v961 = vpack.c.b16 %v956, %v955
        %962 = vrot.lane.b32.xlu0 %v957, 124
        %v963 = vpop.permute.xlu0 %962
        %964 = vrot.lane.b32.xlu0 %v958, 124
        %v965 = vpop.permute.xlu0 %964
        %966 = vrot.lane.b32.xlu0 %v959, 124
        %v967 = vpop.permute.xlu0 %966
        %968 = vrot.lane.b32.xlu0 %v960, 124
        %v969 = vpop.permute.xlu0 %968
        %970 = vrot.lane.b32.xlu0 %v961, 124
        %v971 = vpop.permute.xlu0 %970
        %v972 = vrot.slane %v963, 4
        %v973 = vrot.slane %v965, 4
        %v974 = vrot.slane %v967, 4
        %v975 = vrot.slane %v969, 4
        %v976 = vrot.slane %v971, 4
        %v977 = vsel %vm559, %v972, %v973
        %vm978 = vcmask 1014784
        %v979 = vsel %vm978, %v963, %v977
        %v980 = vsel %vm559, %v973, %v974
        %v981 = vsel %vm978, %v965, %v980
        %v982 = vsel %vm559, %v974, %v975
        %v983 = vsel %vm978, %v967, %v982
        %v984 = vsel %vm559, %v975, %v976
        %v985 = vsel %vm978, %v969, %v984
        %v986 = vsel %vm978, %v971, %v976
        %992 = vst [vmem:[#allocation3 + $0x120] sm:$0xff] %v979
        %993 = vst [vmem:[#allocation3 + $0x128] sm:$0xff] %v981
        %994 = vst [vmem:[#allocation3 + $0x130] sm:$0xff] %v983
        %995 = vst [vmem:[#allocation3 + $0x138] sm:$0xff] %v985
        %996 = vst [vmem:[#allocation3 + $0x140] sm:$0xf] %v986
        %v997 = vld [vmem:[#allocation2] sm:$0xf0]
        %v998 = vld [vmem:[#allocation2 + $0x8] sm:$0xf0]
        %v999 = vld [vmem:[#allocation2 + $0x10] sm:$0xf0]
        %v1000 = vld [vmem:[#allocation2 + $0x18] sm:$0xf0]
        %v1001 = vld [vmem:[#allocation2 + $0x20] sm:$0xf0]
        %v1002 = vld [vmem:[#allocation2 + $0x28] sm:$0xf0]
        %v1003 = vld [vmem:[#allocation2 + $0x30] sm:$0xf0]
        %v1004 = vld [vmem:[#allocation2 + $0x38] sm:$0xf0]
        %v1005 = vld [vmem:[#allocation2 + $0x40] sm:$0xf0]
        %v1006 = vld [vmem:[#allocation2 + $0x48] sm:$0xf0]
        %v1017 = vunpack.c.h.b16 %v997
        %v1018 = vunpack.c.h.b16 %v998
        %v1019 = vunpack.c.h.b16 %v999
        %v1020 = vunpack.c.h.b16 %v1000
        %v1021 = vunpack.c.h.b16 %v1001
        %v1022 = vunpack.c.h.b16 %v1002
        %v1023 = vunpack.c.h.b16 %v1003
        %v1024 = vunpack.c.h.b16 %v1004
        %v1025 = vunpack.c.h.b16 %v1005
        %v1026 = vunpack.c.h.b16 %v1006
        %v1027 = vpack.c.b16 %v1018, %v1017
        %v1028 = vpack.c.b16 %v1020, %v1019
        %v1029 = vpack.c.b16 %v1022, %v1021
        %v1030 = vpack.c.b16 %v1024, %v1023
        %v1031 = vpack.c.b16 %v1026, %v1025
        %1032 = vrot.lane.b32.xlu0 %v1027, 124
        %v1033 = vpop.permute.xlu0 %1032
        %1034 = vrot.lane.b32.xlu0 %v1028, 124
        %v1035 = vpop.permute.xlu0 %1034
        %1036 = vrot.lane.b32.xlu0 %v1029, 124
        %v1037 = vpop.permute.xlu0 %1036
        %1038 = vrot.lane.b32.xlu0 %v1030, 124
        %v1039 = vpop.permute.xlu0 %1038
        %1040 = vrot.lane.b32.xlu0 %v1031, 124
        %v1041 = vpop.permute.xlu0 %1040
        %v1042 = vrot.slane %v1033, 4
        %v1043 = vrot.slane %v1035, 4
        %v1044 = vrot.slane %v1037, 4
        %v1045 = vrot.slane %v1039, 4
        %v1046 = vrot.slane %v1041, 4
        %v1047 = vsel %vm559, %v1042, %v1043
        %v1048 = vsel %vm978, %v1033, %v1047
        %v1049 = vsel %vm559, %v1043, %v1044
        %v1050 = vsel %vm978, %v1035, %v1049
        %v1051 = vsel %vm559, %v1044, %v1045
        %v1052 = vsel %vm978, %v1037, %v1051
        %v1053 = vsel %vm559, %v1045, %v1046
        %v1054 = vsel %vm978, %v1039, %v1053
        %v1055 = vsel %vm978, %v1041, %v1046
        %1061 = vst [vmem:[#allocation3 + $0x144] sm:$0xff] %v1048
        %1062 = vst [vmem:[#allocation3 + $0x14c] sm:$0xff] %v1050
        %1063 = vst [vmem:[#allocation3 + $0x154] sm:$0xff] %v1052
        %1064 = vst [vmem:[#allocation3 + $0x15c] sm:$0xff] %v1054
        %1065 = vst [vmem:[#allocation3 + $0x164] sm:$0xf] %v1055
        %v1066 = vld [vmem:[#allocation2] sm:$0xf]
        %v1067 = vld [vmem:[#allocation2 + $0x8] sm:$0xf]
        %v1068 = vld [vmem:[#allocation2 + $0x10] sm:$0xf]
        %v1069 = vld [vmem:[#allocation2 + $0x18] sm:$0xf]
        %v1070 = vld [vmem:[#allocation2 + $0x20] sm:$0xf]
        %v1071 = vld [vmem:[#allocation2 + $0x28] sm:$0xf]
        %v1072 = vld [vmem:[#allocation2 + $0x30] sm:$0xf]
        %v1073 = vld [vmem:[#allocation2 + $0x38] sm:$0xf]
        %v1074 = vld [vmem:[#allocation2 + $0x40] sm:$0xf]
        %v1075 = vld [vmem:[#allocation2 + $0x48] sm:$0xf]
        %v1086 = vunpack.c.l.b16 %v1066
        %v1087 = vunpack.c.l.b16 %v1067
        %v1088 = vunpack.c.l.b16 %v1068
        %v1089 = vunpack.c.l.b16 %v1069
        %v1090 = vunpack.c.l.b16 %v1070
        %v1091 = vunpack.c.l.b16 %v1071
        %v1092 = vunpack.c.l.b16 %v1072
        %v1093 = vunpack.c.l.b16 %v1073
        %v1094 = vunpack.c.l.b16 %v1074
        %v1095 = vunpack.c.l.b16 %v1075
        %v1096 = vpack.c.b16 %v1087, %v1086
        %v1097 = vpack.c.b16 %v1089, %v1088
        %v1098 = vpack.c.b16 %v1091, %v1090
        %v1099 = vpack.c.b16 %v1093, %v1092
        %v1100 = vpack.c.b16 %v1095, %v1094
        %1101 = vrot.lane.b32.xlu0 %v1096, 123
        %v1102 = vpop.permute.xlu0 %1101
        %1103 = vrot.lane.b32.xlu0 %v1097, 123
        %v1104 = vpop.permute.xlu0 %1103
        %1105 = vrot.lane.b32.xlu0 %v1098, 123
        %v1106 = vpop.permute.xlu0 %1105
        %1107 = vrot.lane.b32.xlu0 %v1099, 123
        %v1108 = vpop.permute.xlu0 %1107
        %1109 = vrot.lane.b32.xlu0 %v1100, 123
        %v1110 = vpop.permute.xlu0 %1109
        %v1111 = vrot.slane %v1102, 4
        %v1112 = vrot.slane %v1104, 4
        %v1113 = vrot.slane %v1106, 4
        %v1114 = vrot.slane %v1108, 4
        %v1115 = vrot.slane %v1110, 4
        %v1116 = vsel %vm559, %v1111, %v1112
        %vm1117 = vcmask 1006592
        %v1118 = vsel %vm1117, %v1102, %v1116
        %v1119 = vsel %vm559, %v1112, %v1113
        %v1120 = vsel %vm1117, %v1104, %v1119
        %v1121 = vsel %vm559, %v1113, %v1114
        %v1122 = vsel %vm1117, %v1106, %v1121
        %v1123 = vsel %vm559, %v1114, %v1115
        %v1124 = vsel %vm1117, %v1108, %v1123
        %v1125 = vsel %vm1117, %v1110, %v1115
        %1131 = vst [vmem:[#allocation3 + $0x168] sm:$0xff] %v1118
        %1132 = vst [vmem:[#allocation3 + $0x170] sm:$0xff] %v1120
        %1133 = vst [vmem:[#allocation3 + $0x178] sm:$0xff] %v1122
        %1134 = vst [vmem:[#allocation3 + $0x180] sm:$0xff] %v1124
        %1135 = vst [vmem:[#allocation3 + $0x188] sm:$0xf] %v1125
        %v1136 = vld [vmem:[#allocation2] sm:$0xf0]
        %v1137 = vld [vmem:[#allocation2 + $0x8] sm:$0xf0]
        %v1138 = vld [vmem:[#allocation2 + $0x10] sm:$0xf0]
        %v1139 = vld [vmem:[#allocation2 + $0x18] sm:$0xf0]
        %v1140 = vld [vmem:[#allocation2 + $0x20] sm:$0xf0]
        %v1141 = vld [vmem:[#allocation2 + $0x28] sm:$0xf0]
        %v1142 = vld [vmem:[#allocation2 + $0x30] sm:$0xf0]
        %v1143 = vld [vmem:[#allocation2 + $0x38] sm:$0xf0]
        %v1144 = vld [vmem:[#allocation2 + $0x40] sm:$0xf0]
        %v1145 = vld [vmem:[#allocation2 + $0x48] sm:$0xf0]
        %v1156 = vunpack.c.h.b16 %v1136
        %v1157 = vunpack.c.h.b16 %v1137
        %v1158 = vunpack.c.h.b16 %v1138
        %v1159 = vunpack.c.h.b16 %v1139
        %v1160 = vunpack.c.h.b16 %v1140
        %v1161 = vunpack.c.h.b16 %v1141
        %v1162 = vunpack.c.h.b16 %v1142
        %v1163 = vunpack.c.h.b16 %v1143
        %v1164 = vunpack.c.h.b16 %v1144
        %v1165 = vunpack.c.h.b16 %v1145
        %v1166 = vpack.c.b16 %v1157, %v1156
        %v1167 = vpack.c.b16 %v1159, %v1158
        %v1168 = vpack.c.b16 %v1161, %v1160
        %v1169 = vpack.c.b16 %v1163, %v1162
        %v1170 = vpack.c.b16 %v1165, %v1164
        %1171 = vrot.lane.b32.xlu0 %v1166, 123
        %v1172 = vpop.permute.xlu0 %1171
        %1173 = vrot.lane.b32.xlu0 %v1167, 123
        %v1174 = vpop.permute.xlu0 %1173
        %1175 = vrot.lane.b32.xlu0 %v1168, 123
        %v1176 = vpop.permute.xlu0 %1175
        %1177 = vrot.lane.b32.xlu0 %v1169, 123
        %v1178 = vpop.permute.xlu0 %1177
        %1179 = vrot.lane.b32.xlu0 %v1170, 123
        %v1180 = vpop.permute.xlu0 %1179
        %v1181 = vrot.slane %v1172, 4
        %v1182 = vrot.slane %v1174, 4
        %v1183 = vrot.slane %v1176, 4
        %v1184 = vrot.slane %v1178, 4
        %v1185 = vrot.slane %v1180, 4
        %v1186 = vsel %vm559, %v1181, %v1182
        %v1187 = vsel %vm1117, %v1172, %v1186
        %v1188 = vsel %vm559, %v1182, %v1183
        %v1189 = vsel %vm1117, %v1174, %v1188
        %v1190 = vsel %vm559, %v1183, %v1184
        %v1191 = vsel %vm1117, %v1176, %v1190
        %v1192 = vsel %vm559, %v1184, %v1185
        %v1193 = vsel %vm1117, %v1178, %v1192
        %v1194 = vsel %vm1117, %v1180, %v1185
        %1200 = vst [vmem:[#allocation3 + $0x18c] sm:$0xff] %v1187
        %1201 = vst [vmem:[#allocation3 + $0x194] sm:$0xff] %v1189
        %1202 = vst [vmem:[#allocation3 + $0x19c] sm:$0xff] %v1191
        %1203 = vst [vmem:[#allocation3 + $0x1a4] sm:$0xff] %v1193
        %1204 = vst [vmem:[#allocation3 + $0x1ac] sm:$0xf] %v1194
        %v1205 = vld [vmem:[#allocation2] sm:$0xf]
        %v1206 = vld [vmem:[#allocation2 + $0x8] sm:$0xf]
        %v1207 = vld [vmem:[#allocation2 + $0x10] sm:$0xf]
        %v1208 = vld [vmem:[#allocation2 + $0x18] sm:$0xf]
        %v1209 = vld [vmem:[#allocation2 + $0x20] sm:$0xf]
        %v1210 = vld [vmem:[#allocation2 + $0x28] sm:$0xf]
        %v1211 = vld [vmem:[#allocation2 + $0x30] sm:$0xf]
        %v1212 = vld [vmem:[#allocation2 + $0x38] sm:$0xf]
        %v1213 = vld [vmem:[#allocation2 + $0x40] sm:$0xf]
        %v1214 = vld [vmem:[#allocation2 + $0x48] sm:$0xf]
        %v1225 = vunpack.c.l.b16 %v1205
        %v1226 = vunpack.c.l.b16 %v1206
        %v1227 = vunpack.c.l.b16 %v1207
        %v1228 = vunpack.c.l.b16 %v1208
        %v1229 = vunpack.c.l.b16 %v1209
        %v1230 = vunpack.c.l.b16 %v1210
        %v1231 = vunpack.c.l.b16 %v1211
        %v1232 = vunpack.c.l.b16 %v1212
        %v1233 = vunpack.c.l.b16 %v1213
        %v1234 = vunpack.c.l.b16 %v1214
        %v1235 = vpack.c.b16 %v1226, %v1225
        %v1236 = vpack.c.b16 %v1228, %v1227
        %v1237 = vpack.c.b16 %v1230, %v1229
        %v1238 = vpack.c.b16 %v1232, %v1231
        %v1239 = vpack.c.b16 %v1234, %v1233
        %1240 = vrot.lane.b32.xlu0 %v1235, 122
        %v1241 = vpop.permute.xlu0 %1240
        %1242 = vrot.lane.b32.xlu0 %v1236, 122
        %v1243 = vpop.permute.xlu0 %1242
        %1244 = vrot.lane.b32.xlu0 %v1237, 122
        %v1245 = vpop.permute.xlu0 %1244
        %1246 = vrot.lane.b32.xlu0 %v1238, 122
        %v1247 = vpop.permute.xlu0 %1246
        %1248 = vrot.lane.b32.xlu0 %v1239, 122
        %v1249 = vpop.permute.xlu0 %1248
        %v1250 = vrot.slane %v1241, 4
        %v1251 = vrot.slane %v1243, 4
        %v1252 = vrot.slane %v1245, 4
        %v1253 = vrot.slane %v1247, 4
        %v1254 = vrot.slane %v1249, 4
        %v1255 = vsel %vm559, %v1250, %v1251
        %vm1256 = vcmask 998400
        %v1257 = vsel %vm1256, %v1241, %v1255
        %v1258 = vsel %vm559, %v1251, %v1252
        %v1259 = vsel %vm1256, %v1243, %v1258
        %v1260 = vsel %vm559, %v1252, %v1253
        %v1261 = vsel %vm1256, %v1245, %v1260
        %v1262 = vsel %vm559, %v1253, %v1254
        %v1263 = vsel %vm1256, %v1247, %v1262
        %v1264 = vsel %vm1256, %v1249, %v1254
        %1270 = vst [vmem:[#allocation3 + $0x1b0] sm:$0xff] %v1257
        %1271 = vst [vmem:[#allocation3 + $0x1b8] sm:$0xff] %v1259
        %1272 = vst [vmem:[#allocation3 + $0x1c0] sm:$0xff] %v1261
        %1273 = vst [vmem:[#allocation3 + $0x1c8] sm:$0xff] %v1263
        %1274 = vst [vmem:[#allocation3 + $0x1d0] sm:$0xf] %v1264
        %v1275 = vld [vmem:[#allocation2] sm:$0xf0]
        %v1276 = vld [vmem:[#allocation2 + $0x8] sm:$0xf0]
        %v1277 = vld [vmem:[#allocation2 + $0x10] sm:$0xf0]
        %v1278 = vld [vmem:[#allocation2 + $0x18] sm:$0xf0]
        %v1279 = vld [vmem:[#allocation2 + $0x20] sm:$0xf0]
        %v1280 = vld [vmem:[#allocation2 + $0x28] sm:$0xf0]
        %v1281 = vld [vmem:[#allocation2 + $0x30] sm:$0xf0]
        %v1282 = vld [vmem:[#allocation2 + $0x38] sm:$0xf0]
        %v1283 = vld [vmem:[#allocation2 + $0x40] sm:$0xf0]
        %v1284 = vld [vmem:[#allocation2 + $0x48] sm:$0xf0]
        %v1295 = vunpack.c.h.b16 %v1275
        %v1296 = vunpack.c.h.b16 %v1276
        %v1297 = vunpack.c.h.b16 %v1277
        %v1298 = vunpack.c.h.b16 %v1278
        %v1299 = vunpack.c.h.b16 %v1279
        %v1300 = vunpack.c.h.b16 %v1280
        %v1301 = vunpack.c.h.b16 %v1281
        %v1302 = vunpack.c.h.b16 %v1282
        %v1303 = vunpack.c.h.b16 %v1283
        %v1304 = vunpack.c.h.b16 %v1284
        %v1305 = vpack.c.b16 %v1296, %v1295
        %v1306 = vpack.c.b16 %v1298, %v1297
        %v1307 = vpack.c.b16 %v1300, %v1299
        %v1308 = vpack.c.b16 %v1302, %v1301
        %v1309 = vpack.c.b16 %v1304, %v1303
        %1310 = vrot.lane.b32.xlu0 %v1305, 122
        %v1311 = vpop.permute.xlu0 %1310
        %1312 = vrot.lane.b32.xlu0 %v1306, 122
        %v1313 = vpop.permute.xlu0 %1312
        %1314 = vrot.lane.b32.xlu0 %v1307, 122
        %v1315 = vpop.permute.xlu0 %1314
        %1316 = vrot.lane.b32.xlu0 %v1308, 122
        %v1317 = vpop.permute.xlu0 %1316
        %1318 = vrot.lane.b32.xlu0 %v1309, 122
        %v1319 = vpop.permute.xlu0 %1318
        %v1320 = vrot.slane %v1311, 4
        %v1321 = vrot.slane %v1313, 4
        %v1322 = vrot.slane %v1315, 4
        %v1323 = vrot.slane %v1317, 4
        %v1324 = vrot.slane %v1319, 4
        %v1325 = vsel %vm559, %v1320, %v1321
        %v1326 = vsel %vm1256, %v1311, %v1325
        %v1327 = vsel %vm559, %v1321, %v1322
        %v1328 = vsel %vm1256, %v1313, %v1327
        %v1329 = vsel %vm559, %v1322, %v1323
        %v1330 = vsel %vm1256, %v1315, %v1329
        %v1331 = vsel %vm559, %v1323, %v1324
        %v1332 = vsel %vm1256, %v1317, %v1331
        %v1333 = vsel %vm1256, %v1319, %v1324
        %1339 = vst [vmem:[#allocation3 + $0x1d4] sm:$0xff] %v1326
        %1340 = vst [vmem:[#allocation3 + $0x1dc] sm:$0xff] %v1328
        %1341 = vst [vmem:[#allocation3 + $0x1e4] sm:$0xff] %v1330
        %1342 = vst [vmem:[#allocation3 + $0x1ec] sm:$0xff] %v1332
        %1343 = vst [vmem:[#allocation3 + $0x1f4] sm:$0xf] %v1333
        %v1344 = vld [vmem:[#allocation2] sm:$0xf]
        %v1345 = vld [vmem:[#allocation2 + $0x8] sm:$0xf]
        %v1346 = vld [vmem:[#allocation2 + $0x10] sm:$0xf]
        %v1347 = vld [vmem:[#allocation2 + $0x18] sm:$0xf]
        %v1348 = vld [vmem:[#allocation2 + $0x20] sm:$0xf]
        %v1349 = vld [vmem:[#allocation2 + $0x28] sm:$0xf]
        %v1350 = vld [vmem:[#allocation2 + $0x30] sm:$0xf]
        %v1351 = vld [vmem:[#allocation2 + $0x38] sm:$0xf]
        %v1352 = vld [vmem:[#allocation2 + $0x40] sm:$0xf]
        %v1353 = vld [vmem:[#allocation2 + $0x48] sm:$0xf]
        %v1364 = vunpack.c.l.b16 %v1344
        %v1365 = vunpack.c.l.b16 %v1345
        %v1366 = vunpack.c.l.b16 %v1346
        %v1367 = vunpack.c.l.b16 %v1347
        %v1368 = vunpack.c.l.b16 %v1348
        %v1369 = vunpack.c.l.b16 %v1349
        %v1370 = vunpack.c.l.b16 %v1350
        %v1371 = vunpack.c.l.b16 %v1351
        %v1372 = vunpack.c.l.b16 %v1352
        %v1373 = vunpack.c.l.b16 %v1353
        %v1374 = vpack.c.b16 %v1365, %v1364
        %v1375 = vpack.c.b16 %v1367, %v1366
        %v1376 = vpack.c.b16 %v1369, %v1368
        %v1377 = vpack.c.b16 %v1371, %v1370
        %v1378 = vpack.c.b16 %v1373, %v1372
        %1379 = vrot.lane.b32.xlu0 %v1374, 121
        %v1380 = vpop.permute.xlu0 %1379
        %1381 = vrot.lane.b32.xlu0 %v1375, 121
        %v1382 = vpop.permute.xlu0 %1381
        %1383 = vrot.lane.b32.xlu0 %v1376, 121
        %v1384 = vpop.permute.xlu0 %1383
        %1385 = vrot.lane.b32.xlu0 %v1377, 121
        %v1386 = vpop.permute.xlu0 %1385
        %1387 = vrot.lane.b32.xlu0 %v1378, 121
        %v1388 = vpop.permute.xlu0 %1387
        %v1389 = vrot.slane %v1380, 4
        %v1390 = vrot.slane %v1382, 4
        %v1391 = vrot.slane %v1384, 4
        %v1392 = vrot.slane %v1386, 4
        %v1393 = vrot.slane %v1388, 4
        %v1394 = vsel %vm559, %v1389, %v1390
        %vm1395 = vcmask 990208
        %v1396 = vsel %vm1395, %v1380, %v1394
        %v1397 = vsel %vm559, %v1390, %v1391
        %v1398 = vsel %vm1395, %v1382, %v1397
        %v1399 = vsel %vm559, %v1391, %v1392
        %v1400 = vsel %vm1395, %v1384, %v1399
        %v1401 = vsel %vm559, %v1392, %v1393
        %v1402 = vsel %vm1395, %v1386, %v1401
        %v1403 = vsel %vm1395, %v1388, %v1393
        %1409 = vst [vmem:[#allocation3 + $0x1f8] sm:$0xff] %v1396
        %1410 = vst [vmem:[#allocation3 + $0x200] sm:$0xff] %v1398
        %1411 = vst [vmem:[#allocation3 + $0x208] sm:$0xff] %v1400
        %1412 = vst [vmem:[#allocation3 + $0x210] sm:$0xff] %v1402
        %1413 = vst [vmem:[#allocation3 + $0x218] sm:$0xf] %v1403
        %v1414 = vld [vmem:[#allocation2] sm:$0xf0]
        %v1415 = vld [vmem:[#allocation2 + $0x8] sm:$0xf0]
        %v1416 = vld [vmem:[#allocation2 + $0x10] sm:$0xf0]
        %v1417 = vld [vmem:[#allocation2 + $0x18] sm:$0xf0]
        %v1418 = vld [vmem:[#allocation2 + $0x20] sm:$0xf0]
        %v1419 = vld [vmem:[#allocation2 + $0x28] sm:$0xf0]
        %v1420 = vld [vmem:[#allocation2 + $0x30] sm:$0xf0]
        %v1421 = vld [vmem:[#allocation2 + $0x38] sm:$0xf0]
        %v1422 = vld [vmem:[#allocation2 + $0x40] sm:$0xf0]
        %v1423 = vld [vmem:[#allocation2 + $0x48] sm:$0xf0]
        %v1434 = vunpack.c.h.b16 %v1414
        %v1435 = vunpack.c.h.b16 %v1415
        %v1436 = vunpack.c.h.b16 %v1416
        %v1437 = vunpack.c.h.b16 %v1417
        %v1438 = vunpack.c.h.b16 %v1418
        %v1439 = vunpack.c.h.b16 %v1419
        %v1440 = vunpack.c.h.b16 %v1420
        %v1441 = vunpack.c.h.b16 %v1421
        %v1442 = vunpack.c.h.b16 %v1422
        %v1443 = vunpack.c.h.b16 %v1423
        %v1444 = vpack.c.b16 %v1435, %v1434
        %v1445 = vpack.c.b16 %v1437, %v1436
        %v1446 = vpack.c.b16 %v1439, %v1438
        %v1447 = vpack.c.b16 %v1441, %v1440
        %v1448 = vpack.c.b16 %v1443, %v1442
        %1449 = vrot.lane.b32.xlu0 %v1444, 121
        %v1450 = vpop.permute.xlu0 %1449
        %1451 = vrot.lane.b32.xlu0 %v1445, 121
        %v1452 = vpop.permute.xlu0 %1451
        %1453 = vrot.lane.b32.xlu0 %v1446, 121
        %v1454 = vpop.permute.xlu0 %1453
        %1455 = vrot.lane.b32.xlu0 %v1447, 121
        %v1456 = vpop.permute.xlu0 %1455
        %1457 = vrot.lane.b32.xlu0 %v1448, 121
        %v1458 = vpop.permute.xlu0 %1457
        %v1459 = vrot.slane %v1450, 4
        %v1460 = vrot.slane %v1452, 4
        %v1461 = vrot.slane %v1454, 4
        %v1462 = vrot.slane %v1456, 4
        %v1463 = vrot.slane %v1458, 4
        %v1464 = vsel %vm559, %v1459, %v1460
        %v1465 = vsel %vm1395, %v1450, %v1464
        %v1466 = vsel %vm559, %v1460, %v1461
        %v1467 = vsel %vm1395, %v1452, %v1466
        %v1468 = vsel %vm559, %v1461, %v1462
        %v1469 = vsel %vm1395, %v1454, %v1468
        %v1470 = vsel %vm559, %v1462, %v1463
        %v1471 = vsel %vm1395, %v1456, %v1470
        %v1472 = vsel %vm1395, %v1458, %v1463
        %1478 = vst [vmem:[#allocation3 + $0x21c] sm:$0xff] %v1465
        %1479 = vst [vmem:[#allocation3 + $0x224] sm:$0xff] %v1467
        %1480 = vst [vmem:[#allocation3 + $0x22c] sm:$0xff] %v1469
        %1481 = vst [vmem:[#allocation3 + $0x234] sm:$0xff] %v1471
        %1482 = vst [vmem:[#allocation3 + $0x23c] sm:$0xf] %v1472
        %v1483 = vld [vmem:[#allocation2] sm:$0xf]
        %v1484 = vld [vmem:[#allocation2 + $0x8] sm:$0xf]
        %v1485 = vld [vmem:[#allocation2 + $0x10] sm:$0xf]
        %v1486 = vld [vmem:[#allocation2 + $0x18] sm:$0xf]
        %v1487 = vld [vmem:[#allocation2 + $0x20] sm:$0xf]
        %v1488 = vld [vmem:[#allocation2 + $0x28] sm:$0xf]
        %v1489 = vld [vmem:[#allocation2 + $0x30] sm:$0xf]
        %v1490 = vld [vmem:[#allocation2 + $0x38] sm:$0xf]
        %v1491 = vld [vmem:[#allocation2 + $0x40] sm:$0xf]
        %v1492 = vld [vmem:[#allocation2 + $0x48] sm:$0xf]
        %v1503 = vunpack.c.l.b16 %v1483
        %v1504 = vunpack.c.l.b16 %v1484
        %v1505 = vunpack.c.l.b16 %v1485
        %v1506 = vunpack.c.l.b16 %v1486
        %v1507 = vunpack.c.l.b16 %v1487
        %v1508 = vunpack.c.l.b16 %v1488
        %v1509 = vunpack.c.l.b16 %v1489
        %v1510 = vunpack.c.l.b16 %v1490
        %v1511 = vunpack.c.l.b16 %v1491
        %v1512 = vunpack.c.l.b16 %v1492
        %v1513 = vpack.c.b16 %v1504, %v1503
        %v1514 = vpack.c.b16 %v1506, %v1505
        %v1515 = vpack.c.b16 %v1508, %v1507
        %v1516 = vpack.c.b16 %v1510, %v1509
        %v1517 = vpack.c.b16 %v1512, %v1511
        %1518 = vrot.lane.b32.xlu0 %v1513, 120
        %v1519 = vpop.permute.xlu0 %1518
        %1520 = vrot.lane.b32.xlu0 %v1514, 120
        %v1521 = vpop.permute.xlu0 %1520
        %1522 = vrot.lane.b32.xlu0 %v1515, 120
        %v1523 = vpop.permute.xlu0 %1522
        %1524 = vrot.lane.b32.xlu0 %v1516, 120
        %v1525 = vpop.permute.xlu0 %1524
        %1526 = vrot.lane.b32.xlu0 %v1517, 120
        %v1527 = vpop.permute.xlu0 %1526
        %v1528 = vrot.slane %v1519, 4
        %v1529 = vrot.slane %v1521, 4
        %v1530 = vrot.slane %v1523, 4
        %v1531 = vrot.slane %v1525, 4
        %v1532 = vrot.slane %v1527, 4
        %v1533 = vsel %vm559, %v1528, %v1529
        %vm1534 = vcmask 982016
        %v1535 = vsel %vm1534, %v1519, %v1533
        %v1536 = vsel %vm559, %v1529, %v1530
        %v1537 = vsel %vm1534, %v1521, %v1536
        %v1538 = vsel %vm559, %v1530, %v1531
        %v1539 = vsel %vm1534, %v1523, %v1538
        %v1540 = vsel %vm559, %v1531, %v1532
        %v1541 = vsel %vm1534, %v1525, %v1540
        %v1542 = vsel %vm1534, %v1527, %v1532
        %1548 = vst [vmem:[#allocation3 + $0x240] sm:$0xff] %v1535
        %1549 = vst [vmem:[#allocation3 + $0x248] sm:$0xff] %v1537
        %1550 = vst [vmem:[#allocation3 + $0x250] sm:$0xff] %v1539
        %1551 = vst [vmem:[#allocation3 + $0x258] sm:$0xff] %v1541
        %1552 = vst [vmem:[#allocation3 + $0x260] sm:$0xf] %v1542
        %v1553 = vld [vmem:[#allocation2] sm:$0xf0]
        %v1554 = vld [vmem:[#allocation2 + $0x8] sm:$0xf0]
        %v1555 = vld [vmem:[#allocation2 + $0x10] sm:$0xf0]
        %v1556 = vld [vmem:[#allocation2 + $0x18] sm:$0xf0]
        %v1557 = vld [vmem:[#allocation2 + $0x20] sm:$0xf0]
        %v1558 = vld [vmem:[#allocation2 + $0x28] sm:$0xf0]
        %v1559 = vld [vmem:[#allocation2 + $0x30] sm:$0xf0]
        %v1560 = vld [vmem:[#allocation2 + $0x38] sm:$0xf0]
        %v1561 = vld [vmem:[#allocation2 + $0x40] sm:$0xf0]
        %v1562 = vld [vmem:[#allocation2 + $0x48] sm:$0xf0]
        %v1573 = vunpack.c.h.b16 %v1553
        %v1574 = vunpack.c.h.b16 %v1554
        %v1575 = vunpack.c.h.b16 %v1555
        %v1576 = vunpack.c.h.b16 %v1556
        %v1577 = vunpack.c.h.b16 %v1557
        %v1578 = vunpack.c.h.b16 %v1558
        %v1579 = vunpack.c.h.b16 %v1559
        %v1580 = vunpack.c.h.b16 %v1560
        %v1581 = vunpack.c.h.b16 %v1561
        %v1582 = vunpack.c.h.b16 %v1562
        %v1583 = vpack.c.b16 %v1574, %v1573
        %v1584 = vpack.c.b16 %v1576, %v1575
        %v1585 = vpack.c.b16 %v1578, %v1577
        %v1586 = vpack.c.b16 %v1580, %v1579
        %v1587 = vpack.c.b16 %v1582, %v1581
        %1588 = vrot.lane.b32.xlu0 %v1583, 120
        %v1589 = vpop.permute.xlu0 %1588
        %1590 = vrot.lane.b32.xlu0 %v1584, 120
        %v1591 = vpop.permute.xlu0 %1590
        %1592 = vrot.lane.b32.xlu0 %v1585, 120
        %v1593 = vpop.permute.xlu0 %1592
        %1594 = vrot.lane.b32.xlu0 %v1586, 120
        %v1595 = vpop.permute.xlu0 %1594
        %1596 = vrot.lane.b32.xlu0 %v1587, 120
        %v1597 = vpop.permute.xlu0 %1596
        %v1598 = vrot.slane %v1589, 4
        %v1599 = vrot.slane %v1591, 4
        %v1600 = vrot.slane %v1593, 4
        %v1601 = vrot.slane %v1595, 4
        %v1602 = vrot.slane %v1597, 4
        %v1603 = vsel %vm559, %v1598, %v1599
        %v1604 = vsel %vm1534, %v1589, %v1603
        %v1605 = vsel %vm559, %v1599, %v1600
        %v1606 = vsel %vm1534, %v1591, %v1605
        %v1607 = vsel %vm559, %v1600, %v1601
        %v1608 = vsel %vm1534, %v1593, %v1607
        %v1609 = vsel %vm559, %v1601, %v1602
        %v1610 = vsel %vm1534, %v1595, %v1609
        %v1611 = vsel %vm1534, %v1597, %v1602
        %1617 = vst [vmem:[#allocation3 + $0x264] sm:$0xff] %v1604
        %1618 = vst [vmem:[#allocation3 + $0x26c] sm:$0xff] %v1606
        %1619 = vst [vmem:[#allocation3 + $0x274] sm:$0xff] %v1608
        %1620 = vst [vmem:[#allocation3 + $0x27c] sm:$0xff] %v1610
        %1621 = vst [vmem:[#allocation3 + $0x284] sm:$0xf] %v1611
        %v1622 = vld [vmem:[#allocation2] sm:$0xf]
        %v1623 = vld [vmem:[#allocation2 + $0x8] sm:$0xf]
        %v1624 = vld [vmem:[#allocation2 + $0x10] sm:$0xf]
        %v1625 = vld [vmem:[#allocation2 + $0x18] sm:$0xf]
        %v1626 = vld [vmem:[#allocation2 + $0x20] sm:$0xf]
        %v1627 = vld [vmem:[#allocation2 + $0x28] sm:$0xf]
        %v1628 = vld [vmem:[#allocation2 + $0x30] sm:$0xf]
        %v1629 = vld [vmem:[#allocation2 + $0x38] sm:$0xf]
        %v1630 = vld [vmem:[#allocation2 + $0x40] sm:$0xf]
        %v1631 = vld [vmem:[#allocation2 + $0x48] sm:$0xf]
        %v1642 = vunpack.c.l.b16 %v1622
        %v1643 = vunpack.c.l.b16 %v1623
        %v1644 = vunpack.c.l.b16 %v1624
        %v1645 = vunpack.c.l.b16 %v1625
        %v1646 = vunpack.c.l.b16 %v1626
        %v1647 = vunpack.c.l.b16 %v1627
        %v1648 = vunpack.c.l.b16 %v1628
        %v1649 = vunpack.c.l.b16 %v1629
        %v1650 = vunpack.c.l.b16 %v1630
        %v1651 = vunpack.c.l.b16 %v1631
        %v1652 = vpack.c.b16 %v1643, %v1642
        %v1653 = vpack.c.b16 %v1645, %v1644
        %v1654 = vpack.c.b16 %v1647, %v1646
        %v1655 = vpack.c.b16 %v1649, %v1648
        %v1656 = vpack.c.b16 %v1651, %v1650
        %1657 = vrot.lane.b32.xlu0 %v1652, 119
        %v1658 = vpop.permute.xlu0 %1657
        %1659 = vrot.lane.b32.xlu0 %v1653, 119
        %v1660 = vpop.permute.xlu0 %1659
        %1661 = vrot.lane.b32.xlu0 %v1654, 119
        %v1662 = vpop.permute.xlu0 %1661
        %1663 = vrot.lane.b32.xlu0 %v1655, 119
        %v1664 = vpop.permute.xlu0 %1663
        %1665 = vrot.lane.b32.xlu0 %v1656, 119
        %v1666 = vpop.permute.xlu0 %1665
        %v1667 = vrot.slane %v1658, 4
        %v1668 = vrot.slane %v1660, 4
        %v1669 = vrot.slane %v1662, 4
        %v1670 = vrot.slane %v1664, 4
        %v1671 = vrot.slane %v1666, 4
        %v1672 = vsel %vm559, %v1667, %v1668
        %vm1673 = vcmask 973824
        %v1674 = vsel %vm1673, %v1658, %v1672
        %v1675 = vsel %vm559, %v1668, %v1669
        %v1676 = vsel %vm1673, %v1660, %v1675
        %v1677 = vsel %vm559, %v1669, %v1670
        %v1678 = vsel %vm1673, %v1662, %v1677
        %v1679 = vsel %vm559, %v1670, %v1671
        %v1680 = vsel %vm1673, %v1664, %v1679
        %v1681 = vsel %vm1673, %v1666, %v1671
        %1687 = vst [vmem:[#allocation3 + $0x288] sm:$0xff] %v1674
        %1688 = vst [vmem:[#allocation3 + $0x290] sm:$0xff] %v1676
        %1689 = vst [vmem:[#allocation3 + $0x298] sm:$0xff] %v1678
        %1690 = vst [vmem:[#allocation3 + $0x2a0] sm:$0xff] %v1680
        %1691 = vst [vmem:[#allocation3 + $0x2a8] sm:$0xf] %v1681
        %v1692 = vld [vmem:[#allocation2] sm:$0xf0]
        %v1693 = vld [vmem:[#allocation2 + $0x8] sm:$0xf0]
        %v1694 = vld [vmem:[#allocation2 + $0x10] sm:$0xf0]
        %v1695 = vld [vmem:[#allocation2 + $0x18] sm:$0xf0]
        %v1696 = vld [vmem:[#allocation2 + $0x20] sm:$0xf0]
        %v1697 = vld [vmem:[#allocation2 + $0x28] sm:$0xf0]
        %v1698 = vld [vmem:[#allocation2 + $0x30] sm:$0xf0]
        %v1699 = vld [vmem:[#allocation2 + $0x38] sm:$0xf0]
        %v1700 = vld [vmem:[#allocation2 + $0x40] sm:$0xf0]
        %v1701 = vld [vmem:[#allocation2 + $0x48] sm:$0xf0]
        %v1712 = vunpack.c.h.b16 %v1692
        %v1713 = vunpack.c.h.b16 %v1693
        %v1714 = vunpack.c.h.b16 %v1694
        %v1715 = vunpack.c.h.b16 %v1695
        %v1716 = vunpack.c.h.b16 %v1696
        %v1717 = vunpack.c.h.b16 %v1697
        %v1718 = vunpack.c.h.b16 %v1698
        %v1719 = vunpack.c.h.b16 %v1699
        %v1720 = vunpack.c.h.b16 %v1700
        %v1721 = vunpack.c.h.b16 %v1701
        %v1722 = vpack.c.b16 %v1713, %v1712
        %v1723 = vpack.c.b16 %v1715, %v1714
        %v1724 = vpack.c.b16 %v1717, %v1716
        %v1725 = vpack.c.b16 %v1719, %v1718
        %v1726 = vpack.c.b16 %v1721, %v1720
        %1727 = vrot.lane.b32.xlu0 %v1722, 119
        %v1728 = vpop.permute.xlu0 %1727
        %1729 = vrot.lane.b32.xlu0 %v1723, 119
        %v1730 = vpop.permute.xlu0 %1729
        %1731 = vrot.lane.b32.xlu0 %v1724, 119
        %v1732 = vpop.permute.xlu0 %1731
        %1733 = vrot.lane.b32.xlu0 %v1725, 119
        %v1734 = vpop.permute.xlu0 %1733
        %1735 = vrot.lane.b32.xlu0 %v1726, 119
        %v1736 = vpop.permute.xlu0 %1735
        %v1737 = vrot.slane %v1728, 4
        %v1738 = vrot.slane %v1730, 4
        %v1739 = vrot.slane %v1732, 4
        %v1740 = vrot.slane %v1734, 4
        %v1741 = vrot.slane %v1736, 4
        %v1742 = vsel %vm559, %v1737, %v1738
        %v1743 = vsel %vm1673, %v1728, %v1742
        %v1744 = vsel %vm559, %v1738, %v1739
        %v1745 = vsel %vm1673, %v1730, %v1744
        %v1746 = vsel %vm559, %v1739, %v1740
        %v1747 = vsel %vm1673, %v1732, %v1746
        %v1748 = vsel %vm559, %v1740, %v1741
        %v1749 = vsel %vm1673, %v1734, %v1748
        %v1750 = vsel %vm1673, %v1736, %v1741
        %1756 = vst [vmem:[#allocation3 + $0x2ac] sm:$0xff] %v1743
        %1757 = vst [vmem:[#allocation3 + $0x2b4] sm:$0xff] %v1745
        %1758 = vst [vmem:[#allocation3 + $0x2bc] sm:$0xff] %v1747
        %1759 = vst [vmem:[#allocation3 + $0x2c4] sm:$0xff] %v1749
        %1760 = vst [vmem:[#allocation3 + $0x2cc] sm:$0xf] %v1750
        %v1761 = vld [vmem:[#allocation2] sm:$0xf]
        %v1762 = vld [vmem:[#allocation2 + $0x8] sm:$0xf]
        %v1763 = vld [vmem:[#allocation2 + $0x10] sm:$0xf]
        %v1764 = vld [vmem:[#allocation2 + $0x18] sm:$0xf]
        %v1765 = vld [vmem:[#allocation2 + $0x20] sm:$0xf]
        %v1766 = vld [vmem:[#allocation2 + $0x28] sm:$0xf]
        %v1767 = vld [vmem:[#allocation2 + $0x30] sm:$0xf]
        %v1768 = vld [vmem:[#allocation2 + $0x38] sm:$0xf]
        %v1769 = vld [vmem:[#allocation2 + $0x40] sm:$0xf]
        %v1770 = vld [vmem:[#allocation2 + $0x48] sm:$0xf]
        %v1781 = vunpack.c.l.b16 %v1761
        %v1782 = vunpack.c.l.b16 %v1762
        %v1783 = vunpack.c.l.b16 %v1763
        %v1784 = vunpack.c.l.b16 %v1764
        %v1785 = vunpack.c.l.b16 %v1765
        %v1786 = vunpack.c.l.b16 %v1766
        %v1787 = vunpack.c.l.b16 %v1767
        %v1788 = vunpack.c.l.b16 %v1768
        %v1789 = vunpack.c.l.b16 %v1769
        %v1790 = vunpack.c.l.b16 %v1770
        %v1791 = vpack.c.b16 %v1782, %v1781
        %v1792 = vpack.c.b16 %v1784, %v1783
        %v1793 = vpack.c.b16 %v1786, %v1785
        %v1794 = vpack.c.b16 %v1788, %v1787
        %v1795 = vpack.c.b16 %v1790, %v1789
        %1796 = vrot.lane.b32.xlu0 %v1791, 118
        %v1797 = vpop.permute.xlu0 %1796
        %1798 = vrot.lane.b32.xlu0 %v1792, 118
        %v1799 = vpop.permute.xlu0 %1798
        %1800 = vrot.lane.b32.xlu0 %v1793, 118
        %v1801 = vpop.permute.xlu0 %1800
        %1802 = vrot.lane.b32.xlu0 %v1794, 118
        %v1803 = vpop.permute.xlu0 %1802
        %1804 = vrot.lane.b32.xlu0 %v1795, 118
        %v1805 = vpop.permute.xlu0 %1804
        %v1806 = vrot.slane %v1797, 4
        %v1807 = vrot.slane %v1799, 4
        %v1808 = vrot.slane %v1801, 4
        %v1809 = vrot.slane %v1803, 4
        %v1810 = vrot.slane %v1805, 4
        %v1811 = vsel %vm559, %v1806, %v1807
        %vm1812 = vcmask 965632
        %v1813 = vsel %vm1812, %v1797, %v1811
        %v1814 = vsel %vm559, %v1807, %v1808
        %v1815 = vsel %vm1812, %v1799, %v1814
        %v1816 = vsel %vm559, %v1808, %v1809
        %v1817 = vsel %vm1812, %v1801, %v1816
        %v1818 = vsel %vm559, %v1809, %v1810
        %v1819 = vsel %vm1812, %v1803, %v1818
        %v1820 = vsel %vm1812, %v1805, %v1810
        %1826 = vst [vmem:[#allocation3 + $0x2d0] sm:$0xff] %v1813
        %1827 = vst [vmem:[#allocation3 + $0x2d8] sm:$0xff] %v1815
        %1828 = vst [vmem:[#allocation3 + $0x2e0] sm:$0xff] %v1817
        %1829 = vst [vmem:[#allocation3 + $0x2e8] sm:$0xff] %v1819
        %1830 = vst [vmem:[#allocation3 + $0x2f0] sm:$0xf] %v1820
        %v1831 = vld [vmem:[#allocation2] sm:$0xf0]
        %v1832 = vld [vmem:[#allocation2 + $0x8] sm:$0xf0]
        %v1833 = vld [vmem:[#allocation2 + $0x10] sm:$0xf0]
        %v1834 = vld [vmem:[#allocation2 + $0x18] sm:$0xf0]
        %v1835 = vld [vmem:[#allocation2 + $0x20] sm:$0xf0]
        %v1836 = vld [vmem:[#allocation2 + $0x28] sm:$0xf0]
        %v1837 = vld [vmem:[#allocation2 + $0x30] sm:$0xf0]
        %v1838 = vld [vmem:[#allocation2 + $0x38] sm:$0xf0]
        %v1839 = vld [vmem:[#allocation2 + $0x40] sm:$0xf0]
        %v1840 = vld [vmem:[#allocation2 + $0x48] sm:$0xf0]
        %v1851 = vunpack.c.h.b16 %v1831
        %v1852 = vunpack.c.h.b16 %v1832
        %v1853 = vunpack.c.h.b16 %v1833
        %v1854 = vunpack.c.h.b16 %v1834
        %v1855 = vunpack.c.h.b16 %v1835
        %v1856 = vunpack.c.h.b16 %v1836
        %v1857 = vunpack.c.h.b16 %v1837
        %v1858 = vunpack.c.h.b16 %v1838
        %v1859 = vunpack.c.h.b16 %v1839
        %v1860 = vunpack.c.h.b16 %v1840
        %v1861 = vpack.c.b16 %v1852, %v1851
        %v1862 = vpack.c.b16 %v1854, %v1853
        %v1863 = vpack.c.b16 %v1856, %v1855
        %v1864 = vpack.c.b16 %v1858, %v1857
        %v1865 = vpack.c.b16 %v1860, %v1859
        %1866 = vrot.lane.b32.xlu0 %v1861, 118
        %v1867 = vpop.permute.xlu0 %1866
        %1868 = vrot.lane.b32.xlu0 %v1862, 118
        %v1869 = vpop.permute.xlu0 %1868
        %1870 = vrot.lane.b32.xlu0 %v1863, 118
        %v1871 = vpop.permute.xlu0 %1870
        %1872 = vrot.lane.b32.xlu0 %v1864, 118
        %v1873 = vpop.permute.xlu0 %1872
        %1874 = vrot.lane.b32.xlu0 %v1865, 118
        %v1875 = vpop.permute.xlu0 %1874
        %v1876 = vrot.slane %v1867, 4
        %v1877 = vrot.slane %v1869, 4
        %v1878 = vrot.slane %v1871, 4
        %v1879 = vrot.slane %v1873, 4
        %v1880 = vrot.slane %v1875, 4
        %v1881 = vsel %vm559, %v1876, %v1877
        %v1882 = vsel %vm1812, %v1867, %v1881
        %v1883 = vsel %vm559, %v1877, %v1878
        %v1884 = vsel %vm1812, %v1869, %v1883
        %v1885 = vsel %vm559, %v1878, %v1879
        %v1886 = vsel %vm1812, %v1871, %v1885
        %v1887 = vsel %vm559, %v1879, %v1880
        %v1888 = vsel %vm1812, %v1873, %v1887
        %v1889 = vsel %vm1812, %v1875, %v1880
        %1895 = vst [vmem:[#allocation3 + $0x2f4] sm:$0xff] %v1882
        %1896 = vst [vmem:[#allocation3 + $0x2fc] sm:$0xff] %v1884
        %1897 = vst [vmem:[#allocation3 + $0x304] sm:$0xff] %v1886
        %1898 = vst [vmem:[#allocation3 + $0x30c] sm:$0xff] %v1888
        %1899 = vst [vmem:[#allocation3 + $0x314] sm:$0xf] %v1889
        %v1900 = vld [vmem:[#allocation2] sm:$0xf]
        %v1901 = vld [vmem:[#allocation2 + $0x8] sm:$0xf]
        %v1902 = vld [vmem:[#allocation2 + $0x10] sm:$0xf]
        %v1903 = vld [vmem:[#allocation2 + $0x18] sm:$0xf]
        %v1904 = vld [vmem:[#allocation2 + $0x20] sm:$0xf]
        %v1905 = vld [vmem:[#allocation2 + $0x28] sm:$0xf]
        %v1906 = vld [vmem:[#allocation2 + $0x30] sm:$0xf]
        %v1907 = vld [vmem:[#allocation2 + $0x38] sm:$0xf]
        %v1908 = vld [vmem:[#allocation2 + $0x40] sm:$0xf]
        %v1909 = vld [vmem:[#allocation2 + $0x48] sm:$0xf]
        %v1920 = vunpack.c.l.b16 %v1900
        %v1921 = vunpack.c.l.b16 %v1901
        %v1922 = vunpack.c.l.b16 %v1902
        %v1923 = vunpack.c.l.b16 %v1903
        %v1924 = vunpack.c.l.b16 %v1904
        %v1925 = vunpack.c.l.b16 %v1905
        %v1926 = vunpack.c.l.b16 %v1906
        %v1927 = vunpack.c.l.b16 %v1907
        %v1928 = vunpack.c.l.b16 %v1908
        %v1929 = vunpack.c.l.b16 %v1909
        %v1930 = vpack.c.b16 %v1921, %v1920
        %v1931 = vpack.c.b16 %v1923, %v1922
        %v1932 = vpack.c.b16 %v1925, %v1924
        %v1933 = vpack.c.b16 %v1927, %v1926
        %v1934 = vpack.c.b16 %v1929, %v1928
        %1935 = vrot.lane.b32.xlu0 %v1930, 117
        %v1936 = vpop.permute.xlu0 %1935
        %1937 = vrot.lane.b32.xlu0 %v1931, 117
        %v1938 = vpop.permute.xlu0 %1937
        %1939 = vrot.lane.b32.xlu0 %v1932, 117
        %v1940 = vpop.permute.xlu0 %1939
        %1941 = vrot.lane.b32.xlu0 %v1933, 117
        %v1942 = vpop.permute.xlu0 %1941
        %1943 = vrot.lane.b32.xlu0 %v1934, 117
        %v1944 = vpop.permute.xlu0 %1943
        %v1945 = vrot.slane %v1936, 4
        %v1946 = vrot.slane %v1938, 4
        %v1947 = vrot.slane %v1940, 4
        %v1948 = vrot.slane %v1942, 4
        %v1949 = vrot.slane %v1944, 4
        %v1950 = vsel %vm559, %v1945, %v1946
        %vm1951 = vcmask 957440
        %v1952 = vsel %vm1951, %v1936, %v1950
        %v1953 = vsel %vm559, %v1946, %v1947
        %v1954 = vsel %vm1951, %v1938, %v1953
        %v1955 = vsel %vm559, %v1947, %v1948
        %v1956 = vsel %vm1951, %v1940, %v1955
        %v1957 = vsel %vm559, %v1948, %v1949
        %v1958 = vsel %vm1951, %v1942, %v1957
        %v1959 = vsel %vm1951, %v1944, %v1949
        %1965 = vst [vmem:[#allocation3 + $0x318] sm:$0xff] %v1952
        %1966 = vst [vmem:[#allocation3 + $0x320] sm:$0xff] %v1954
        %1967 = vst [vmem:[#allocation3 + $0x328] sm:$0xff] %v1956
        %1968 = vst [vmem:[#allocation3 + $0x330] sm:$0xff] %v1958
        %1969 = vst [vmem:[#allocation3 + $0x338] sm:$0xf] %v1959
        %v1970 = vld [vmem:[#allocation2] sm:$0xf0]
        %v1971 = vld [vmem:[#allocation2 + $0x8] sm:$0xf0]
        %v1972 = vld [vmem:[#allocation2 + $0x10] sm:$0xf0]
        %v1973 = vld [vmem:[#allocation2 + $0x18] sm:$0xf0]
        %v1974 = vld [vmem:[#allocation2 + $0x20] sm:$0xf0]
        %v1975 = vld [vmem:[#allocation2 + $0x28] sm:$0xf0]
        %v1976 = vld [vmem:[#allocation2 + $0x30] sm:$0xf0]
        %v1977 = vld [vmem:[#allocation2 + $0x38] sm:$0xf0]
        %v1978 = vld [vmem:[#allocation2 + $0x40] sm:$0xf0]
        %v1979 = vld [vmem:[#allocation2 + $0x48] sm:$0xf0]
        %v1990 = vunpack.c.h.b16 %v1970
        %v1991 = vunpack.c.h.b16 %v1971
        %v1992 = vunpack.c.h.b16 %v1972
        %v1993 = vunpack.c.h.b16 %v1973
        %v1994 = vunpack.c.h.b16 %v1974
        %v1995 = vunpack.c.h.b16 %v1975
        %v1996 = vunpack.c.h.b16 %v1976
        %v1997 = vunpack.c.h.b16 %v1977
        %v1998 = vunpack.c.h.b16 %v1978
        %v1999 = vunpack.c.h.b16 %v1979
        %v2000 = vpack.c.b16 %v1991, %v1990
        %v2001 = vpack.c.b16 %v1993, %v1992
        %v2002 = vpack.c.b16 %v1995, %v1994
        %v2003 = vpack.c.b16 %v1997, %v1996
        %v2004 = vpack.c.b16 %v1999, %v1998
        %2005 = vrot.lane.b32.xlu0 %v2000, 117
        %v2006 = vpop.permute.xlu0 %2005
        %2007 = vrot.lane.b32.xlu0 %v2001, 117
        %v2008 = vpop.permute.xlu0 %2007
        %2009 = vrot.lane.b32.xlu0 %v2002, 117
        %v2010 = vpop.permute.xlu0 %2009
        %2011 = vrot.lane.b32.xlu0 %v2003, 117
        %v2012 = vpop.permute.xlu0 %2011
        %2013 = vrot.lane.b32.xlu0 %v2004, 117
        %v2014 = vpop.permute.xlu0 %2013
        %v2015 = vrot.slane %v2006, 4
        %v2016 = vrot.slane %v2008, 4
        %v2017 = vrot.slane %v2010, 4
        %v2018 = vrot.slane %v2012, 4
        %v2019 = vrot.slane %v2014, 4
        %v2020 = vsel %vm559, %v2015, %v2016
        %v2021 = vsel %vm1951, %v2006, %v2020
        %v2022 = vsel %vm559, %v2016, %v2017
        %v2023 = vsel %vm1951, %v2008, %v2022
        %v2024 = vsel %vm559, %v2017, %v2018
        %v2025 = vsel %vm1951, %v2010, %v2024
        %v2026 = vsel %vm559, %v2018, %v2019
        %v2027 = vsel %vm1951, %v2012, %v2026
        %v2028 = vsel %vm1951, %v2014, %v2019
        %2034 = vst [vmem:[#allocation3 + $0x33c] sm:$0xff] %v2021
        %2035 = vst [vmem:[#allocation3 + $0x344] sm:$0xff] %v2023
        %2036 = vst [vmem:[#allocation3 + $0x34c] sm:$0xff] %v2025
        %2037 = vst [vmem:[#allocation3 + $0x354] sm:$0xff] %v2027
        %2038 = vst [vmem:[#allocation3 + $0x35c] sm:$0xf] %v2028
        %v2039 = vld [vmem:[#allocation2] sm:$0xf]
        %v2040 = vld [vmem:[#allocation2 + $0x8] sm:$0xf]
        %v2041 = vld [vmem:[#allocation2 + $0x10] sm:$0xf]
        %v2042 = vld [vmem:[#allocation2 + $0x18] sm:$0xf]
        %v2043 = vld [vmem:[#allocation2 + $0x20] sm:$0xf]
        %v2044 = vld [vmem:[#allocation2 + $0x28] sm:$0xf]
        %v2045 = vld [vmem:[#allocation2 + $0x30] sm:$0xf]
        %v2046 = vld [vmem:[#allocation2 + $0x38] sm:$0xf]
        %v2047 = vld [vmem:[#allocation2 + $0x40] sm:$0xf]
        %v2048 = vld [vmem:[#allocation2 + $0x48] sm:$0xf]
        %v2059 = vunpack.c.l.b16 %v2039
        %v2060 = vunpack.c.l.b16 %v2040
        %v2061 = vunpack.c.l.b16 %v2041
        %v2062 = vunpack.c.l.b16 %v2042
        %v2063 = vunpack.c.l.b16 %v2043
        %v2064 = vunpack.c.l.b16 %v2044
        %v2065 = vunpack.c.l.b16 %v2045
        %v2066 = vunpack.c.l.b16 %v2046
        %v2067 = vunpack.c.l.b16 %v2047
        %v2068 = vunpack.c.l.b16 %v2048
        %v2069 = vpack.c.b16 %v2060, %v2059
        %v2070 = vpack.c.b16 %v2062, %v2061
        %v2071 = vpack.c.b16 %v2064, %v2063
        %v2072 = vpack.c.b16 %v2066, %v2065
        %v2073 = vpack.c.b16 %v2068, %v2067
        %2074 = vrot.lane.b32.xlu0 %v2069, 116
        %v2075 = vpop.permute.xlu0 %2074
        %2076 = vrot.lane.b32.xlu0 %v2070, 116
        %v2077 = vpop.permute.xlu0 %2076
        %2078 = vrot.lane.b32.xlu0 %v2071, 116
        %v2079 = vpop.permute.xlu0 %2078
        %2080 = vrot.lane.b32.xlu0 %v2072, 116
        %v2081 = vpop.permute.xlu0 %2080
        %2082 = vrot.lane.b32.xlu0 %v2073, 116
        %v2083 = vpop.permute.xlu0 %2082
        %v2084 = vrot.slane %v2075, 4
        %v2085 = vrot.slane %v2077, 4
        %v2086 = vrot.slane %v2079, 4
        %v2087 = vrot.slane %v2081, 4
        %v2088 = vrot.slane %v2083, 4
        %v2089 = vsel %vm559, %v2084, %v2085
        %vm2090 = vcmask 949248
        %v2091 = vsel %vm2090, %v2075, %v2089
        %v2092 = vsel %vm559, %v2085, %v2086
        %v2093 = vsel %vm2090, %v2077, %v2092
        %v2094 = vsel %vm559, %v2086, %v2087
        %v2095 = vsel %vm2090, %v2079, %v2094
        %v2096 = vsel %vm559, %v2087, %v2088
        %v2097 = vsel %vm2090, %v2081, %v2096
        %v2098 = vsel %vm2090, %v2083, %v2088
        %2104 = vst [vmem:[#allocation3 + $0x360] sm:$0xff] %v2091
        %2105 = vst [vmem:[#allocation3 + $0x368] sm:$0xff] %v2093
        %2106 = vst [vmem:[#allocation3 + $0x370] sm:$0xff] %v2095
        %2107 = vst [vmem:[#allocation3 + $0x378] sm:$0xff] %v2097
        %2108 = vst [vmem:[#allocation3 + $0x380] sm:$0xf] %v2098
        %v2109 = vld [vmem:[#allocation2] sm:$0xf0]
        %v2110 = vld [vmem:[#allocation2 + $0x8] sm:$0xf0]
        %v2111 = vld [vmem:[#allocation2 + $0x10] sm:$0xf0]
        %v2112 = vld [vmem:[#allocation2 + $0x18] sm:$0xf0]
        %v2113 = vld [vmem:[#allocation2 + $0x20] sm:$0xf0]
        %v2114 = vld [vmem:[#allocation2 + $0x28] sm:$0xf0]
        %v2115 = vld [vmem:[#allocation2 + $0x30] sm:$0xf0]
        %v2116 = vld [vmem:[#allocation2 + $0x38] sm:$0xf0]
        %v2117 = vld [vmem:[#allocation2 + $0x40] sm:$0xf0]
        %v2118 = vld [vmem:[#allocation2 + $0x48] sm:$0xf0]
        %v2129 = vunpack.c.h.b16 %v2109
        %v2130 = vunpack.c.h.b16 %v2110
        %v2131 = vunpack.c.h.b16 %v2111
        %v2132 = vunpack.c.h.b16 %v2112
        %v2133 = vunpack.c.h.b16 %v2113
        %v2134 = vunpack.c.h.b16 %v2114
        %v2135 = vunpack.c.h.b16 %v2115
        %v2136 = vunpack.c.h.b16 %v2116
        %v2137 = vunpack.c.h.b16 %v2117
        %v2138 = vunpack.c.h.b16 %v2118
        %v2139 = vpack.c.b16 %v2130, %v2129
        %v2140 = vpack.c.b16 %v2132, %v2131
        %v2141 = vpack.c.b16 %v2134, %v2133
        %v2142 = vpack.c.b16 %v2136, %v2135
        %v2143 = vpack.c.b16 %v2138, %v2137
        %2144 = vrot.lane.b32.xlu0 %v2139, 116
        %v2145 = vpop.permute.xlu0 %2144
        %2146 = vrot.lane.b32.xlu0 %v2140, 116
        %v2147 = vpop.permute.xlu0 %2146
        %2148 = vrot.lane.b32.xlu0 %v2141, 116
        %v2149 = vpop.permute.xlu0 %2148
        %2150 = vrot.lane.b32.xlu0 %v2142, 116
        %v2151 = vpop.permute.xlu0 %2150
        %2152 = vrot.lane.b32.xlu0 %v2143, 116
        %v2153 = vpop.permute.xlu0 %2152
        %v2154 = vrot.slane %v2145, 4
        %v2155 = vrot.slane %v2147, 4
        %v2156 = vrot.slane %v2149, 4
        %v2157 = vrot.slane %v2151, 4
        %v2158 = vrot.slane %v2153, 4
        %v2159 = vsel %vm559, %v2154, %v2155
        %v2160 = vsel %vm2090, %v2145, %v2159
        %v2161 = vsel %vm559, %v2155, %v2156
        %v2162 = vsel %vm2090, %v2147, %v2161
        %v2163 = vsel %vm559, %v2156, %v2157
        %v2164 = vsel %vm2090, %v2149, %v2163
        %v2165 = vsel %vm559, %v2157, %v2158
        %v2166 = vsel %vm2090, %v2151, %v2165
        %v2167 = vsel %vm2090, %v2153, %v2158
        %2173 = vst [vmem:[#allocation3 + $0x384] sm:$0xff] %v2160
        %2174 = vst [vmem:[#allocation3 + $0x38c] sm:$0xff] %v2162
        %2175 = vst [vmem:[#allocation3 + $0x394] sm:$0xff] %v2164
        %2176 = vst [vmem:[#allocation3 + $0x39c] sm:$0xff] %v2166
        %2177 = vst [vmem:[#allocation3 + $0x3a4] sm:$0xf] %v2167
        %v2178 = vld [vmem:[#allocation2] sm:$0xf]
        %v2179 = vld [vmem:[#allocation2 + $0x8] sm:$0xf]
        %v2180 = vld [vmem:[#allocation2 + $0x10] sm:$0xf]
        %v2181 = vld [vmem:[#allocation2 + $0x18] sm:$0xf]
        %v2182 = vld [vmem:[#allocation2 + $0x20] sm:$0xf]
        %v2183 = vld [vmem:[#allocation2 + $0x28] sm:$0xf]
        %v2184 = vld [vmem:[#allocation2 + $0x30] sm:$0xf]
        %v2185 = vld [vmem:[#allocation2 + $0x38] sm:$0xf]
        %v2186 = vld [vmem:[#allocation2 + $0x40] sm:$0xf]
        %v2187 = vld [vmem:[#allocation2 + $0x48] sm:$0xf]
        %v2198 = vunpack.c.l.b16 %v2178
        %v2199 = vunpack.c.l.b16 %v2179
        %v2200 = vunpack.c.l.b16 %v2180
        %v2201 = vunpack.c.l.b16 %v2181
        %v2202 = vunpack.c.l.b16 %v2182
        %v2203 = vunpack.c.l.b16 %v2183
        %v2204 = vunpack.c.l.b16 %v2184
        %v2205 = vunpack.c.l.b16 %v2185
        %v2206 = vunpack.c.l.b16 %v2186
        %v2207 = vunpack.c.l.b16 %v2187
        %v2208 = vpack.c.b16 %v2199, %v2198
        %v2209 = vpack.c.b16 %v2201, %v2200
        %v2210 = vpack.c.b16 %v2203, %v2202
        %v2211 = vpack.c.b16 %v2205, %v2204
        %v2212 = vpack.c.b16 %v2207, %v2206
        %2213 = vrot.lane.b32.xlu0 %v2208, 115
        %v2214 = vpop.permute.xlu0 %2213
        %2215 = vrot.lane.b32.xlu0 %v2209, 115
        %v2216 = vpop.permute.xlu0 %2215
        %2217 = vrot.lane.b32.xlu0 %v2210, 115
        %v2218 = vpop.permute.xlu0 %2217
        %2219 = vrot.lane.b32.xlu0 %v2211, 115
        %v2220 = vpop.permute.xlu0 %2219
        %2221 = vrot.lane.b32.xlu0 %v2212, 115
        %v2222 = vpop.permute.xlu0 %2221
        %v2223 = vrot.slane %v2214, 4
        %v2224 = vrot.slane %v2216, 4
        %v2225 = vrot.slane %v2218, 4
        %v2226 = vrot.slane %v2220, 4
        %v2227 = vrot.slane %v2222, 4
        %v2228 = vsel %vm559, %v2223, %v2224
        %vm2229 = vcmask 941056
        %v2230 = vsel %vm2229, %v2214, %v2228
        %v2231 = vsel %vm559, %v2224, %v2225
        %v2232 = vsel %vm2229, %v2216, %v2231
        %v2233 = vsel %vm559, %v2225, %v2226
        %v2234 = vsel %vm2229, %v2218, %v2233
        %v2235 = vsel %vm559, %v2226, %v2227
        %v2236 = vsel %vm2229, %v2220, %v2235
        %v2237 = vsel %vm2229, %v2222, %v2227
        %2243 = vst [vmem:[#allocation3 + $0x3a8] sm:$0xff] %v2230
        %2244 = vst [vmem:[#allocation3 + $0x3b0] sm:$0xff] %v2232
        %2245 = vst [vmem:[#allocation3 + $0x3b8] sm:$0xff] %v2234
        %2246 = vst [vmem:[#allocation3 + $0x3c0] sm:$0xff] %v2236
        %2247 = vst [vmem:[#allocation3 + $0x3c8] sm:$0xf] %v2237
        %v2248 = vld [vmem:[#allocation2] sm:$0xf0]
        %v2249 = vld [vmem:[#allocation2 + $0x8] sm:$0xf0]
        %v2250 = vld [vmem:[#allocation2 + $0x10] sm:$0xf0]
        %v2251 = vld [vmem:[#allocation2 + $0x18] sm:$0xf0]
        %v2252 = vld [vmem:[#allocation2 + $0x20] sm:$0xf0]
        %v2253 = vld [vmem:[#allocation2 + $0x28] sm:$0xf0]
        %v2254 = vld [vmem:[#allocation2 + $0x30] sm:$0xf0]
        %v2255 = vld [vmem:[#allocation2 + $0x38] sm:$0xf0]
        %v2256 = vld [vmem:[#allocation2 + $0x40] sm:$0xf0]
        %v2257 = vld [vmem:[#allocation2 + $0x48] sm:$0xf0]
        %v2268 = vunpack.c.h.b16 %v2248
        %v2269 = vunpack.c.h.b16 %v2249
        %v2270 = vunpack.c.h.b16 %v2250
        %v2271 = vunpack.c.h.b16 %v2251
        %v2272 = vunpack.c.h.b16 %v2252
        %v2273 = vunpack.c.h.b16 %v2253
        %v2274 = vunpack.c.h.b16 %v2254
        %v2275 = vunpack.c.h.b16 %v2255
        %v2276 = vunpack.c.h.b16 %v2256
        %v2277 = vunpack.c.h.b16 %v2257
        %v2278 = vpack.c.b16 %v2269, %v2268
        %v2279 = vpack.c.b16 %v2271, %v2270
        %v2280 = vpack.c.b16 %v2273, %v2272
        %v2281 = vpack.c.b16 %v2275, %v2274
        %v2282 = vpack.c.b16 %v2277, %v2276
        %2283 = vrot.lane.b32.xlu0 %v2278, 115
        %v2284 = vpop.permute.xlu0 %2283
        %2285 = vrot.lane.b32.xlu0 %v2279, 115
        %v2286 = vpop.permute.xlu0 %2285
        %2287 = vrot.lane.b32.xlu0 %v2280, 115
        %v2288 = vpop.permute.xlu0 %2287
        %2289 = vrot.lane.b32.xlu0 %v2281, 115
        %v2290 = vpop.permute.xlu0 %2289
        %2291 = vrot.lane.b32.xlu0 %v2282, 115
        %v2292 = vpop.permute.xlu0 %2291
        %v2293 = vrot.slane %v2284, 4
        %v2294 = vrot.slane %v2286, 4
        %v2295 = vrot.slane %v2288, 4
        %v2296 = vrot.slane %v2290, 4
        %v2297 = vrot.slane %v2292, 4
        %v2298 = vsel %vm559, %v2293, %v2294
        %v2299 = vsel %vm2229, %v2284, %v2298
        %v2300 = vsel %vm559, %v2294, %v2295
        %v2301 = vsel %vm2229, %v2286, %v2300
        %v2302 = vsel %vm559, %v2295, %v2296
        %v2303 = vsel %vm2229, %v2288, %v2302
        %v2304 = vsel %vm559, %v2296, %v2297
        %v2305 = vsel %vm2229, %v2290, %v2304
        %v2306 = vsel %vm2229, %v2292, %v2297
        %2312 = vst [vmem:[#allocation3 + $0x3cc] sm:$0xff] %v2299
        %2313 = vst [vmem:[#allocation3 + $0x3d4] sm:$0xff] %v2301
        %2314 = vst [vmem:[#allocation3 + $0x3dc] sm:$0xff] %v2303
        %2315 = vst [vmem:[#allocation3 + $0x3e4] sm:$0xff] %v2305
        %2316 = vst [vmem:[#allocation3 + $0x3ec] sm:$0xf] %v2306
        %v2317 = vld [vmem:[#allocation2] sm:$0xf]
        %v2318 = vld [vmem:[#allocation2 + $0x8] sm:$0xf]
        %v2319 = vld [vmem:[#allocation2 + $0x10] sm:$0xf]
        %v2320 = vld [vmem:[#allocation2 + $0x18] sm:$0xf]
        %v2321 = vld [vmem:[#allocation2 + $0x20] sm:$0xf]
        %v2322 = vld [vmem:[#allocation2 + $0x28] sm:$0xf]
        %v2323 = vld [vmem:[#allocation2 + $0x30] sm:$0xf]
        %v2324 = vld [vmem:[#allocation2 + $0x38] sm:$0xf]
        %v2325 = vld [vmem:[#allocation2 + $0x40] sm:$0xf]
        %v2326 = vld [vmem:[#allocation2 + $0x48] sm:$0xf]
        %v2337 = vunpack.c.l.b16 %v2317
        %v2338 = vunpack.c.l.b16 %v2318
        %v2339 = vunpack.c.l.b16 %v2319
        %v2340 = vunpack.c.l.b16 %v2320
        %v2341 = vunpack.c.l.b16 %v2321
        %v2342 = vunpack.c.l.b16 %v2322
        %v2343 = vunpack.c.l.b16 %v2323
        %v2344 = vunpack.c.l.b16 %v2324
        %v2345 = vunpack.c.l.b16 %v2325
        %v2346 = vunpack.c.l.b16 %v2326
        %v2347 = vpack.c.b16 %v2338, %v2337
        %v2348 = vpack.c.b16 %v2340, %v2339
        %v2349 = vpack.c.b16 %v2342, %v2341
        %v2350 = vpack.c.b16 %v2344, %v2343
        %v2351 = vpack.c.b16 %v2346, %v2345
        %2352 = vrot.lane.b32.xlu0 %v2347, 114
        %v2353 = vpop.permute.xlu0 %2352
        %2354 = vrot.lane.b32.xlu0 %v2348, 114
        %v2355 = vpop.permute.xlu0 %2354
        %2356 = vrot.lane.b32.xlu0 %v2349, 114
        %v2357 = vpop.permute.xlu0 %2356
        %2358 = vrot.lane.b32.xlu0 %v2350, 114
        %v2359 = vpop.permute.xlu0 %2358
        %2360 = vrot.lane.b32.xlu0 %v2351, 114
        %v2361 = vpop.permute.xlu0 %2360
        %v2362 = vrot.slane %v2353, 4
        %v2363 = vrot.slane %v2355, 4
        %v2364 = vrot.slane %v2357, 4
        %v2365 = vrot.slane %v2359, 4
        %v2366 = vrot.slane %v2361, 4
        %v2367 = vsel %vm559, %v2362, %v2363
        %vm2368 = vcmask 932864
        %v2369 = vsel %vm2368, %v2353, %v2367
        %v2370 = vsel %vm559, %v2363, %v2364
        %v2371 = vsel %vm2368, %v2355, %v2370
        %v2372 = vsel %vm559, %v2364, %v2365
        %v2373 = vsel %vm2368, %v2357, %v2372
        %v2374 = vsel %vm559, %v2365, %v2366
        %v2375 = vsel %vm2368, %v2359, %v2374
        %v2376 = vsel %vm2368, %v2361, %v2366
        %2382 = vst [vmem:[#allocation3 + $0x3f0] sm:$0xff] %v2369
        %2383 = vst [vmem:[#allocation3 + $0x3f8] sm:$0xff] %v2371
        %2384 = vst [vmem:[#allocation3 + $0x400] sm:$0xff] %v2373
        %2385 = vst [vmem:[#allocation3 + $0x408] sm:$0xff] %v2375
        %2386 = vst [vmem:[#allocation3 + $0x410] sm:$0xf] %v2376
        %v2387 = vld [vmem:[#allocation2] sm:$0xf0]
        %v2388 = vld [vmem:[#allocation2 + $0x8] sm:$0xf0]
        %v2389 = vld [vmem:[#allocation2 + $0x10] sm:$0xf0]
        %v2390 = vld [vmem:[#allocation2 + $0x18] sm:$0xf0]
        %v2391 = vld [vmem:[#allocation2 + $0x20] sm:$0xf0]
        %v2392 = vld [vmem:[#allocation2 + $0x28] sm:$0xf0]
        %v2393 = vld [vmem:[#allocation2 + $0x30] sm:$0xf0]
        %v2394 = vld [vmem:[#allocation2 + $0x38] sm:$0xf0]
        %v2395 = vld [vmem:[#allocation2 + $0x40] sm:$0xf0]
        %v2396 = vld [vmem:[#allocation2 + $0x48] sm:$0xf0]
        %v2407 = vunpack.c.h.b16 %v2387
        %v2408 = vunpack.c.h.b16 %v2388
        %v2409 = vunpack.c.h.b16 %v2389
        %v2410 = vunpack.c.h.b16 %v2390
        %v2411 = vunpack.c.h.b16 %v2391
        %v2412 = vunpack.c.h.b16 %v2392
        %v2413 = vunpack.c.h.b16 %v2393
        %v2414 = vunpack.c.h.b16 %v2394
        %v2415 = vunpack.c.h.b16 %v2395
        %v2416 = vunpack.c.h.b16 %v2396
        %v2417 = vpack.c.b16 %v2408, %v2407
        %v2418 = vpack.c.b16 %v2410, %v2409
        %v2419 = vpack.c.b16 %v2412, %v2411
        %v2420 = vpack.c.b16 %v2414, %v2413
        %v2421 = vpack.c.b16 %v2416, %v2415
        %2422 = vrot.lane.b32.xlu0 %v2417, 114
        %v2423 = vpop.permute.xlu0 %2422
        %2424 = vrot.lane.b32.xlu0 %v2418, 114
        %v2425 = vpop.permute.xlu0 %2424
        %2426 = vrot.lane.b32.xlu0 %v2419, 114
        %v2427 = vpop.permute.xlu0 %2426
        %2428 = vrot.lane.b32.xlu0 %v2420, 114
        %v2429 = vpop.permute.xlu0 %2428
        %2430 = vrot.lane.b32.xlu0 %v2421, 114
        %v2431 = vpop.permute.xlu0 %2430
        %v2432 = vrot.slane %v2423, 4
        %v2433 = vrot.slane %v2425, 4
        %v2434 = vrot.slane %v2427, 4
        %v2435 = vrot.slane %v2429, 4
        %v2436 = vrot.slane %v2431, 4
        %v2437 = vsel %vm559, %v2432, %v2433
        %v2438 = vsel %vm2368, %v2423, %v2437
        %v2439 = vsel %vm559, %v2433, %v2434
        %v2440 = vsel %vm2368, %v2425, %v2439
        %v2441 = vsel %vm559, %v2434, %v2435
        %v2442 = vsel %vm2368, %v2427, %v2441
        %v2443 = vsel %vm559, %v2435, %v2436
        %v2444 = vsel %vm2368, %v2429, %v2443
        %v2445 = vsel %vm2368, %v2431, %v2436
        %2451 = vst [vmem:[#allocation3 + $0x414] sm:$0xff] %v2438
        %2452 = vst [vmem:[#allocation3 + $0x41c] sm:$0xff] %v2440
        %2453 = vst [vmem:[#allocation3 + $0x424] sm:$0xff] %v2442
        %2454 = vst [vmem:[#allocation3 + $0x42c] sm:$0xff] %v2444
        %2455 = vst [vmem:[#allocation3 + $0x434] sm:$0xf] %v2445
        %v2456 = vld [vmem:[#allocation2] sm:$0xf]
        %v2457 = vld [vmem:[#allocation2 + $0x8] sm:$0xf]
        %v2458 = vld [vmem:[#allocation2 + $0x10] sm:$0xf]
        %v2459 = vld [vmem:[#allocation2 + $0x18] sm:$0xf]
        %v2460 = vld [vmem:[#allocation2 + $0x20] sm:$0xf]
        %v2461 = vld [vmem:[#allocation2 + $0x28] sm:$0xf]
        %v2462 = vld [vmem:[#allocation2 + $0x30] sm:$0xf]
        %v2463 = vld [vmem:[#allocation2 + $0x38] sm:$0xf]
        %v2464 = vld [vmem:[#allocation2 + $0x40] sm:$0xf]
        %v2465 = vld [vmem:[#allocation2 + $0x48] sm:$0xf]
        %v2476 = vunpack.c.l.b16 %v2456
        %v2477 = vunpack.c.l.b16 %v2457
        %v2478 = vunpack.c.l.b16 %v2458
        %v2479 = vunpack.c.l.b16 %v2459
        %v2480 = vunpack.c.l.b16 %v2460
        %v2481 = vunpack.c.l.b16 %v2461
        %v2482 = vunpack.c.l.b16 %v2462
        %v2483 = vunpack.c.l.b16 %v2463
        %v2484 = vunpack.c.l.b16 %v2464
        %v2485 = vunpack.c.l.b16 %v2465
        %v2486 = vpack.c.b16 %v2477, %v2476
        %v2487 = vpack.c.b16 %v2479, %v2478
        %v2488 = vpack.c.b16 %v2481, %v2480
        %v2489 = vpack.c.b16 %v2483, %v2482
        %v2490 = vpack.c.b16 %v2485, %v2484
        %2491 = vrot.lane.b32.xlu0 %v2486, 113
        %v2492 = vpop.permute.xlu0 %2491
        %2493 = vrot.lane.b32.xlu0 %v2487, 113
        %v2494 = vpop.permute.xlu0 %2493
        %2495 = vrot.lane.b32.xlu0 %v2488, 113
        %v2496 = vpop.permute.xlu0 %2495
        %2497 = vrot.lane.b32.xlu0 %v2489, 113
        %v2498 = vpop.permute.xlu0 %2497
        %2499 = vrot.lane.b32.xlu0 %v2490, 113
        %v2500 = vpop.permute.xlu0 %2499
        %v2501 = vrot.slane %v2492, 4
        %v2502 = vrot.slane %v2494, 4
        %v2503 = vrot.slane %v2496, 4
        %v2504 = vrot.slane %v2498, 4
        %v2505 = vrot.slane %v2500, 4
        %v2506 = vsel %vm559, %v2501, %v2502
        %vm2507 = vcmask 924672
        %v2508 = vsel %vm2507, %v2492, %v2506
        %v2509 = vsel %vm559, %v2502, %v2503
        %v2510 = vsel %vm2507, %v2494, %v2509
        %v2511 = vsel %vm559, %v2503, %v2504
        %v2512 = vsel %vm2507, %v2496, %v2511
        %v2513 = vsel %vm559, %v2504, %v2505
        %v2514 = vsel %vm2507, %v2498, %v2513
        %v2515 = vsel %vm2507, %v2500, %v2505
        %2521 = vst [vmem:[#allocation3 + $0x438] sm:$0xff] %v2508
        %2522 = vst [vmem:[#allocation3 + $0x440] sm:$0xff] %v2510
        %2523 = vst [vmem:[#allocation3 + $0x448] sm:$0xff] %v2512
        %2524 = vst [vmem:[#allocation3 + $0x450] sm:$0xff] %v2514
        %2525 = vst [vmem:[#allocation3 + $0x458] sm:$0xf] %v2515
        %v2526 = vld [vmem:[#allocation2] sm:$0xf0]
        %v2527 = vld [vmem:[#allocation2 + $0x8] sm:$0xf0]
        %v2528 = vld [vmem:[#allocation2 + $0x10] sm:$0xf0]
        %v2529 = vld [vmem:[#allocation2 + $0x18] sm:$0xf0]
        %v2530 = vld [vmem:[#allocation2 + $0x20] sm:$0xf0]
        %v2531 = vld [vmem:[#allocation2 + $0x28] sm:$0xf0]
        %v2532 = vld [vmem:[#allocation2 + $0x30] sm:$0xf0]
        %v2533 = vld [vmem:[#allocation2 + $0x38] sm:$0xf0]
        %v2534 = vld [vmem:[#allocation2 + $0x40] sm:$0xf0]
        %v2535 = vld [vmem:[#allocation2 + $0x48] sm:$0xf0]
        %v2546 = vunpack.c.h.b16 %v2526
        %v2547 = vunpack.c.h.b16 %v2527
        %v2548 = vunpack.c.h.b16 %v2528
        %v2549 = vunpack.c.h.b16 %v2529
        %v2550 = vunpack.c.h.b16 %v2530
        %v2551 = vunpack.c.h.b16 %v2531
        %v2552 = vunpack.c.h.b16 %v2532
        %v2553 = vunpack.c.h.b16 %v2533
        %v2554 = vunpack.c.h.b16 %v2534
        %v2555 = vunpack.c.h.b16 %v2535
        %v2556 = vpack.c.b16 %v2547, %v2546
        %v2557 = vpack.c.b16 %v2549, %v2548
        %v2558 = vpack.c.b16 %v2551, %v2550
        %v2559 = vpack.c.b16 %v2553, %v2552
        %v2560 = vpack.c.b16 %v2555, %v2554
        %2561 = vrot.lane.b32.xlu0 %v2556, 113
        %v2562 = vpop.permute.xlu0 %2561
        %2563 = vrot.lane.b32.xlu0 %v2557, 113
        %v2564 = vpop.permute.xlu0 %2563
        %2565 = vrot.lane.b32.xlu0 %v2558, 113
        %v2566 = vpop.permute.xlu0 %2565
        %2567 = vrot.lane.b32.xlu0 %v2559, 113
        %v2568 = vpop.permute.xlu0 %2567
        %2569 = vrot.lane.b32.xlu0 %v2560, 113
        %v2570 = vpop.permute.xlu0 %2569
        %v2571 = vrot.slane %v2562, 4
        %v2572 = vrot.slane %v2564, 4
        %v2573 = vrot.slane %v2566, 4
        %v2574 = vrot.slane %v2568, 4
        %v2575 = vrot.slane %v2570, 4
        %v2576 = vsel %vm559, %v2571, %v2572
        %v2577 = vsel %vm2507, %v2562, %v2576
        %v2578 = vsel %vm559, %v2572, %v2573
        %v2579 = vsel %vm2507, %v2564, %v2578
        %v2580 = vsel %vm559, %v2573, %v2574
        %v2581 = vsel %vm2507, %v2566, %v2580
        %v2582 = vsel %vm559, %v2574, %v2575
        %v2583 = vsel %vm2507, %v2568, %v2582
        %v2584 = vsel %vm2507, %v2570, %v2575
        %2590 = vst [vmem:[#allocation3 + $0x45c] sm:$0xff] %v2577
        %2591 = vst [vmem:[#allocation3 + $0x464] sm:$0xff] %v2579
        %2592 = vst [vmem:[#allocation3 + $0x46c] sm:$0xff] %v2581
        %2593 = vst [vmem:[#allocation3 + $0x474] sm:$0xff] %v2583
        %2594 = vst [vmem:[#allocation3 + $0x47c] sm:$0xf] %v2584
        %v2595 = vld [vmem:[#allocation2] sm:$0xf]
        %v2596 = vld [vmem:[#allocation2 + $0x8] sm:$0xf]
        %v2597 = vld [vmem:[#allocation2 + $0x10] sm:$0xf]
        %v2598 = vld [vmem:[#allocation2 + $0x18] sm:$0xf]
        %v2599 = vld [vmem:[#allocation2 + $0x20] sm:$0xf]
        %v2600 = vld [vmem:[#allocation2 + $0x28] sm:$0xf]
        %v2601 = vld [vmem:[#allocation2 + $0x30] sm:$0xf]
        %v2602 = vld [vmem:[#allocation2 + $0x38] sm:$0xf]
        %v2603 = vld [vmem:[#allocation2 + $0x40] sm:$0xf]
        %v2604 = vld [vmem:[#allocation2 + $0x48] sm:$0xf]
        %v2615 = vunpack.c.l.b16 %v2595
        %v2616 = vunpack.c.l.b16 %v2596
        %v2617 = vunpack.c.l.b16 %v2597
        %v2618 = vunpack.c.l.b16 %v2598
        %v2619 = vunpack.c.l.b16 %v2599
        %v2620 = vunpack.c.l.b16 %v2600
        %v2621 = vunpack.c.l.b16 %v2601
        %v2622 = vunpack.c.l.b16 %v2602
        %v2623 = vunpack.c.l.b16 %v2603
        %v2624 = vunpack.c.l.b16 %v2604
        %v2625 = vpack.c.b16 %v2616, %v2615
        %v2626 = vpack.c.b16 %v2618, %v2617
        %v2627 = vpack.c.b16 %v2620, %v2619
        %v2628 = vpack.c.b16 %v2622, %v2621
        %v2629 = vpack.c.b16 %v2624, %v2623
        %2630 = vrot.lane.b32.xlu0 %v2625, 112
        %v2631 = vpop.permute.xlu0 %2630
        %2632 = vrot.lane.b32.xlu0 %v2626, 112
        %v2633 = vpop.permute.xlu0 %2632
        %2634 = vrot.lane.b32.xlu0 %v2627, 112
        %v2635 = vpop.permute.xlu0 %2634
        %2636 = vrot.lane.b32.xlu0 %v2628, 112
        %v2637 = vpop.permute.xlu0 %2636
        %2638 = vrot.lane.b32.xlu0 %v2629, 112
        %v2639 = vpop.permute.xlu0 %2638
        %v2640 = vrot.slane %v2631, 4
        %v2641 = vrot.slane %v2633, 4
        %v2642 = vrot.slane %v2635, 4
        %v2643 = vrot.slane %v2637, 4
        %v2644 = vrot.slane %v2639, 4
        %v2645 = vsel %vm559, %v2640, %v2641
        %vm2646 = vcmask 916480
        %v2647 = vsel %vm2646, %v2631, %v2645
        %v2648 = vsel %vm559, %v2641, %v2642
        %v2649 = vsel %vm2646, %v2633, %v2648
        %v2650 = vsel %vm559, %v2642, %v2643
        %v2651 = vsel %vm2646, %v2635, %v2650
        %v2652 = vsel %vm559, %v2643, %v2644
        %v2653 = vsel %vm2646, %v2637, %v2652
        %v2654 = vsel %vm2646, %v2639, %v2644
        %2660 = vst [vmem:[#allocation3 + $0x480] sm:$0xff] %v2647
        %2661 = vst [vmem:[#allocation3 + $0x488] sm:$0xff] %v2649
        %2662 = vst [vmem:[#allocation3 + $0x490] sm:$0xff] %v2651
        %2663 = vst [vmem:[#allocation3 + $0x498] sm:$0xff] %v2653
        %2664 = vst [vmem:[#allocation3 + $0x4a0] sm:$0xf] %v2654
        %v2665 = vld [vmem:[#allocation2] sm:$0xf0]
        %v2666 = vld [vmem:[#allocation2 + $0x8] sm:$0xf0]
        %v2667 = vld [vmem:[#allocation2 + $0x10] sm:$0xf0]
        %v2668 = vld [vmem:[#allocation2 + $0x18] sm:$0xf0]
        %v2669 = vld [vmem:[#allocation2 + $0x20] sm:$0xf0]
        %v2670 = vld [vmem:[#allocation2 + $0x28] sm:$0xf0]
        %v2671 = vld [vmem:[#allocation2 + $0x30] sm:$0xf0]
        %v2672 = vld [vmem:[#allocation2 + $0x38] sm:$0xf0]
        %v2673 = vld [vmem:[#allocation2 + $0x40] sm:$0xf0]
        %v2674 = vld [vmem:[#allocation2 + $0x48] sm:$0xf0]
        %v2685 = vunpack.c.h.b16 %v2665
        %v2686 = vunpack.c.h.b16 %v2666
        %v2687 = vunpack.c.h.b16 %v2667
        %v2688 = vunpack.c.h.b16 %v2668
        %v2689 = vunpack.c.h.b16 %v2669
        %v2690 = vunpack.c.h.b16 %v2670
        %v2691 = vunpack.c.h.b16 %v2671
        %v2692 = vunpack.c.h.b16 %v2672
        %v2693 = vunpack.c.h.b16 %v2673
        %v2694 = vunpack.c.h.b16 %v2674
        %v2695 = vpack.c.b16 %v2686, %v2685
        %v2696 = vpack.c.b16 %v2688, %v2687
        %v2697 = vpack.c.b16 %v2690, %v2689
        %v2698 = vpack.c.b16 %v2692, %v2691
        %v2699 = vpack.c.b16 %v2694, %v2693
        %2700 = vrot.lane.b32.xlu0 %v2695, 112
        %v2701 = vpop.permute.xlu0 %2700
        %2702 = vrot.lane.b32.xlu0 %v2696, 112
        %v2703 = vpop.permute.xlu0 %2702
        %2704 = vrot.lane.b32.xlu0 %v2697, 112
        %v2705 = vpop.permute.xlu0 %2704
        %2706 = vrot.lane.b32.xlu0 %v2698, 112
        %v2707 = vpop.permute.xlu0 %2706
        %2708 = vrot.lane.b32.xlu0 %v2699, 112
        %v2709 = vpop.permute.xlu0 %2708
        %v2710 = vrot.slane %v2701, 4
        %v2711 = vrot.slane %v2703, 4
        %v2712 = vrot.slane %v2705, 4
        %v2713 = vrot.slane %v2707, 4
        %v2714 = vrot.slane %v2709, 4
        %v2715 = vsel %vm559, %v2710, %v2711
        %v2716 = vsel %vm2646, %v2701, %v2715
        %v2717 = vsel %vm559, %v2711, %v2712
        %v2718 = vsel %vm2646, %v2703, %v2717
        %v2719 = vsel %vm559, %v2712, %v2713
        %v2720 = vsel %vm2646, %v2705, %v2719
        %v2721 = vsel %vm559, %v2713, %v2714
        %v2722 = vsel %vm2646, %v2707, %v2721
        %v2723 = vsel %vm2646, %v2709, %v2714
        %2729 = vst [vmem:[#allocation3 + $0x4a4] sm:$0xff] %v2716
        %2730 = vst [vmem:[#allocation3 + $0x4ac] sm:$0xff] %v2718
        %2731 = vst [vmem:[#allocation3 + $0x4b4] sm:$0xff] %v2720
        %2732 = vst [vmem:[#allocation3 + $0x4bc] sm:$0xff] %v2722
        %2733 = vst [vmem:[#allocation3 + $0x4c4] sm:$0xf] %v2723
        %v2734 = vld [vmem:[#allocation2] sm:$0xf]
        %v2735 = vld [vmem:[#allocation2 + $0x8] sm:$0xf]
        %v2736 = vld [vmem:[#allocation2 + $0x10] sm:$0xf]
        %v2737 = vld [vmem:[#allocation2 + $0x18] sm:$0xf]
        %v2738 = vld [vmem:[#allocation2 + $0x20] sm:$0xf]
        %v2739 = vld [vmem:[#allocation2 + $0x28] sm:$0xf]
        %v2740 = vld [vmem:[#allocation2 + $0x30] sm:$0xf]
        %v2741 = vld [vmem:[#allocation2 + $0x38] sm:$0xf]
        %v2742 = vld [vmem:[#allocation2 + $0x40] sm:$0xf]
        %v2743 = vld [vmem:[#allocation2 + $0x48] sm:$0xf]
        %v2754 = vunpack.c.l.b16 %v2734
        %v2755 = vunpack.c.l.b16 %v2735
        %v2756 = vunpack.c.l.b16 %v2736
        %v2757 = vunpack.c.l.b16 %v2737
        %v2758 = vunpack.c.l.b16 %v2738
        %v2759 = vunpack.c.l.b16 %v2739
        %v2760 = vunpack.c.l.b16 %v2740
        %v2761 = vunpack.c.l.b16 %v2741
        %v2762 = vunpack.c.l.b16 %v2742
        %v2763 = vunpack.c.l.b16 %v2743
        %v2764 = vpack.c.b16 %v2755, %v2754
        %v2765 = vpack.c.b16 %v2757, %v2756
        %v2766 = vpack.c.b16 %v2759, %v2758
        %v2767 = vpack.c.b16 %v2761, %v2760
        %v2768 = vpack.c.b16 %v2763, %v2762
        %2769 = vrot.lane.b32.xlu0 %v2764, 111
        %v2770 = vpop.permute.xlu0 %2769
        %2771 = vrot.lane.b32.xlu0 %v2765, 111
        %v2772 = vpop.permute.xlu0 %2771
        %2773 = vrot.lane.b32.xlu0 %v2766, 111
        %v2774 = vpop.permute.xlu0 %2773
        %2775 = vrot.lane.b32.xlu0 %v2767, 111
        %v2776 = vpop.permute.xlu0 %2775
        %2777 = vrot.lane.b32.xlu0 %v2768, 111
        %v2778 = vpop.permute.xlu0 %2777
        %v2779 = vrot.slane %v2770, 4
        %v2780 = vrot.slane %v2772, 4
        %v2781 = vrot.slane %v2774, 4
        %v2782 = vrot.slane %v2776, 4
        %v2783 = vrot.slane %v2778, 4
        %v2784 = vsel %vm559, %v2779, %v2780
        %vm2785 = vcmask 908288
        %v2786 = vsel %vm2785, %v2770, %v2784
        %v2787 = vsel %vm559, %v2780, %v2781
        %v2788 = vsel %vm2785, %v2772, %v2787
        %v2789 = vsel %vm559, %v2781, %v2782
        %v2790 = vsel %vm2785, %v2774, %v2789
        %v2791 = vsel %vm559, %v2782, %v2783
        %v2792 = vsel %vm2785, %v2776, %v2791
        %v2793 = vsel %vm2785, %v2778, %v2783
        %2799 = vst [vmem:[#allocation3 + $0x4c8] sm:$0xff] %v2786
        %2800 = vst [vmem:[#allocation3 + $0x4d0] sm:$0xff] %v2788
        %2801 = vst [vmem:[#allocation3 + $0x4d8] sm:$0xff] %v2790
        %2802 = vst [vmem:[#allocation3 + $0x4e0] sm:$0xff] %v2792
        %2803 = vst [vmem:[#allocation3 + $0x4e8] sm:$0xf] %v2793
        %v2804 = vld [vmem:[#allocation2] sm:$0xf0]
        %v2805 = vld [vmem:[#allocation2 + $0x8] sm:$0xf0]
        %v2806 = vld [vmem:[#allocation2 + $0x10] sm:$0xf0]
        %v2807 = vld [vmem:[#allocation2 + $0x18] sm:$0xf0]
        %v2808 = vld [vmem:[#allocation2 + $0x20] sm:$0xf0]
        %v2809 = vld [vmem:[#allocation2 + $0x28] sm:$0xf0]
        %v2810 = vld [vmem:[#allocation2 + $0x30] sm:$0xf0]
        %v2811 = vld [vmem:[#allocation2 + $0x38] sm:$0xf0]
        %v2812 = vld [vmem:[#allocation2 + $0x40] sm:$0xf0]
        %v2813 = vld [vmem:[#allocation2 + $0x48] sm:$0xf0]
        %v2824 = vunpack.c.h.b16 %v2804
        %v2825 = vunpack.c.h.b16 %v2805
        %v2826 = vunpack.c.h.b16 %v2806
        %v2827 = vunpack.c.h.b16 %v2807
        %v2828 = vunpack.c.h.b16 %v2808
        %v2829 = vunpack.c.h.b16 %v2809
        %v2830 = vunpack.c.h.b16 %v2810
        %v2831 = vunpack.c.h.b16 %v2811
        %v2832 = vunpack.c.h.b16 %v2812
        %v2833 = vunpack.c.h.b16 %v2813
        %v2834 = vpack.c.b16 %v2825, %v2824
        %v2835 = vpack.c.b16 %v2827, %v2826
        %v2836 = vpack.c.b16 %v2829, %v2828
        %v2837 = vpack.c.b16 %v2831, %v2830
        %v2838 = vpack.c.b16 %v2833, %v2832
        %2839 = vrot.lane.b32.xlu0 %v2834, 111
        %v2840 = vpop.permute.xlu0 %2839
        %2841 = vrot.lane.b32.xlu0 %v2835, 111
        %v2842 = vpop.permute.xlu0 %2841
        %2843 = vrot.lane.b32.xlu0 %v2836, 111
        %v2844 = vpop.permute.xlu0 %2843
        %2845 = vrot.lane.b32.xlu0 %v2837, 111
        %v2846 = vpop.permute.xlu0 %2845
        %2847 = vrot.lane.b32.xlu0 %v2838, 111
        %v2848 = vpop.permute.xlu0 %2847
        %v2849 = vrot.slane %v2840, 4
        %v2850 = vrot.slane %v2842, 4
        %v2851 = vrot.slane %v2844, 4
        %v2852 = vrot.slane %v2846, 4
        %v2853 = vrot.slane %v2848, 4
        %v2854 = vsel %vm559, %v2849, %v2850
        %v2855 = vsel %vm2785, %v2840, %v2854
        %v2856 = vsel %vm559, %v2850, %v2851
        %v2857 = vsel %vm2785, %v2842, %v2856
        %v2858 = vsel %vm559, %v2851, %v2852
        %v2859 = vsel %vm2785, %v2844, %v2858
        %v2860 = vsel %vm559, %v2852, %v2853
        %v2861 = vsel %vm2785, %v2846, %v2860
        %v2862 = vsel %vm2785, %v2848, %v2853
        %2868 = vst [vmem:[#allocation3 + $0x4ec] sm:$0xff] %v2855
        %2869 = vst [vmem:[#allocation3 + $0x4f4] sm:$0xff] %v2857
        %2870 = vst [vmem:[#allocation3 + $0x4fc] sm:$0xff] %v2859
        %2871 = vst [vmem:[#allocation3 + $0x504] sm:$0xff] %v2861
        %2872 = vst [vmem:[#allocation3 + $0x50c] sm:$0xf] %v2862
        %v2873 = vld [vmem:[#allocation2] sm:$0xf]
        %v2874 = vld [vmem:[#allocation2 + $0x8] sm:$0xf]
        %v2875 = vld [vmem:[#allocation2 + $0x10] sm:$0xf]
        %v2876 = vld [vmem:[#allocation2 + $0x18] sm:$0xf]
        %v2877 = vld [vmem:[#allocation2 + $0x20] sm:$0xf]
        %v2878 = vld [vmem:[#allocation2 + $0x28] sm:$0xf]
        %v2879 = vld [vmem:[#allocation2 + $0x30] sm:$0xf]
        %v2880 = vld [vmem:[#allocation2 + $0x38] sm:$0xf]
        %v2881 = vld [vmem:[#allocation2 + $0x40] sm:$0xf]
        %v2882 = vld [vmem:[#allocation2 + $0x48] sm:$0xf]
        %v2893 = vunpack.c.l.b16 %v2873
        %v2894 = vunpack.c.l.b16 %v2874
        %v2895 = vunpack.c.l.b16 %v2875
        %v2896 = vunpack.c.l.b16 %v2876
        %v2897 = vunpack.c.l.b16 %v2877
        %v2898 = vunpack.c.l.b16 %v2878
        %v2899 = vunpack.c.l.b16 %v2879
        %v2900 = vunpack.c.l.b16 %v2880
        %v2901 = vunpack.c.l.b16 %v2881
        %v2902 = vunpack.c.l.b16 %v2882
        %v2903 = vpack.c.b16 %v2894, %v2893
        %v2904 = vpack.c.b16 %v2896, %v2895
        %v2905 = vpack.c.b16 %v2898, %v2897
        %v2906 = vpack.c.b16 %v2900, %v2899
        %v2907 = vpack.c.b16 %v2902, %v2901
        %2908 = vrot.lane.b32.xlu0 %v2903, 110
        %v2909 = vpop.permute.xlu0 %2908
        %2910 = vrot.lane.b32.xlu0 %v2904, 110
        %v2911 = vpop.permute.xlu0 %2910
        %2912 = vrot.lane.b32.xlu0 %v2905, 110
        %v2913 = vpop.permute.xlu0 %2912
        %2914 = vrot.lane.b32.xlu0 %v2906, 110
        %v2915 = vpop.permute.xlu0 %2914
        %2916 = vrot.lane.b32.xlu0 %v2907, 110
        %v2917 = vpop.permute.xlu0 %2916
        %v2918 = vrot.slane %v2909, 4
        %v2919 = vrot.slane %v2911, 4
        %v2920 = vrot.slane %v2913, 4
        %v2921 = vrot.slane %v2915, 4
        %v2922 = vrot.slane %v2917, 4
        %v2923 = vsel %vm559, %v2918, %v2919
        %vm2924 = vcmask 900096
        %v2925 = vsel %vm2924, %v2909, %v2923
        %v2926 = vsel %vm559, %v2919, %v2920
        %v2927 = vsel %vm2924, %v2911, %v2926
        %v2928 = vsel %vm559, %v2920, %v2921
        %v2929 = vsel %vm2924, %v2913, %v2928
        %v2930 = vsel %vm559, %v2921, %v2922
        %v2931 = vsel %vm2924, %v2915, %v2930
        %v2932 = vsel %vm2924, %v2917, %v2922
        %2938 = vst [vmem:[#allocation3 + $0x510] sm:$0xff] %v2925
        %2939 = vst [vmem:[#allocation3 + $0x518] sm:$0xff] %v2927
        %2940 = vst [vmem:[#allocation3 + $0x520] sm:$0xff] %v2929
        %2941 = vst [vmem:[#allocation3 + $0x528] sm:$0xff] %v2931
        %2942 = vst [vmem:[#allocation3 + $0x530] sm:$0xf] %v2932
        %v2943 = vld [vmem:[#allocation2] sm:$0xf0]
        %v2944 = vld [vmem:[#allocation2 + $0x8] sm:$0xf0]
        %v2945 = vld [vmem:[#allocation2 + $0x10] sm:$0xf0]
        %v2946 = vld [vmem:[#allocation2 + $0x18] sm:$0xf0]
        %v2947 = vld [vmem:[#allocation2 + $0x20] sm:$0xf0]
        %v2948 = vld [vmem:[#allocation2 + $0x28] sm:$0xf0]
        %v2949 = vld [vmem:[#allocation2 + $0x30] sm:$0xf0]
        %v2950 = vld [vmem:[#allocation2 + $0x38] sm:$0xf0]
        %v2951 = vld [vmem:[#allocation2 + $0x40] sm:$0xf0]
        %v2952 = vld [vmem:[#allocation2 + $0x48] sm:$0xf0]
        %v2963 = vunpack.c.h.b16 %v2943
        %v2964 = vunpack.c.h.b16 %v2944
        %v2965 = vunpack.c.h.b16 %v2945
        %v2966 = vunpack.c.h.b16 %v2946
        %v2967 = vunpack.c.h.b16 %v2947
        %v2968 = vunpack.c.h.b16 %v2948
        %v2969 = vunpack.c.h.b16 %v2949
        %v2970 = vunpack.c.h.b16 %v2950
        %v2971 = vunpack.c.h.b16 %v2951
        %v2972 = vunpack.c.h.b16 %v2952
        %v2973 = vpack.c.b16 %v2964, %v2963
        %v2974 = vpack.c.b16 %v2966, %v2965
        %v2975 = vpack.c.b16 %v2968, %v2967
        %v2976 = vpack.c.b16 %v2970, %v2969
        %v2977 = vpack.c.b16 %v2972, %v2971
        %2978 = vrot.lane.b32.xlu0 %v2973, 110
        %v2979 = vpop.permute.xlu0 %2978
        %2980 = vrot.lane.b32.xlu0 %v2974, 110
        %v2981 = vpop.permute.xlu0 %2980
        %2982 = vrot.lane.b32.xlu0 %v2975, 110
        %v2983 = vpop.permute.xlu0 %2982
        %2984 = vrot.lane.b32.xlu0 %v2976, 110
        %v2985 = vpop.permute.xlu0 %2984
        %2986 = vrot.lane.b32.xlu0 %v2977, 110
        %v2987 = vpop.permute.xlu0 %2986
        %v2988 = vrot.slane %v2979, 4
        %v2989 = vrot.slane %v2981, 4
        %v2990 = vrot.slane %v2983, 4
        %v2991 = vrot.slane %v2985, 4
        %v2992 = vrot.slane %v2987, 4
        %v2993 = vsel %vm559, %v2988, %v2989
        %v2994 = vsel %vm2924, %v2979, %v2993
        %v2995 = vsel %vm559, %v2989, %v2990
        %v2996 = vsel %vm2924, %v2981, %v2995
        %v2997 = vsel %vm559, %v2990, %v2991
        %v2998 = vsel %vm2924, %v2983, %v2997
        %v2999 = vsel %vm559, %v2991, %v2992
        %v3000 = vsel %vm2924, %v2985, %v2999
        %v3001 = vsel %vm2924, %v2987, %v2992
        %3007 = vst [vmem:[#allocation3 + $0x534] sm:$0xff] %v2994
        %3008 = vst [vmem:[#allocation3 + $0x53c] sm:$0xff] %v2996
        %3009 = vst [vmem:[#allocation3 + $0x544] sm:$0xff] %v2998
        %3010 = vst [vmem:[#allocation3 + $0x54c] sm:$0xff] %v3000
        %3011 = vst [vmem:[#allocation3 + $0x554] sm:$0xf] %v3001
        %v3012 = vld [vmem:[#allocation2] sm:$0xf]
        %v3013 = vld [vmem:[#allocation2 + $0x8] sm:$0xf]
        %v3014 = vld [vmem:[#allocation2 + $0x10] sm:$0xf]
        %v3015 = vld [vmem:[#allocation2 + $0x18] sm:$0xf]
        %v3016 = vld [vmem:[#allocation2 + $0x20] sm:$0xf]
        %v3017 = vld [vmem:[#allocation2 + $0x28] sm:$0xf]
        %v3018 = vld [vmem:[#allocation2 + $0x30] sm:$0xf]
        %v3019 = vld [vmem:[#allocation2 + $0x38] sm:$0xf]
        %v3020 = vld [vmem:[#allocation2 + $0x40] sm:$0xf]
        %v3021 = vld [vmem:[#allocation2 + $0x48] sm:$0xf]
        %v3032 = vunpack.c.l.b16 %v3012
        %v3033 = vunpack.c.l.b16 %v3013
        %v3034 = vunpack.c.l.b16 %v3014
        %v3035 = vunpack.c.l.b16 %v3015
        %v3036 = vunpack.c.l.b16 %v3016
        %v3037 = vunpack.c.l.b16 %v3017
        %v3038 = vunpack.c.l.b16 %v3018
        %v3039 = vunpack.c.l.b16 %v3019
        %v3040 = vunpack.c.l.b16 %v3020
        %v3041 = vunpack.c.l.b16 %v3021
        %v3042 = vpack.c.b16 %v3033, %v3032
        %v3043 = vpack.c.b16 %v3035, %v3034
        %v3044 = vpack.c.b16 %v3037, %v3036
        %v3045 = vpack.c.b16 %v3039, %v3038
        %v3046 = vpack.c.b16 %v3041, %v3040
        %3047 = vrot.lane.b32.xlu0 %v3042, 109
        %v3048 = vpop.permute.xlu0 %3047
        %3049 = vrot.lane.b32.xlu0 %v3043, 109
        %v3050 = vpop.permute.xlu0 %3049
        %3051 = vrot.lane.b32.xlu0 %v3044, 109
        %v3052 = vpop.permute.xlu0 %3051
        %3053 = vrot.lane.b32.xlu0 %v3045, 109
        %v3054 = vpop.permute.xlu0 %3053
        %3055 = vrot.lane.b32.xlu0 %v3046, 109
        %v3056 = vpop.permute.xlu0 %3055
        %v3057 = vrot.slane %v3048, 4
        %v3058 = vrot.slane %v3050, 4
        %v3059 = vrot.slane %v3052, 4
        %v3060 = vrot.slane %v3054, 4
        %v3061 = vrot.slane %v3056, 4
        %v3062 = vsel %vm559, %v3057, %v3058
        %vm3063 = vcmask 891904
        %v3064 = vsel %vm3063, %v3048, %v3062
        %v3065 = vsel %vm559, %v3058, %v3059
        %v3066 = vsel %vm3063, %v3050, %v3065
        %v3067 = vsel %vm559, %v3059, %v3060
        %v3068 = vsel %vm3063, %v3052, %v3067
        %v3069 = vsel %vm559, %v3060, %v3061
        %v3070 = vsel %vm3063, %v3054, %v3069
        %v3071 = vsel %vm3063, %v3056, %v3061
        %3077 = vst [vmem:[#allocation3 + $0x558] sm:$0xff] %v3064
        %3078 = vst [vmem:[#allocation3 + $0x560] sm:$0xff] %v3066
        %3079 = vst [vmem:[#allocation3 + $0x568] sm:$0xff] %v3068
        %3080 = vst [vmem:[#allocation3 + $0x570] sm:$0xff] %v3070
        %3081 = vst [vmem:[#allocation3 + $0x578] sm:$0xf] %v3071
        %v3082 = vld [vmem:[#allocation2] sm:$0xf0]
        %v3083 = vld [vmem:[#allocation2 + $0x8] sm:$0xf0]
        %v3084 = vld [vmem:[#allocation2 + $0x10] sm:$0xf0]
        %v3085 = vld [vmem:[#allocation2 + $0x18] sm:$0xf0]
        %v3086 = vld [vmem:[#allocation2 + $0x20] sm:$0xf0]
        %v3087 = vld [vmem:[#allocation2 + $0x28] sm:$0xf0]
        %v3088 = vld [vmem:[#allocation2 + $0x30] sm:$0xf0]
        %v3089 = vld [vmem:[#allocation2 + $0x38] sm:$0xf0]
        %v3090 = vld [vmem:[#allocation2 + $0x40] sm:$0xf0]
        %v3091 = vld [vmem:[#allocation2 + $0x48] sm:$0xf0]
        %v3102 = vunpack.c.h.b16 %v3082
        %v3103 = vunpack.c.h.b16 %v3083
        %v3104 = vunpack.c.h.b16 %v3084
        %v3105 = vunpack.c.h.b16 %v3085
        %v3106 = vunpack.c.h.b16 %v3086
        %v3107 = vunpack.c.h.b16 %v3087
        %v3108 = vunpack.c.h.b16 %v3088
        %v3109 = vunpack.c.h.b16 %v3089
        %v3110 = vunpack.c.h.b16 %v3090
        %v3111 = vunpack.c.h.b16 %v3091
        %v3112 = vpack.c.b16 %v3103, %v3102
        %v3113 = vpack.c.b16 %v3105, %v3104
        %v3114 = vpack.c.b16 %v3107, %v3106
        %v3115 = vpack.c.b16 %v3109, %v3108
        %v3116 = vpack.c.b16 %v3111, %v3110
        %3117 = vrot.lane.b32.xlu0 %v3112, 109
        %v3118 = vpop.permute.xlu0 %3117
        %3119 = vrot.lane.b32.xlu0 %v3113, 109
        %v3120 = vpop.permute.xlu0 %3119
        %3121 = vrot.lane.b32.xlu0 %v3114, 109
        %v3122 = vpop.permute.xlu0 %3121
        %3123 = vrot.lane.b32.xlu0 %v3115, 109
        %v3124 = vpop.permute.xlu0 %3123
        %3125 = vrot.lane.b32.xlu0 %v3116, 109
        %v3126 = vpop.permute.xlu0 %3125
        %v3127 = vrot.slane %v3118, 4
        %v3128 = vrot.slane %v3120, 4
        %v3129 = vrot.slane %v3122, 4
        %v3130 = vrot.slane %v3124, 4
        %v3131 = vrot.slane %v3126, 4
        %v3132 = vsel %vm559, %v3127, %v3128
        %v3133 = vsel %vm3063, %v3118, %v3132
        %v3134 = vsel %vm559, %v3128, %v3129
        %v3135 = vsel %vm3063, %v3120, %v3134
        %v3136 = vsel %vm559, %v3129, %v3130
        %v3137 = vsel %vm3063, %v3122, %v3136
        %v3138 = vsel %vm559, %v3130, %v3131
        %v3139 = vsel %vm3063, %v3124, %v3138
        %v3140 = vsel %vm3063, %v3126, %v3131
        %3146 = vst [vmem:[#allocation3 + $0x57c] sm:$0xff] %v3133
        %3147 = vst [vmem:[#allocation3 + $0x584] sm:$0xff] %v3135
        %3148 = vst [vmem:[#allocation3 + $0x58c] sm:$0xff] %v3137
        %3149 = vst [vmem:[#allocation3 + $0x594] sm:$0xff] %v3139
        %3150 = vst [vmem:[#allocation3 + $0x59c] sm:$0xf] %v3140
        %v3151 = vld [vmem:[#allocation2] sm:$0xf]
        %v3152 = vld [vmem:[#allocation2 + $0x8] sm:$0xf]
        %v3153 = vld [vmem:[#allocation2 + $0x10] sm:$0xf]
        %v3154 = vld [vmem:[#allocation2 + $0x18] sm:$0xf]
        %v3155 = vld [vmem:[#allocation2 + $0x20] sm:$0xf]
        %v3156 = vld [vmem:[#allocation2 + $0x28] sm:$0xf]
        %v3157 = vld [vmem:[#allocation2 + $0x30] sm:$0xf]
        %v3158 = vld [vmem:[#allocation2 + $0x38] sm:$0xf]
        %v3159 = vld [vmem:[#allocation2 + $0x40] sm:$0xf]
        %v3160 = vld [vmem:[#allocation2 + $0x48] sm:$0xf]
        %v3171 = vunpack.c.l.b16 %v3151
        %v3172 = vunpack.c.l.b16 %v3152
        %v3173 = vunpack.c.l.b16 %v3153
        %v3174 = vunpack.c.l.b16 %v3154
        %v3175 = vunpack.c.l.b16 %v3155
        %v3176 = vunpack.c.l.b16 %v3156
        %v3177 = vunpack.c.l.b16 %v3157
        %v3178 = vunpack.c.l.b16 %v3158
        %v3179 = vunpack.c.l.b16 %v3159
        %v3180 = vunpack.c.l.b16 %v3160
        %v3181 = vpack.c.b16 %v3172, %v3171
        %v3182 = vpack.c.b16 %v3174, %v3173
        %v3183 = vpack.c.b16 %v3176, %v3175
        %v3184 = vpack.c.b16 %v3178, %v3177
        %v3185 = vpack.c.b16 %v3180, %v3179
        %3186 = vrot.lane.b32.xlu0 %v3181, 108
        %v3187 = vpop.permute.xlu0 %3186
        %3188 = vrot.lane.b32.xlu0 %v3182, 108
        %v3189 = vpop.permute.xlu0 %3188
        %3190 = vrot.lane.b32.xlu0 %v3183, 108
        %v3191 = vpop.permute.xlu0 %3190
        %3192 = vrot.lane.b32.xlu0 %v3184, 108
        %v3193 = vpop.permute.xlu0 %3192
        %3194 = vrot.lane.b32.xlu0 %v3185, 108
        %v3195 = vpop.permute.xlu0 %3194
        %v3196 = vrot.slane %v3187, 4
        %v3197 = vrot.slane %v3189, 4
        %v3198 = vrot.slane %v3191, 4
        %v3199 = vrot.slane %v3193, 4
        %v3200 = vrot.slane %v3195, 4
        %v3201 = vsel %vm559, %v3196, %v3197
        %vm3202 = vcmask 883712
        %v3203 = vsel %vm3202, %v3187, %v3201
        %v3204 = vsel %vm559, %v3197, %v3198
        %v3205 = vsel %vm3202, %v3189, %v3204
        %v3206 = vsel %vm559, %v3198, %v3199
        %v3207 = vsel %vm3202, %v3191, %v3206
        %v3208 = vsel %vm559, %v3199, %v3200
        %v3209 = vsel %vm3202, %v3193, %v3208
        %v3210 = vsel %vm3202, %v3195, %v3200
        %3216 = vst [vmem:[#allocation3 + $0x5a0] sm:$0xff] %v3203
        %3217 = vst [vmem:[#allocation3 + $0x5a8] sm:$0xff] %v3205
        %3218 = vst [vmem:[#allocation3 + $0x5b0] sm:$0xff] %v3207
        %3219 = vst [vmem:[#allocation3 + $0x5b8] sm:$0xff] %v3209
        %3220 = vst [vmem:[#allocation3 + $0x5c0] sm:$0xf] %v3210
        %v3221 = vld [vmem:[%s2] sm:$0xff]
        %v3222 = vld [vmem:[%s2 + $0x8] sm:$0xf]
        %v3223 = vld [vmem:[#allocation3] sm:$0xff]
        %v3224 = vld [vmem:[#allocation3 + $0x8] sm:$0xff]
        %v3225 = vld [vmem:[#allocation3 + $0x10] sm:$0xff]
        %v3226 = vld [vmem:[#allocation3 + $0x18] sm:$0xff]
        %v3227 = vld [vmem:[#allocation3 + $0x20] sm:$0xf]
        %v3228 = vld [vmem:[#allocation3 + $0x24] sm:$0xff]
        %v3229 = vld [vmem:[#allocation3 + $0x2c] sm:$0xff]
        %v3230 = vld [vmem:[#allocation3 + $0x34] sm:$0xff]
        %v3231 = vld [vmem:[#allocation3 + $0x3c] sm:$0xff]
        %v3232 = vld [vmem:[#allocation3 + $0x44] sm:$0xf]
        %v3233 = vld [vmem:[#allocation3 + $0x48] sm:$0xff]
        %v3234 = vld [vmem:[#allocation3 + $0x50] sm:$0xff]
        %v3235 = vld [vmem:[#allocation3 + $0x58] sm:$0xff]
        %v3236 = vld [vmem:[#allocation3 + $0x60] sm:$0xff]
        %v3237 = vld [vmem:[#allocation3 + $0x68] sm:$0xf]
        %v3238 = vld [vmem:[#allocation3 + $0x6c] sm:$0xff]
        %v3239 = vld [vmem:[#allocation3 + $0x74] sm:$0xff]
        %v3240 = vld [vmem:[#allocation3 + $0x7c] sm:$0xff]
        %v3241 = vld [vmem:[#allocation3 + $0x84] sm:$0xff]
        %v3242 = vld [vmem:[#allocation3 + $0x8c] sm:$0xf]
        %v3243 = vld [vmem:[#allocation3 + $0x90] sm:$0xff]
        %v3244 = vld [vmem:[#allocation3 + $0x98] sm:$0xff]
        %v3245 = vld [vmem:[#allocation3 + $0xa0] sm:$0xff]
        %v3246 = vld [vmem:[#allocation3 + $0xa8] sm:$0xff]
        %v3247 = vld [vmem:[#allocation3 + $0xb0] sm:$0xf]
        %v3248 = vld [vmem:[#allocation3 + $0xb4] sm:$0xff]
        %v3249 = vld [vmem:[#allocation3 + $0xbc] sm:$0xff]
        %v3250 = vld [vmem:[#allocation3 + $0xc4] sm:$0xff]
        %v3251 = vld [vmem:[#allocation3 + $0xcc] sm:$0xff]
        %v3252 = vld [vmem:[#allocation3 + $0xd4] sm:$0xf]
        %v3253 = vld [vmem:[#allocation3 + $0xd8] sm:$0xff]
        %v3254 = vld [vmem:[#allocation3 + $0xe0] sm:$0xff]
        %v3255 = vld [vmem:[#allocation3 + $0xe8] sm:$0xff]
        %v3256 = vld [vmem:[#allocation3 + $0xf0] sm:$0xff]
        %v3257 = vld [vmem:[#allocation3 + $0xf8] sm:$0xf]
        %v3258 = vld [vmem:[#allocation3 + $0xfc] sm:$0xff]
        %v3259 = vld [vmem:[#allocation3 + $0x104] sm:$0xff]
        %v3260 = vld [vmem:[#allocation3 + $0x10c] sm:$0xff]
        %v3261 = vld [vmem:[#allocation3 + $0x114] sm:$0xff]
        %v3262 = vld [vmem:[#allocation3 + $0x11c] sm:$0xf]
        %v3263 = vld [vmem:[#allocation3 + $0x120] sm:$0xff]
        %v3264 = vld [vmem:[#allocation3 + $0x128] sm:$0xff]
        %v3265 = vld [vmem:[#allocation3 + $0x130] sm:$0xff]
        %v3266 = vld [vmem:[#allocation3 + $0x138] sm:$0xff]
        %v3267 = vld [vmem:[#allocation3 + $0x140] sm:$0xf]
        %v3268 = vld [vmem:[#allocation3 + $0x144] sm:$0xff]
        %v3269 = vld [vmem:[#allocation3 + $0x14c] sm:$0xff]
        %v3270 = vld [vmem:[#allocation3 + $0x154] sm:$0xff]
        %v3271 = vld [vmem:[#allocation3 + $0x15c] sm:$0xff]
        %v3272 = vld [vmem:[#allocation3 + $0x164] sm:$0xf]
        %v3273 = vld [vmem:[#allocation3 + $0x168] sm:$0xff]
        %v3274 = vld [vmem:[#allocation3 + $0x170] sm:$0xff]
        %v3275 = vld [vmem:[#allocation3 + $0x178] sm:$0xff]
        %v3276 = vld [vmem:[#allocation3 + $0x180] sm:$0xff]
        %v3277 = vld [vmem:[#allocation3 + $0x188] sm:$0xf]
        %v3278 = vld [vmem:[#allocation3 + $0x18c] sm:$0xff]
        %v3279 = vld [vmem:[#allocation3 + $0x194] sm:$0xff]
        %v3280 = vld [vmem:[#allocation3 + $0x19c] sm:$0xff]
        %v3281 = vld [vmem:[#allocation3 + $0x1a4] sm:$0xff]
        %v3282 = vld [vmem:[#allocation3 + $0x1ac] sm:$0xf]
        %v3283 = vld [vmem:[#allocation3 + $0x1b0] sm:$0xff]
        %v3284 = vld [vmem:[#allocation3 + $0x1b8] sm:$0xff]
        %v3285 = vld [vmem:[#allocation3 + $0x1c0] sm:$0xff]
        %v3286 = vld [vmem:[#allocation3 + $0x1c8] sm:$0xff]
        %v3287 = vld [vmem:[#allocation3 + $0x1d0] sm:$0xf]
        %v3288 = vld [vmem:[#allocation3 + $0x1d4] sm:$0xff]
        %v3289 = vld [vmem:[#allocation3 + $0x1dc] sm:$0xff]
        %v3290 = vld [vmem:[#allocation3 + $0x1e4] sm:$0xff]
        %v3291 = vld [vmem:[#allocation3 + $0x1ec] sm:$0xff]
        %v3292 = vld [vmem:[#allocation3 + $0x1f4] sm:$0xf]
        %v3293 = vld [vmem:[#allocation3 + $0x1f8] sm:$0xff]
        %v3294 = vld [vmem:[#allocation3 + $0x200] sm:$0xff]
        %v3295 = vld [vmem:[#allocation3 + $0x208] sm:$0xff]
        %v3296 = vld [vmem:[#allocation3 + $0x210] sm:$0xff]
        %v3297 = vld [vmem:[#allocation3 + $0x218] sm:$0xf]
        %v3298 = vld [vmem:[#allocation3 + $0x21c] sm:$0xff]
        %v3299 = vld [vmem:[#allocation3 + $0x224] sm:$0xff]
        %v3300 = vld [vmem:[#allocation3 + $0x22c] sm:$0xff]
        %v3301 = vld [vmem:[#allocation3 + $0x234] sm:$0xff]
        %v3302 = vld [vmem:[#allocation3 + $0x23c] sm:$0xf]
        %v3303 = vld [vmem:[#allocation3 + $0x240] sm:$0xff]
        %v3304 = vld [vmem:[#allocation3 + $0x248] sm:$0xff]
        %v3305 = vld [vmem:[#allocation3 + $0x250] sm:$0xff]
        %v3306 = vld [vmem:[#allocation3 + $0x258] sm:$0xff]
        %v3307 = vld [vmem:[#allocation3 + $0x260] sm:$0xf]
        %v3308 = vld [vmem:[#allocation3 + $0x264] sm:$0xff]
        %v3309 = vld [vmem:[#allocation3 + $0x26c] sm:$0xff]
        %v3310 = vld [vmem:[#allocation3 + $0x274] sm:$0xff]
        %v3311 = vld [vmem:[#allocation3 + $0x27c] sm:$0xff]
        %v3312 = vld [vmem:[#allocation3 + $0x284] sm:$0xf]
        %v3313 = vld [vmem:[#allocation3 + $0x288] sm:$0xff]
        %v3314 = vld [vmem:[#allocation3 + $0x290] sm:$0xff]
        %v3315 = vld [vmem:[#allocation3 + $0x298] sm:$0xff]
        %v3316 = vld [vmem:[#allocation3 + $0x2a0] sm:$0xff]
        %v3317 = vld [vmem:[#allocation3 + $0x2a8] sm:$0xf]
        %v3318 = vld [vmem:[#allocation3 + $0x2ac] sm:$0xff]
        %v3319 = vld [vmem:[#allocation3 + $0x2b4] sm:$0xff]
        %v3320 = vld [vmem:[#allocation3 + $0x2bc] sm:$0xff]
        %v3321 = vld [vmem:[#allocation3 + $0x2c4] sm:$0xff]
        %v3322 = vld [vmem:[#allocation3 + $0x2cc] sm:$0xf]
        %v3323 = vld [vmem:[#allocation3 + $0x2d0] sm:$0xff]
        %v3324 = vld [vmem:[#allocation3 + $0x2d8] sm:$0xff]
        %v3325 = vld [vmem:[#allocation3 + $0x2e0] sm:$0xff]
        %v3326 = vld [vmem:[#allocation3 + $0x2e8] sm:$0xff]
        %v3327 = vld [vmem:[#allocation3 + $0x2f0] sm:$0xf]
        %v3328 = vld [vmem:[#allocation3 + $0x2f4] sm:$0xff]
        %v3329 = vld [vmem:[#allocation3 + $0x2fc] sm:$0xff]
        %v3330 = vld [vmem:[#allocation3 + $0x304] sm:$0xff]
        %v3331 = vld [vmem:[#allocation3 + $0x30c] sm:$0xff]
        %v3332 = vld [vmem:[#allocation3 + $0x314] sm:$0xf]
        %v3333 = vld [vmem:[#allocation3 + $0x318] sm:$0xff]
        %v3334 = vld [vmem:[#allocation3 + $0x320] sm:$0xff]
        %v3335 = vld [vmem:[#allocation3 + $0x328] sm:$0xff]
        %v3336 = vld [vmem:[#allocation3 + $0x330] sm:$0xff]
        %v3337 = vld [vmem:[#allocation3 + $0x338] sm:$0xf]
        %v3338 = vld [vmem:[#allocation3 + $0x33c] sm:$0xff]
        %v3339 = vld [vmem:[#allocation3 + $0x344] sm:$0xff]
        %v3340 = vld [vmem:[#allocation3 + $0x34c] sm:$0xff]
        %v3341 = vld [vmem:[#allocation3 + $0x354] sm:$0xff]
        %v3342 = vld [vmem:[#allocation3 + $0x35c] sm:$0xf]
        %v3343 = vld [vmem:[#allocation3 + $0x360] sm:$0xff]
        %v3344 = vld [vmem:[#allocation3 + $0x368] sm:$0xff]
        %v3345 = vld [vmem:[#allocation3 + $0x370] sm:$0xff]
        %v3346 = vld [vmem:[#allocation3 + $0x378] sm:$0xff]
        %v3347 = vld [vmem:[#allocation3 + $0x380] sm:$0xf]
        %v3348 = vld [vmem:[#allocation3 + $0x384] sm:$0xff]
        %v3349 = vld [vmem:[#allocation3 + $0x38c] sm:$0xff]
        %v3350 = vld [vmem:[#allocation3 + $0x394] sm:$0xff]
        %v3351 = vld [vmem:[#allocation3 + $0x39c] sm:$0xff]
        %v3352 = vld [vmem:[#allocation3 + $0x3a4] sm:$0xf]
        %v3353 = vld [vmem:[#allocation3 + $0x3a8] sm:$0xff]
        %v3354 = vld [vmem:[#allocation3 + $0x3b0] sm:$0xff]
        %v3355 = vld [vmem:[#allocation3 + $0x3b8] sm:$0xff]
        %v3356 = vld [vmem:[#allocation3 + $0x3c0] sm:$0xff]
        %v3357 = vld [vmem:[#allocation3 + $0x3c8] sm:$0xf]
        %v3358 = vld [vmem:[#allocation3 + $0x3cc] sm:$0xff]
        %v3359 = vld [vmem:[#allocation3 + $0x3d4] sm:$0xff]
        %v3360 = vld [vmem:[#allocation3 + $0x3dc] sm:$0xff]
        %v3361 = vld [vmem:[#allocation3 + $0x3e4] sm:$0xff]
        %v3362 = vld [vmem:[#allocation3 + $0x3ec] sm:$0xf]
        %v3363 = vld [vmem:[#allocation3 + $0x3f0] sm:$0xff]
        %v3364 = vld [vmem:[#allocation3 + $0x3f8] sm:$0xff]
        %v3365 = vld [vmem:[#allocation3 + $0x400] sm:$0xff]
        %v3366 = vld [vmem:[#allocation3 + $0x408] sm:$0xff]
        %v3367 = vld [vmem:[#allocation3 + $0x410] sm:$0xf]
        %v3368 = vld [vmem:[#allocation3 + $0x414] sm:$0xff]
        %v3369 = vld [vmem:[#allocation3 + $0x41c] sm:$0xff]
        %v3370 = vld [vmem:[#allocation3 + $0x424] sm:$0xff]
        %v3371 = vld [vmem:[#allocation3 + $0x42c] sm:$0xff]
        %v3372 = vld [vmem:[#allocation3 + $0x434] sm:$0xf]
        %v3373 = vld [vmem:[#allocation3 + $0x438] sm:$0xff]
        %v3374 = vld [vmem:[#allocation3 + $0x440] sm:$0xff]
        %v3375 = vld [vmem:[#allocation3 + $0x448] sm:$0xff]
        %v3376 = vld [vmem:[#allocation3 + $0x450] sm:$0xff]
        %v3377 = vld [vmem:[#allocation3 + $0x458] sm:$0xf]
        %v3378 = vld [vmem:[#allocation3 + $0x45c] sm:$0xff]
        %v3379 = vld [vmem:[#allocation3 + $0x464] sm:$0xff]
        %v3380 = vld [vmem:[#allocation3 + $0x46c] sm:$0xff]
        %v3381 = vld [vmem:[#allocation3 + $0x474] sm:$0xff]
        %v3382 = vld [vmem:[#allocation3 + $0x47c] sm:$0xf]
        %v3383 = vld [vmem:[#allocation3 + $0x480] sm:$0xff]
        %v3384 = vld [vmem:[#allocation3 + $0x488] sm:$0xff]
        %v3385 = vld [vmem:[#allocation3 + $0x490] sm:$0xff]
        %v3386 = vld [vmem:[#allocation3 + $0x498] sm:$0xff]
        %v3387 = vld [vmem:[#allocation3 + $0x4a0] sm:$0xf]
        %v3388 = vld [vmem:[#allocation3 + $0x4a4] sm:$0xff]
        %v3389 = vld [vmem:[#allocation3 + $0x4ac] sm:$0xff]
        %v3390 = vld [vmem:[#allocation3 + $0x4b4] sm:$0xff]
        %v3391 = vld [vmem:[#allocation3 + $0x4bc] sm:$0xff]
        %v3392 = vld [vmem:[#allocation3 + $0x4c4] sm:$0xf]
        %v3393 = vld [vmem:[#allocation3 + $0x4c8] sm:$0xff]
        %v3394 = vld [vmem:[#allocation3 + $0x4d0] sm:$0xff]
        %v3395 = vld [vmem:[#allocation3 + $0x4d8] sm:$0xff]
        %v3396 = vld [vmem:[#allocation3 + $0x4e0] sm:$0xff]
        %v3397 = vld [vmem:[#allocation3 + $0x4e8] sm:$0xf]
        %v3398 = vld [vmem:[#allocation3 + $0x4ec] sm:$0xff]
        %v3399 = vld [vmem:[#allocation3 + $0x4f4] sm:$0xff]
        %v3400 = vld [vmem:[#allocation3 + $0x4fc] sm:$0xff]
        %v3401 = vld [vmem:[#allocation3 + $0x504] sm:$0xff]
        %v3402 = vld [vmem:[#allocation3 + $0x50c] sm:$0xf]
        %v3403 = vld [vmem:[#allocation3 + $0x510] sm:$0xff]
        %v3404 = vld [vmem:[#allocation3 + $0x518] sm:$0xff]
        %v3405 = vld [vmem:[#allocation3 + $0x520] sm:$0xff]
        %v3406 = vld [vmem:[#allocation3 + $0x528] sm:$0xff]
        %v3407 = vld [vmem:[#allocation3 + $0x530] sm:$0xf]
        %v3408 = vld [vmem:[#allocation3 + $0x534] sm:$0xff]
        %v3409 = vld [vmem:[#allocation3 + $0x53c] sm:$0xff]
        %v3410 = vld [vmem:[#allocation3 + $0x544] sm:$0xff]
        %v3411 = vld [vmem:[#allocation3 + $0x54c] sm:$0xff]
        %v3412 = vld [vmem:[#allocation3 + $0x554] sm:$0xf]
        %v3413 = vld [vmem:[#allocation3 + $0x558] sm:$0xff]
        %v3414 = vld [vmem:[#allocation3 + $0x560] sm:$0xff]
        %v3415 = vld [vmem:[#allocation3 + $0x568] sm:$0xff]
        %v3416 = vld [vmem:[#allocation3 + $0x570] sm:$0xff]
        %v3417 = vld [vmem:[#allocation3 + $0x578] sm:$0xf]
        %v3418 = vld [vmem:[#allocation3 + $0x57c] sm:$0xff]
        %v3419 = vld [vmem:[#allocation3 + $0x584] sm:$0xff]
        %v3420 = vld [vmem:[#allocation3 + $0x58c] sm:$0xff]
        %v3421 = vld [vmem:[#allocation3 + $0x594] sm:$0xff]
        %v3422 = vld [vmem:[#allocation3 + $0x59c] sm:$0xf]
        %v3423 = vld [vmem:[#allocation3 + $0x5a0] sm:$0xff]
        %v3424 = vld [vmem:[#allocation3 + $0x5a8] sm:$0xff]
        %v3425 = vld [vmem:[#allocation3 + $0x5b0] sm:$0xff]
        %v3426 = vld [vmem:[#allocation3 + $0x5b8] sm:$0xff]
        %v3427 = vld [vmem:[#allocation3 + $0x5c0] sm:$0xf]
        %v3428 = vld [vmem:[%s3] sm:$0xff]
        %3430 = vset.pattern.permute.xlu0 0
        %3431 = vperm.xlu0 %3430, %v3428
        %v3432 = vpop.permute.xlu0 %3431
        %v3436 = vunpack.c.l.b16 %v3221
        %v3437 = vunpack.c.h.b16 %v3221
        %v3438 = vunpack.c.l.b16 %v3222
        %v3439 = vpack.c.b16 %v3436, %v3436
        %v3440 = vpack.c.b16 %v3437, %v3437
        %v3441 = vpack.c.b16 %v3438, %v3438
        %v3649 = vunpack.c.l.b16 %v3223
        %v3650 = vunpack.c.h.b16 %v3223
        %v3651 = vunpack.c.l.b16 %v3224
        %v3652 = vunpack.c.h.b16 %v3224
        %v3653 = vunpack.c.l.b16 %v3225
        %v3654 = vunpack.c.h.b16 %v3225
        %v3655 = vunpack.c.l.b16 %v3226
        %v3656 = vunpack.c.h.b16 %v3226
        %v3657 = vunpack.c.l.b16 %v3227
        %v3658 = vunpack.c.l.b16 %v3228
        %v3659 = vunpack.c.h.b16 %v3228
        %v3660 = vunpack.c.l.b16 %v3229
        %v3661 = vunpack.c.h.b16 %v3229
        %v3662 = vunpack.c.l.b16 %v3230
        %v3663 = vunpack.c.h.b16 %v3230
        %v3664 = vunpack.c.l.b16 %v3231
        %v3665 = vunpack.c.h.b16 %v3231
        %v3666 = vunpack.c.l.b16 %v3232
        %v3667 = vunpack.c.l.b16 %v3233
        %v3668 = vunpack.c.h.b16 %v3233
        %v3669 = vunpack.c.l.b16 %v3234
        %v3670 = vunpack.c.h.b16 %v3234
        %v3671 = vunpack.c.l.b16 %v3235
        %v3672 = vunpack.c.h.b16 %v3235
        %v3673 = vunpack.c.l.b16 %v3236
        %v3674 = vunpack.c.h.b16 %v3236
        %v3675 = vunpack.c.l.b16 %v3237
        %v3676 = vunpack.c.l.b16 %v3238
        %v3677 = vunpack.c.h.b16 %v3238
        %v3678 = vunpack.c.l.b16 %v3239
        %v3679 = vunpack.c.h.b16 %v3239
        %v3680 = vunpack.c.l.b16 %v3240
        %v3681 = vunpack.c.h.b16 %v3240
        %v3682 = vunpack.c.l.b16 %v3241
        %v3683 = vunpack.c.h.b16 %v3241
        %v3684 = vunpack.c.l.b16 %v3242
        %v3685 = vunpack.c.l.b16 %v3243
        %v3686 = vunpack.c.h.b16 %v3243
        %v3687 = vunpack.c.l.b16 %v3244
        %v3688 = vunpack.c.h.b16 %v3244
        %v3689 = vunpack.c.l.b16 %v3245
        %v3690 = vunpack.c.h.b16 %v3245
        %v3691 = vunpack.c.l.b16 %v3246
        %v3692 = vunpack.c.h.b16 %v3246
        %v3693 = vunpack.c.l.b16 %v3247
        %v3694 = vunpack.c.l.b16 %v3248
        %v3695 = vunpack.c.h.b16 %v3248
        %v3696 = vunpack.c.l.b16 %v3249
        %v3697 = vunpack.c.h.b16 %v3249
        %v3698 = vunpack.c.l.b16 %v3250
        %v3699 = vunpack.c.h.b16 %v3250
        %v3700 = vunpack.c.l.b16 %v3251
        %v3701 = vunpack.c.h.b16 %v3251
        %v3702 = vunpack.c.l.b16 %v3252
        %v3703 = vunpack.c.l.b16 %v3253
        %v3704 = vunpack.c.h.b16 %v3253
        %v3705 = vunpack.c.l.b16 %v3254
        %v3706 = vunpack.c.h.b16 %v3254
        %v3707 = vunpack.c.l.b16 %v3255
        %v3708 = vunpack.c.h.b16 %v3255
        %v3709 = vunpack.c.l.b16 %v3256
        %v3710 = vunpack.c.h.b16 %v3256
        %v3711 = vunpack.c.l.b16 %v3257
        %v3712 = vunpack.c.l.b16 %v3258
        %v3713 = vunpack.c.h.b16 %v3258
        %v3714 = vunpack.c.l.b16 %v3259
        %v3715 = vunpack.c.h.b16 %v3259
        %v3716 = vunpack.c.l.b16 %v3260
        %v3717 = vunpack.c.h.b16 %v3260
        %v3718 = vunpack.c.l.b16 %v3261
        %v3719 = vunpack.c.h.b16 %v3261
        %v3720 = vunpack.c.l.b16 %v3262
        %v3721 = vunpack.c.l.b16 %v3263
        %v3722 = vunpack.c.h.b16 %v3263
        %v3723 = vunpack.c.l.b16 %v3264
        %v3724 = vunpack.c.h.b16 %v3264
        %v3725 = vunpack.c.l.b16 %v3265
        %v3726 = vunpack.c.h.b16 %v3265
        %v3727 = vunpack.c.l.b16 %v3266
        %v3728 = vunpack.c.h.b16 %v3266
        %v3729 = vunpack.c.l.b16 %v3267
        %v3730 = vunpack.c.l.b16 %v3268
        %v3731 = vunpack.c.h.b16 %v3268
        %v3732 = vunpack.c.l.b16 %v3269
        %v3733 = vunpack.c.h.b16 %v3269
        %v3734 = vunpack.c.l.b16 %v3270
        %v3735 = vunpack.c.h.b16 %v3270
        %v3736 = vunpack.c.l.b16 %v3271
        %v3737 = vunpack.c.h.b16 %v3271
        %v3738 = vunpack.c.l.b16 %v3272
        %v3739 = vunpack.c.l.b16 %v3273
        %v3740 = vunpack.c.h.b16 %v3273
        %v3741 = vunpack.c.l.b16 %v3274
        %v3742 = vunpack.c.h.b16 %v3274
        %v3743 = vunpack.c.l.b16 %v3275
        %v3744 = vunpack.c.h.b16 %v3275
        %v3745 = vunpack.c.l.b16 %v3276
        %v3746 = vunpack.c.h.b16 %v3276
        %v3747 = vunpack.c.l.b16 %v3277
        %v3748 = vunpack.c.l.b16 %v3278
        %v3749 = vunpack.c.h.b16 %v3278
        %v3750 = vunpack.c.l.b16 %v3279
        %v3751 = vunpack.c.h.b16 %v3279
        %v3752 = vunpack.c.l.b16 %v3280
        %v3753 = vunpack.c.h.b16 %v3280
        %v3754 = vunpack.c.l.b16 %v3281
        %v3755 = vunpack.c.h.b16 %v3281
        %v3756 = vunpack.c.l.b16 %v3282
        %v3757 = vunpack.c.l.b16 %v3283
        %v3758 = vunpack.c.h.b16 %v3283
        %v3759 = vunpack.c.l.b16 %v3284
        %v3760 = vunpack.c.h.b16 %v3284
        %v3761 = vunpack.c.l.b16 %v3285
        %v3762 = vunpack.c.h.b16 %v3285
        %v3763 = vunpack.c.l.b16 %v3286
        %v3764 = vunpack.c.h.b16 %v3286
        %v3765 = vunpack.c.l.b16 %v3287
        %v3766 = vunpack.c.l.b16 %v3288
        %v3767 = vunpack.c.h.b16 %v3288
        %v3768 = vunpack.c.l.b16 %v3289
        %v3769 = vunpack.c.h.b16 %v3289
        %v3770 = vunpack.c.l.b16 %v3290
        %v3771 = vunpack.c.h.b16 %v3290
        %v3772 = vunpack.c.l.b16 %v3291
        %v3773 = vunpack.c.h.b16 %v3291
        %v3774 = vunpack.c.l.b16 %v3292
        %v3775 = vunpack.c.l.b16 %v3293
        %v3776 = vunpack.c.h.b16 %v3293
        %v3777 = vunpack.c.l.b16 %v3294
        %v3778 = vunpack.c.h.b16 %v3294
        %v3779 = vunpack.c.l.b16 %v3295
        %v3780 = vunpack.c.h.b16 %v3295
        %v3781 = vunpack.c.l.b16 %v3296
        %v3782 = vunpack.c.h.b16 %v3296
        %v3783 = vunpack.c.l.b16 %v3297
        %v3784 = vunpack.c.l.b16 %v3298
        %v3785 = vunpack.c.h.b16 %v3298
        %v3786 = vunpack.c.l.b16 %v3299
        %v3787 = vunpack.c.h.b16 %v3299
        %v3788 = vunpack.c.l.b16 %v3300
        %v3789 = vunpack.c.h.b16 %v3300
        %v3790 = vunpack.c.l.b16 %v3301
        %v3791 = vunpack.c.h.b16 %v3301
        %v3792 = vunpack.c.l.b16 %v3302
        %v3793 = vunpack.c.l.b16 %v3303
        %v3794 = vunpack.c.h.b16 %v3303
        %v3795 = vunpack.c.l.b16 %v3304
        %v3796 = vunpack.c.h.b16 %v3304
        %v3797 = vunpack.c.l.b16 %v3305
        %v3798 = vunpack.c.h.b16 %v3305
        %v3799 = vunpack.c.l.b16 %v3306
        %v3800 = vunpack.c.h.b16 %v3306
        %v3801 = vunpack.c.l.b16 %v3307
        %v3802 = vunpack.c.l.b16 %v3308
        %v3803 = vunpack.c.h.b16 %v3308
        %v3804 = vunpack.c.l.b16 %v3309
        %v3805 = vunpack.c.h.b16 %v3309
        %v3806 = vunpack.c.l.b16 %v3310
        %v3807 = vunpack.c.h.b16 %v3310
        %v3808 = vunpack.c.l.b16 %v3311
        %v3809 = vunpack.c.h.b16 %v3311
        %v3810 = vunpack.c.l.b16 %v3312
        %v3811 = vunpack.c.l.b16 %v3313
        %v3812 = vunpack.c.h.b16 %v3313
        %v3813 = vunpack.c.l.b16 %v3314
        %v3814 = vunpack.c.h.b16 %v3314
        %v3815 = vunpack.c.l.b16 %v3315
        %v3816 = vunpack.c.h.b16 %v3315
        %v3817 = vunpack.c.l.b16 %v3316
        %v3818 = vunpack.c.h.b16 %v3316
        %v3819 = vunpack.c.l.b16 %v3317
        %v3820 = vunpack.c.l.b16 %v3318
        %v3821 = vunpack.c.h.b16 %v3318
        %v3822 = vunpack.c.l.b16 %v3319
        %v3823 = vunpack.c.h.b16 %v3319
        %v3824 = vunpack.c.l.b16 %v3320
        %v3825 = vunpack.c.h.b16 %v3320
        %v3826 = vunpack.c.l.b16 %v3321
        %v3827 = vunpack.c.h.b16 %v3321
        %v3828 = vunpack.c.l.b16 %v3322
        %v3829 = vunpack.c.l.b16 %v3323
        %v3830 = vunpack.c.h.b16 %v3323
        %v3831 = vunpack.c.l.b16 %v3324
        %v3832 = vunpack.c.h.b16 %v3324
        %v3833 = vunpack.c.l.b16 %v3325
        %v3834 = vunpack.c.h.b16 %v3325
        %v3835 = vunpack.c.l.b16 %v3326
        %v3836 = vunpack.c.h.b16 %v3326
        %v3837 = vunpack.c.l.b16 %v3327
        %v3838 = vunpack.c.l.b16 %v3328
        %v3839 = vunpack.c.h.b16 %v3328
        %v3840 = vunpack.c.l.b16 %v3329
        %v3841 = vunpack.c.h.b16 %v3329
        %v3842 = vunpack.c.l.b16 %v3330
        %v3843 = vunpack.c.h.b16 %v3330
        %v3844 = vunpack.c.l.b16 %v3331
        %v3845 = vunpack.c.h.b16 %v3331
        %v3846 = vunpack.c.l.b16 %v3332
        %v3847 = vunpack.c.l.b16 %v3333
        %v3848 = vunpack.c.h.b16 %v3333
        %v3849 = vunpack.c.l.b16 %v3334
        %v3850 = vunpack.c.h.b16 %v3334
        %v3851 = vunpack.c.l.b16 %v3335
        %v3852 = vunpack.c.h.b16 %v3335
        %v3853 = vunpack.c.l.b16 %v3336
        %v3854 = vunpack.c.h.b16 %v3336
        %v3855 = vunpack.c.l.b16 %v3337
        %v3856 = vunpack.c.l.b16 %v3338
        %v3857 = vunpack.c.h.b16 %v3338
        %v3858 = vunpack.c.l.b16 %v3339
        %v3859 = vunpack.c.h.b16 %v3339
        %v3860 = vunpack.c.l.b16 %v3340
        %v3861 = vunpack.c.h.b16 %v3340
        %v3862 = vunpack.c.l.b16 %v3341
        %v3863 = vunpack.c.h.b16 %v3341
        %v3864 = vunpack.c.l.b16 %v3342
        %v3865 = vunpack.c.l.b16 %v3343
        %v3866 = vunpack.c.h.b16 %v3343
        %v3867 = vunpack.c.l.b16 %v3344
        %v3868 = vunpack.c.h.b16 %v3344
        %v3869 = vunpack.c.l.b16 %v3345
        %v3870 = vunpack.c.h.b16 %v3345
        %v3871 = vunpack.c.l.b16 %v3346
        %v3872 = vunpack.c.h.b16 %v3346
        %v3873 = vunpack.c.l.b16 %v3347
        %v3874 = vunpack.c.l.b16 %v3348
        %v3875 = vunpack.c.h.b16 %v3348
        %v3876 = vunpack.c.l.b16 %v3349
        %v3877 = vunpack.c.h.b16 %v3349
        %v3878 = vunpack.c.l.b16 %v3350
        %v3879 = vunpack.c.h.b16 %v3350
        %v3880 = vunpack.c.l.b16 %v3351
        %v3881 = vunpack.c.h.b16 %v3351
        %v3882 = vunpack.c.l.b16 %v3352
        %v3883 = vunpack.c.l.b16 %v3353
        %v3884 = vunpack.c.h.b16 %v3353
        %v3885 = vunpack.c.l.b16 %v3354
        %v3886 = vunpack.c.h.b16 %v3354
        %v3887 = vunpack.c.l.b16 %v3355
        %v3888 = vunpack.c.h.b16 %v3355
        %v3889 = vunpack.c.l.b16 %v3356
        %v3890 = vunpack.c.h.b16 %v3356
        %v3891 = vunpack.c.l.b16 %v3357
        %v3892 = vunpack.c.l.b16 %v3358
        %v3893 = vunpack.c.h.b16 %v3358
        %v3894 = vunpack.c.l.b16 %v3359
        %v3895 = vunpack.c.h.b16 %v3359
        %v3896 = vunpack.c.l.b16 %v3360
        %v3897 = vunpack.c.h.b16 %v3360
        %v3898 = vunpack.c.l.b16 %v3361
        %v3899 = vunpack.c.h.b16 %v3361
        %v3900 = vunpack.c.l.b16 %v3362
        %v3901 = vunpack.c.l.b16 %v3363
        %v3902 = vunpack.c.h.b16 %v3363
        %v3903 = vunpack.c.l.b16 %v3364
        %v3904 = vunpack.c.h.b16 %v3364
        %v3905 = vunpack.c.l.b16 %v3365
        %v3906 = vunpack.c.h.b16 %v3365
        %v3907 = vunpack.c.l.b16 %v3366
        %v3908 = vunpack.c.h.b16 %v3366
        %v3909 = vunpack.c.l.b16 %v3367
        %v3910 = vunpack.c.l.b16 %v3368
        %v3911 = vunpack.c.h.b16 %v3368
        %v3912 = vunpack.c.l.b16 %v3369
        %v3913 = vunpack.c.h.b16 %v3369
        %v3914 = vunpack.c.l.b16 %v3370
        %v3915 = vunpack.c.h.b16 %v3370
        %v3916 = vunpack.c.l.b16 %v3371
        %v3917 = vunpack.c.h.b16 %v3371
        %v3918 = vunpack.c.l.b16 %v3372
        %v3919 = vunpack.c.l.b16 %v3373
        %v3920 = vunpack.c.h.b16 %v3373
        %v3921 = vunpack.c.l.b16 %v3374
        %v3922 = vunpack.c.h.b16 %v3374
        %v3923 = vunpack.c.l.b16 %v3375
        %v3924 = vunpack.c.h.b16 %v3375
        %v3925 = vunpack.c.l.b16 %v3376
        %v3926 = vunpack.c.h.b16 %v3376
        %v3927 = vunpack.c.l.b16 %v3377
        %v3928 = vunpack.c.l.b16 %v3378
        %v3929 = vunpack.c.h.b16 %v3378
        %v3930 = vunpack.c.l.b16 %v3379
        %v3931 = vunpack.c.h.b16 %v3379
        %v3932 = vunpack.c.l.b16 %v3380
        %v3933 = vunpack.c.h.b16 %v3380
        %v3934 = vunpack.c.l.b16 %v3381
        %v3935 = vunpack.c.h.b16 %v3381
        %v3936 = vunpack.c.l.b16 %v3382
        %v3937 = vunpack.c.l.b16 %v3383
        %v3938 = vunpack.c.h.b16 %v3383
        %v3939 = vunpack.c.l.b16 %v3384
        %v3940 = vunpack.c.h.b16 %v3384
        %v3941 = vunpack.c.l.b16 %v3385
        %v3942 = vunpack.c.h.b16 %v3385
        %v3943 = vunpack.c.l.b16 %v3386
        %v3944 = vunpack.c.h.b16 %v3386
        %v3945 = vunpack.c.l.b16 %v3387
        %v3946 = vunpack.c.l.b16 %v3388
        %v3947 = vunpack.c.h.b16 %v3388
        %v3948 = vunpack.c.l.b16 %v3389
        %v3949 = vunpack.c.h.b16 %v3389
        %v3950 = vunpack.c.l.b16 %v3390
        %v3951 = vunpack.c.h.b16 %v3390
        %v3952 = vunpack.c.l.b16 %v3391
        %v3953 = vunpack.c.h.b16 %v3391
        %v3954 = vunpack.c.l.b16 %v3392
        %v3955 = vunpack.c.l.b16 %v3393
        %v3956 = vunpack.c.h.b16 %v3393
        %v3957 = vunpack.c.l.b16 %v3394
        %v3958 = vunpack.c.h.b16 %v3394
        %v3959 = vunpack.c.l.b16 %v3395
        %v3960 = vunpack.c.h.b16 %v3395
        %v3961 = vunpack.c.l.b16 %v3396
        %v3962 = vunpack.c.h.b16 %v3396
        %v3963 = vunpack.c.l.b16 %v3397
        %v3964 = vunpack.c.l.b16 %v3398
        %v3965 = vunpack.c.h.b16 %v3398
        %v3966 = vunpack.c.l.b16 %v3399
        %v3967 = vunpack.c.h.b16 %v3399
        %v3968 = vunpack.c.l.b16 %v3400
        %v3969 = vunpack.c.h.b16 %v3400
        %v3970 = vunpack.c.l.b16 %v3401
        %v3971 = vunpack.c.h.b16 %v3401
        %v3972 = vunpack.c.l.b16 %v3402
        %v3973 = vunpack.c.l.b16 %v3403
        %v3974 = vunpack.c.h.b16 %v3403
        %v3975 = vunpack.c.l.b16 %v3404
        %v3976 = vunpack.c.h.b16 %v3404
        %v3977 = vunpack.c.l.b16 %v3405
        %v3978 = vunpack.c.h.b16 %v3405
        %v3979 = vunpack.c.l.b16 %v3406
        %v3980 = vunpack.c.h.b16 %v3406
        %v3981 = vunpack.c.l.b16 %v3407
        %v3982 = vunpack.c.l.b16 %v3408
        %v3983 = vunpack.c.h.b16 %v3408
        %v3984 = vunpack.c.l.b16 %v3409
        %v3985 = vunpack.c.h.b16 %v3409
        %v3986 = vunpack.c.l.b16 %v3410
        %v3987 = vunpack.c.h.b16 %v3410
        %v3988 = vunpack.c.l.b16 %v3411
        %v3989 = vunpack.c.h.b16 %v3411
        %v3990 = vunpack.c.l.b16 %v3412
        %v3991 = vunpack.c.l.b16 %v3413
        %v3992 = vunpack.c.h.b16 %v3413
        %v3993 = vunpack.c.l.b16 %v3414
        %v3994 = vunpack.c.h.b16 %v3414
        %v3995 = vunpack.c.l.b16 %v3415
        %v3996 = vunpack.c.h.b16 %v3415
        %v3997 = vunpack.c.l.b16 %v3416
        %v3998 = vunpack.c.h.b16 %v3416
        %v3999 = vunpack.c.l.b16 %v3417
        %v4000 = vunpack.c.l.b16 %v3418
        %v4001 = vunpack.c.h.b16 %v3418
        %v4002 = vunpack.c.l.b16 %v3419
        %v4003 = vunpack.c.h.b16 %v3419
        %v4004 = vunpack.c.l.b16 %v3420
        %v4005 = vunpack.c.h.b16 %v3420
        %v4006 = vunpack.c.l.b16 %v3421
        %v4007 = vunpack.c.h.b16 %v3421
        %v4008 = vunpack.c.l.b16 %v3422
        %v4009 = vunpack.c.l.b16 %v3423
        %v4010 = vunpack.c.h.b16 %v3423
        %v4011 = vunpack.c.l.b16 %v3424
        %v4012 = vunpack.c.h.b16 %v3424
        %v4013 = vunpack.c.l.b16 %v3425
        %v4014 = vunpack.c.h.b16 %v3425
        %v4015 = vunpack.c.l.b16 %v3426
        %v4016 = vunpack.c.h.b16 %v3426
        %v4017 = vunpack.c.l.b16 %v3427
        %v4018 = vpack.c.b16 %v3658, %v3649
        %v4019 = vpack.c.b16 %v3659, %v3650
        %v4020 = vpack.c.b16 %v3660, %v3651
        %v4021 = vpack.c.b16 %v3661, %v3652
        %v4022 = vpack.c.b16 %v3662, %v3653
        %v4023 = vpack.c.b16 %v3663, %v3654
        %v4024 = vpack.c.b16 %v3664, %v3655
        %v4025 = vpack.c.b16 %v3665, %v3656
        %v4026 = vpack.c.b16 %v3666, %v3657
        %v4027 = vpack.c.b16 %v3676, %v3667
        %v4028 = vpack.c.b16 %v3677, %v3668
        %v4029 = vpack.c.b16 %v3678, %v3669
        %v4030 = vpack.c.b16 %v3679, %v3670
        %v4031 = vpack.c.b16 %v3680, %v3671
        %v4032 = vpack.c.b16 %v3681, %v3672
        %v4033 = vpack.c.b16 %v3682, %v3673
        %v4034 = vpack.c.b16 %v3683, %v3674
        %v4035 = vpack.c.b16 %v3684, %v3675
        %v4036 = vpack.c.b16 %v3694, %v3685
        %v4037 = vpack.c.b16 %v3695, %v3686
        %v4038 = vpack.c.b16 %v3696, %v3687
        %v4039 = vpack.c.b16 %v3697, %v3688
        %v4040 = vpack.c.b16 %v3698, %v3689
        %v4041 = vpack.c.b16 %v3699, %v3690
        %v4042 = vpack.c.b16 %v3700, %v3691
        %v4043 = vpack.c.b16 %v3701, %v3692
        %v4044 = vpack.c.b16 %v3702, %v3693
        %v4045 = vpack.c.b16 %v3712, %v3703
        %v4046 = vpack.c.b16 %v3713, %v3704
        %v4047 = vpack.c.b16 %v3714, %v3705
        %v4048 = vpack.c.b16 %v3715, %v3706
        %v4049 = vpack.c.b16 %v3716, %v3707
        %v4050 = vpack.c.b16 %v3717, %v3708
        %v4051 = vpack.c.b16 %v3718, %v3709
        %v4052 = vpack.c.b16 %v3719, %v3710
        %v4053 = vpack.c.b16 %v3720, %v3711
        %v4054 = vpack.c.b16 %v3730, %v3721
        %v4055 = vpack.c.b16 %v3731, %v3722
        %v4056 = vpack.c.b16 %v3732, %v3723
        %v4057 = vpack.c.b16 %v3733, %v3724
        %v4058 = vpack.c.b16 %v3734, %v3725
        %v4059 = vpack.c.b16 %v3735, %v3726
        %v4060 = vpack.c.b16 %v3736, %v3727
        %v4061 = vpack.c.b16 %v3737, %v3728
        %v4062 = vpack.c.b16 %v3738, %v3729
        %v4063 = vpack.c.b16 %v3748, %v3739
        %v4064 = vpack.c.b16 %v3749, %v3740
        %v4065 = vpack.c.b16 %v3750, %v3741
        %v4066 = vpack.c.b16 %v3751, %v3742
        %v4067 = vpack.c.b16 %v3752, %v3743
        %v4068 = vpack.c.b16 %v3753, %v3744
        %v4069 = vpack.c.b16 %v3754, %v3745
        %v4070 = vpack.c.b16 %v3755, %v3746
        %v4071 = vpack.c.b16 %v3756, %v3747
        %v4072 = vpack.c.b16 %v3766, %v3757
        %v4073 = vpack.c.b16 %v3767, %v3758
        %v4074 = vpack.c.b16 %v3768, %v3759
        %v4075 = vpack.c.b16 %v3769, %v3760
        %v4076 = vpack.c.b16 %v3770, %v3761
        %v4077 = vpack.c.b16 %v3771, %v3762
        %v4078 = vpack.c.b16 %v3772, %v3763
        %v4079 = vpack.c.b16 %v3773, %v3764
        %v4080 = vpack.c.b16 %v3774, %v3765
        %v4081 = vpack.c.b16 %v3784, %v3775
        %v4082 = vpack.c.b16 %v3785, %v3776
        %v4083 = vpack.c.b16 %v3786, %v3777
        %v4084 = vpack.c.b16 %v3787, %v3778
        %v4085 = vpack.c.b16 %v3788, %v3779
        %v4086 = vpack.c.b16 %v3789, %v3780
        %v4087 = vpack.c.b16 %v3790, %v3781
        %v4088 = vpack.c.b16 %v3791, %v3782
        %v4089 = vpack.c.b16 %v3792, %v3783
        %v4090 = vpack.c.b16 %v3802, %v3793
        %v4091 = vpack.c.b16 %v3803, %v3794
        %v4092 = vpack.c.b16 %v3804, %v3795
        %v4093 = vpack.c.b16 %v3805, %v3796
        %v4094 = vpack.c.b16 %v3806, %v3797
        %v4095 = vpack.c.b16 %v3807, %v3798
        %v4096 = vpack.c.b16 %v3808, %v3799
        %v4097 = vpack.c.b16 %v3809, %v3800
        %v4098 = vpack.c.b16 %v3810, %v3801
        %v4099 = vpack.c.b16 %v3820, %v3811
        %v4100 = vpack.c.b16 %v3821, %v3812
        %v4101 = vpack.c.b16 %v3822, %v3813
        %v4102 = vpack.c.b16 %v3823, %v3814
        %v4103 = vpack.c.b16 %v3824, %v3815
        %v4104 = vpack.c.b16 %v3825, %v3816
        %v4105 = vpack.c.b16 %v3826, %v3817
        %v4106 = vpack.c.b16 %v3827, %v3818
        %v4107 = vpack.c.b16 %v3828, %v3819
        %v4108 = vpack.c.b16 %v3838, %v3829
        %v4109 = vpack.c.b16 %v3839, %v3830
        %v4110 = vpack.c.b16 %v3840, %v3831
        %v4111 = vpack.c.b16 %v3841, %v3832
        %v4112 = vpack.c.b16 %v3842, %v3833
        %v4113 = vpack.c.b16 %v3843, %v3834
        %v4114 = vpack.c.b16 %v3844, %v3835
        %v4115 = vpack.c.b16 %v3845, %v3836
        %v4116 = vpack.c.b16 %v3846, %v3837
        %v4117 = vpack.c.b16 %v3856, %v3847
        %v4118 = vpack.c.b16 %v3857, %v3848
        %v4119 = vpack.c.b16 %v3858, %v3849
        %v4120 = vpack.c.b16 %v3859, %v3850
        %v4121 = vpack.c.b16 %v3860, %v3851
        %v4122 = vpack.c.b16 %v3861, %v3852
        %v4123 = vpack.c.b16 %v3862, %v3853
        %v4124 = vpack.c.b16 %v3863, %v3854
        %v4125 = vpack.c.b16 %v3864, %v3855
        %v4126 = vpack.c.b16 %v3874, %v3865
        %v4127 = vpack.c.b16 %v3875, %v3866
        %v4128 = vpack.c.b16 %v3876, %v3867
        %v4129 = vpack.c.b16 %v3877, %v3868
        %v4130 = vpack.c.b16 %v3878, %v3869
        %v4131 = vpack.c.b16 %v3879, %v3870
        %v4132 = vpack.c.b16 %v3880, %v3871
        %v4133 = vpack.c.b16 %v3881, %v3872
        %v4134 = vpack.c.b16 %v3882, %v3873
        %v4135 = vpack.c.b16 %v3892, %v3883
        %v4136 = vpack.c.b16 %v3893, %v3884
        %v4137 = vpack.c.b16 %v3894, %v3885
        %v4138 = vpack.c.b16 %v3895, %v3886
        %v4139 = vpack.c.b16 %v3896, %v3887
        %v4140 = vpack.c.b16 %v3897, %v3888
        %v4141 = vpack.c.b16 %v3898, %v3889
        %v4142 = vpack.c.b16 %v3899, %v3890
        %v4143 = vpack.c.b16 %v3900, %v3891
        %v4144 = vpack.c.b16 %v3910, %v3901
        %v4145 = vpack.c.b16 %v3911, %v3902
        %v4146 = vpack.c.b16 %v3912, %v3903
        %v4147 = vpack.c.b16 %v3913, %v3904
        %v4148 = vpack.c.b16 %v3914, %v3905
        %v4149 = vpack.c.b16 %v3915, %v3906
        %v4150 = vpack.c.b16 %v3916, %v3907
        %v4151 = vpack.c.b16 %v3917, %v3908
        %v4152 = vpack.c.b16 %v3918, %v3909
        %v4153 = vpack.c.b16 %v3928, %v3919
        %v4154 = vpack.c.b16 %v3929, %v3920
        %v4155 = vpack.c.b16 %v3930, %v3921
        %v4156 = vpack.c.b16 %v3931, %v3922
        %v4157 = vpack.c.b16 %v3932, %v3923
        %v4158 = vpack.c.b16 %v3933, %v3924
        %v4159 = vpack.c.b16 %v3934, %v3925
        %v4160 = vpack.c.b16 %v3935, %v3926
        %v4161 = vpack.c.b16 %v3936, %v3927
        %v4162 = vpack.c.b16 %v3946, %v3937
        %v4163 = vpack.c.b16 %v3947, %v3938
        %v4164 = vpack.c.b16 %v3948, %v3939
        %v4165 = vpack.c.b16 %v3949, %v3940
        %v4166 = vpack.c.b16 %v3950, %v3941
        %v4167 = vpack.c.b16 %v3951, %v3942
        %v4168 = vpack.c.b16 %v3952, %v3943
        %v4169 = vpack.c.b16 %v3953, %v3944
        %v4170 = vpack.c.b16 %v3954, %v3945
        %v4171 = vpack.c.b16 %v3964, %v3955
        %v4172 = vpack.c.b16 %v3965, %v3956
        %v4173 = vpack.c.b16 %v3966, %v3957
        %v4174 = vpack.c.b16 %v3967, %v3958
        %v4175 = vpack.c.b16 %v3968, %v3959
        %v4176 = vpack.c.b16 %v3969, %v3960
        %v4177 = vpack.c.b16 %v3970, %v3961
        %v4178 = vpack.c.b16 %v3971, %v3962
        %v4179 = vpack.c.b16 %v3972, %v3963
        %v4180 = vpack.c.b16 %v3982, %v3973
        %v4181 = vpack.c.b16 %v3983, %v3974
        %v4182 = vpack.c.b16 %v3984, %v3975
        %v4183 = vpack.c.b16 %v3985, %v3976
        %v4184 = vpack.c.b16 %v3986, %v3977
        %v4185 = vpack.c.b16 %v3987, %v3978
        %v4186 = vpack.c.b16 %v3988, %v3979
        %v4187 = vpack.c.b16 %v3989, %v3980
        %v4188 = vpack.c.b16 %v3990, %v3981
        %v4189 = vpack.c.b16 %v4000, %v3991
        %v4190 = vpack.c.b16 %v4001, %v3992
        %v4191 = vpack.c.b16 %v4002, %v3993
        %v4192 = vpack.c.b16 %v4003, %v3994
        %v4193 = vpack.c.b16 %v4004, %v3995
        %v4194 = vpack.c.b16 %v4005, %v3996
        %v4195 = vpack.c.b16 %v4006, %v3997
        %v4196 = vpack.c.b16 %v4007, %v3998
        %v4197 = vpack.c.b16 %v4008, %v3999
        %v4198 = vpack.c.b16 %v4009, %v4009
        %v4199 = vpack.c.b16 %v4010, %v4010
        %v4200 = vpack.c.b16 %v4011, %v4011
        %v4201 = vpack.c.b16 %v4012, %v4012
        %v4202 = vpack.c.b16 %v4013, %v4013
        %v4203 = vpack.c.b16 %v4014, %v4014
        %v4204 = vpack.c.b16 %v4015, %v4015
        %v4205 = vpack.c.b16 %v4016, %v4016
        %v4206 = vpack.c.b16 %v4017, %v4017
        %vm4387 = vcmask 588800
        %v4389 = vsel %vm4387, %v3441, 0
        %vm4391 = vcmask 1043456
        %v4393 = vsel %vm4391, %v4198, 0
        %v4396 = vsel %vm4391, %v4199, 0
        %v4399 = vsel %vm4391, %v4200, 0
        %v4402 = vsel %vm4391, %v4201, 0
        %v4405 = vsel %vm4391, %v4202, 0
        %v4408 = vsel %vm4391, %v4203, 0
        %v4411 = vsel %vm4391, %v4204, 0
        %v4414 = vsel %vm4391, %v4205, 0
        %v4417 = vsel %vm4391, %v4206, 0
        %4419 = vmatprep.subr.bf16.mxu0 %v4019
        %4420 = vmatpush1.bf16.msra.mxu0 %v4018
        %4421 = vmatprep.subr.bf16.mxu0 %v4028
        %4422 = vmatpush1.bf16.msra.mxu0 %v4027
        %4423 = vmatprep.subr.bf16.mxu0 %v4037
        %4424 = vmatpush1.bf16.msra.mxu0 %v4036
        %4425 = vmatprep.subr.bf16.mxu0 %v4046
        %4426 = vmatpush1.bf16.msra.mxu0 %v4045
        %4427 = vmatprep.subr.bf16.mxu0 %v4055
        %4428 = vmatpush1.bf16.msra.mxu0 %v4054
        %4429 = vmatprep.subr.bf16.mxu0 %v4064
        %4430 = vmatpush1.bf16.msra.mxu0 %v4063
        %4431 = vmatprep.subr.bf16.mxu0 %v4073
        %4432 = vmatpush1.bf16.msra.mxu0 %v4072
        %4433 = vmatprep.subr.bf16.mxu0 %v4082
        %4434 = vmatpush1.bf16.msra.mxu0 %v4081
        %4435 = vmatprep.subr.bf16.mxu0 %v4091
        %4436 = vmatpush1.bf16.msra.mxu0 %v4090
        %4437 = vmatprep.subr.bf16.mxu0 %v4100
        %4438 = vmatpush1.bf16.msra.mxu0 %v4099
        %4439 = vmatprep.subr.bf16.mxu0 %v4109
        %4440 = vmatpush1.bf16.msra.mxu0 %v4108
        %4441 = vmatprep.subr.bf16.mxu0 %v4118
        %4442 = vmatpush1.bf16.msra.mxu0 %v4117
        %4443 = vmatprep.subr.bf16.mxu0 %v4127
        %4444 = vmatpush1.bf16.msra.mxu0 %v4126
        %4445 = vmatprep.subr.bf16.mxu0 %v4136
        %4446 = vmatpush1.bf16.msra.mxu0 %v4135
        %4447 = vmatprep.subr.bf16.mxu0 %v4145
        %4448 = vmatpush1.bf16.msra.mxu0 %v4144
        %4449 = vmatprep.subr.bf16.mxu0 %v4154
        %4450 = vmatpush1.bf16.msra.mxu0 %v4153
        %4451 = vmatprep.mubr.bf16.mxu0 %v3440
        %4452 = vmatmul.mubr.bf16.gmra.mrb[0].mxu0 %v3439
        %v4453 = vpop.f32.mrb[0].mxu0
        %v4454 = vadd.f32 %v3432, %v4453
        %v4455 = vpop.f32.mrb[0].mxu0
        %v4456 = vadd.f32 %v3432, %v4455
        %v4457 = vpop.f32.mrb[0].mxu0
        %v4458 = vpop.f32.mrb[0].mxu0
        %4459 = vdwg.mxu0
        %4460 = vmatprep.subr.bf16.mxu0 %v4163
        %4461 = vmatpush1.bf16.msra.mxu0 %v4162
        %4462 = vmatprep.subr.bf16.mxu0 %v4172
        %4463 = vmatpush1.bf16.msra.mxu0 %v4171
        %4464 = vmatprep.subr.bf16.mxu0 %v4181
        %4465 = vmatpush1.bf16.msra.mxu0 %v4180
        %4466 = vmatprep.subr.bf16.mxu0 %v4190
        %4467 = vmatpush1.bf16.msra.mxu0 %v4189
        %4468 = vmatprep.subr.bf16.mxu0 %v4396
        %4469 = vmatpush1.bf16.msra.mxu0 %v4393
        %4470 = vmatprep.subr.bf16.mxu0 0
        %4471 = vmatpush1.bf16.msra.mxu0 0
        %4472 = vmatprep.subr.bf16.mxu0 0
        %4473 = vmatpush1.bf16.msra.mxu0 0
        %4474 = vmatprep.subr.bf16.mxu0 0
        %4475 = vmatpush1.bf16.msra.mxu0 0
        %4476 = vmatprep.subr.bf16.mxu0 0
        %4477 = vmatpush1.bf16.msra.mxu0 0
        %4478 = vmatprep.subr.bf16.mxu0 0
        %4479 = vmatpush1.bf16.msra.mxu0 0
        %4480 = vmatprep.subr.bf16.mxu0 0
        %4481 = vmatpush1.bf16.msra.mxu0 0
        %4482 = vmatprep.subr.bf16.mxu0 0
        %4483 = vmatpush1.bf16.msra.mxu0 0
        %4484 = vmatprep.subr.bf16.mxu0 0
        %4485 = vmatpush1.bf16.msra.mxu0 0
        %4486 = vmatprep.subr.bf16.mxu0 0
        %4487 = vmatpush1.bf16.msra.mxu0 0
        %4488 = vmatprep.subr.bf16.mxu0 0
        %4489 = vmatpush1.bf16.msra.mxu0 0
        %4490 = vmatprep.subr.bf16.mxu0 0
        %4491 = vmatpush1.bf16.msra.mxu0 0
        %4492 = vmatprep.mubr.bf16.mxu0 0
        %4493 = vmatmul.mubr.bf16.gmra.mrb[0].mxu0 %v4389
        %v4494 = vpop.f32.mrb[0].mxu0
        %v4495 = vadd.f32 %v4454, %v4494
        %v4496 = vpop.f32.mrb[0].mxu0
        %v4497 = vadd.f32 %v4456, %v4496
        %v4498 = vpop.f32.mrb[0].mxu0
        %v4499 = vpop.f32.mrb[0].mxu0
        %4500 = vdwg.mxu0
        %4501 = vmatprep.subr.bf16.mxu0 %v4021
        %4502 = vmatpush1.bf16.msra.mxu0 %v4020
        %4503 = vmatprep.subr.bf16.mxu0 %v4030
        %4504 = vmatpush1.bf16.msra.mxu0 %v4029
        %4505 = vmatprep.subr.bf16.mxu0 %v4039
        %4506 = vmatpush1.bf16.msra.mxu0 %v4038
        %4507 = vmatprep.subr.bf16.mxu0 %v4048
        %4508 = vmatpush1.bf16.msra.mxu0 %v4047
        %4509 = vmatprep.subr.bf16.mxu0 %v4057
        %4510 = vmatpush1.bf16.msra.mxu0 %v4056
        %4511 = vmatprep.subr.bf16.mxu0 %v4066
        %4512 = vmatpush1.bf16.msra.mxu0 %v4065
        %4513 = vmatprep.subr.bf16.mxu0 %v4075
        %4514 = vmatpush1.bf16.msra.mxu0 %v4074
        %4515 = vmatprep.subr.bf16.mxu0 %v4084
        %4516 = vmatpush1.bf16.msra.mxu0 %v4083
        %4517 = vmatprep.subr.bf16.mxu0 %v4093
        %4518 = vmatpush1.bf16.msra.mxu0 %v4092
        %4519 = vmatprep.subr.bf16.mxu0 %v4102
        %4520 = vmatpush1.bf16.msra.mxu0 %v4101
        %4521 = vmatprep.subr.bf16.mxu0 %v4111
        %4522 = vmatpush1.bf16.msra.mxu0 %v4110
        %4523 = vmatprep.subr.bf16.mxu0 %v4120
        %4524 = vmatpush1.bf16.msra.mxu0 %v4119
        %4525 = vmatprep.subr.bf16.mxu0 %v4129
        %4526 = vmatpush1.bf16.msra.mxu0 %v4128
        %4527 = vmatprep.subr.bf16.mxu0 %v4138
        %4528 = vmatpush1.bf16.msra.mxu0 %v4137
        %4529 = vmatprep.subr.bf16.mxu0 %v4147
        %4530 = vmatpush1.bf16.msra.mxu0 %v4146
        %4531 = vmatprep.subr.bf16.mxu0 %v4156
        %4532 = vmatpush1.bf16.msra.mxu0 %v4155
        %4533 = vmatprep.mubr.bf16.mxu0 %v3440
        %4534 = vmatmul.mubr.bf16.gmra.mrb[0].mxu0 %v3439
        %v4535 = vpop.f32.mrb[0].mxu0
        %v4536 = vadd.f32 %v3432, %v4535
        %v4537 = vpop.f32.mrb[0].mxu0
        %v4538 = vadd.f32 %v3432, %v4537
        %v4539 = vpop.f32.mrb[0].mxu0
        %v4540 = vpop.f32.mrb[0].mxu0
        %4541 = vdwg.mxu0
        %4542 = vmatprep.subr.bf16.mxu0 %v4165
        %4543 = vmatpush1.bf16.msra.mxu0 %v4164
        %4544 = vmatprep.subr.bf16.mxu0 %v4174
        %4545 = vmatpush1.bf16.msra.mxu0 %v4173
        %4546 = vmatprep.subr.bf16.mxu0 %v4183
        %4547 = vmatpush1.bf16.msra.mxu0 %v4182
        %4548 = vmatprep.subr.bf16.mxu0 %v4192
        %4549 = vmatpush1.bf16.msra.mxu0 %v4191
        %4550 = vmatprep.subr.bf16.mxu0 %v4402
        %4551 = vmatpush1.bf16.msra.mxu0 %v4399
        %4552 = vmatprep.subr.bf16.mxu0 0
        %4553 = vmatpush1.bf16.msra.mxu0 0
        %4554 = vmatprep.subr.bf16.mxu0 0
        %4555 = vmatpush1.bf16.msra.mxu0 0
        %4556 = vmatprep.subr.bf16.mxu0 0
        %4557 = vmatpush1.bf16.msra.mxu0 0
        %4558 = vmatprep.subr.bf16.mxu0 0
        %4559 = vmatpush1.bf16.msra.mxu0 0
        %4560 = vmatprep.subr.bf16.mxu0 0
        %4561 = vmatpush1.bf16.msra.mxu0 0
        %4562 = vmatprep.subr.bf16.mxu0 0
        %4563 = vmatpush1.bf16.msra.mxu0 0
        %4564 = vmatprep.subr.bf16.mxu0 0
        %4565 = vmatpush1.bf16.msra.mxu0 0
        %4566 = vmatprep.subr.bf16.mxu0 0
        %4567 = vmatpush1.bf16.msra.mxu0 0
        %4568 = vmatprep.subr.bf16.mxu0 0
        %4569 = vmatpush1.bf16.msra.mxu0 0
        %4570 = vmatprep.subr.bf16.mxu0 0
        %4571 = vmatpush1.bf16.msra.mxu0 0
        %4572 = vmatprep.subr.bf16.mxu0 0
        %4573 = vmatpush1.bf16.msra.mxu0 0
        %4574 = vmatprep.mubr.bf16.mxu0 0
        %4575 = vmatmul.mubr.bf16.gmra.mrb[0].mxu0 %v4389
        %v4576 = vpop.f32.mrb[0].mxu0
        %v4577 = vadd.f32 %v4536, %v4576
        %v4578 = vpop.f32.mrb[0].mxu0
        %v4579 = vadd.f32 %v4538, %v4578
        %v4580 = vpop.f32.mrb[0].mxu0
        %v4581 = vpop.f32.mrb[0].mxu0
        %4582 = vdwg.mxu0
        %4583 = vmatprep.subr.bf16.mxu0 %v4023
        %4584 = vmatpush1.bf16.msra.mxu0 %v4022
        %4585 = vmatprep.subr.bf16.mxu0 %v4032
        %4586 = vmatpush1.bf16.msra.mxu0 %v4031
        %4587 = vmatprep.subr.bf16.mxu0 %v4041
        %4588 = vmatpush1.bf16.msra.mxu0 %v4040
        %4589 = vmatprep.subr.bf16.mxu0 %v4050
        %4590 = vmatpush1.bf16.msra.mxu0 %v4049
        %4591 = vmatprep.subr.bf16.mxu0 %v4059
        %4592 = vmatpush1.bf16.msra.mxu0 %v4058
        %4593 = vmatprep.subr.bf16.mxu0 %v4068
        %4594 = vmatpush1.bf16.msra.mxu0 %v4067
        %4595 = vmatprep.subr.bf16.mxu0 %v4077
        %4596 = vmatpush1.bf16.msra.mxu0 %v4076
        %4597 = vmatprep.subr.bf16.mxu0 %v4086
        %4598 = vmatpush1.bf16.msra.mxu0 %v4085
        %4599 = vmatprep.subr.bf16.mxu0 %v4095
        %4600 = vmatpush1.bf16.msra.mxu0 %v4094
        %4601 = vmatprep.subr.bf16.mxu0 %v4104
        %4602 = vmatpush1.bf16.msra.mxu0 %v4103
        %4603 = vmatprep.subr.bf16.mxu0 %v4113
        %4604 = vmatpush1.bf16.msra.mxu0 %v4112
        %4605 = vmatprep.subr.bf16.mxu0 %v4122
        %4606 = vmatpush1.bf16.msra.mxu0 %v4121
        %4607 = vmatprep.subr.bf16.mxu0 %v4131
        %4608 = vmatpush1.bf16.msra.mxu0 %v4130
        %4609 = vmatprep.subr.bf16.mxu0 %v4140
        %4610 = vmatpush1.bf16.msra.mxu0 %v4139
        %4611 = vmatprep.subr.bf16.mxu0 %v4149
        %4612 = vmatpush1.bf16.msra.mxu0 %v4148
        %4613 = vmatprep.subr.bf16.mxu0 %v4158
        %4614 = vmatpush1.bf16.msra.mxu0 %v4157
        %4615 = vmatprep.mubr.bf16.mxu0 %v3440
        %4616 = vmatmul.mubr.bf16.gmra.mrb[0].mxu0 %v3439
        %v4617 = vpop.f32.mrb[0].mxu0
        %v4618 = vadd.f32 %v3432, %v4617
        %v4619 = vpop.f32.mrb[0].mxu0
        %v4620 = vadd.f32 %v3432, %v4619
        %v4621 = vpop.f32.mrb[0].mxu0
        %v4622 = vpop.f32.mrb[0].mxu0
        %4623 = vdwg.mxu0
        %4624 = vmatprep.subr.bf16.mxu0 %v4167
        %4625 = vmatpush1.bf16.msra.mxu0 %v4166
        %4626 = vmatprep.subr.bf16.mxu0 %v4176
        %4627 = vmatpush1.bf16.msra.mxu0 %v4175
        %4628 = vmatprep.subr.bf16.mxu0 %v4185
        %4629 = vmatpush1.bf16.msra.mxu0 %v4184
        %4630 = vmatprep.subr.bf16.mxu0 %v4194
        %4631 = vmatpush1.bf16.msra.mxu0 %v4193
        %4632 = vmatprep.subr.bf16.mxu0 %v4408
        %4633 = vmatpush1.bf16.msra.mxu0 %v4405
        %4634 = vmatprep.subr.bf16.mxu0 0
        %4635 = vmatpush1.bf16.msra.mxu0 0
        %4636 = vmatprep.subr.bf16.mxu0 0
        %4637 = vmatpush1.bf16.msra.mxu0 0
        %4638 = vmatprep.subr.bf16.mxu0 0
        %4639 = vmatpush1.bf16.msra.mxu0 0
        %4640 = vmatprep.subr.bf16.mxu0 0
        %4641 = vmatpush1.bf16.msra.mxu0 0
        %4642 = vmatprep.subr.bf16.mxu0 0
        %4643 = vmatpush1.bf16.msra.mxu0 0
        %4644 = vmatprep.subr.bf16.mxu0 0
        %4645 = vmatpush1.bf16.msra.mxu0 0
        %4646 = vmatprep.subr.bf16.mxu0 0
        %4647 = vmatpush1.bf16.msra.mxu0 0
        %4648 = vmatprep.subr.bf16.mxu0 0
        %4649 = vmatpush1.bf16.msra.mxu0 0
        %4650 = vmatprep.subr.bf16.mxu0 0
        %4651 = vmatpush1.bf16.msra.mxu0 0
        %4652 = vmatprep.subr.bf16.mxu0 0
        %4653 = vmatpush1.bf16.msra.mxu0 0
        %4654 = vmatprep.subr.bf16.mxu0 0
        %4655 = vmatpush1.bf16.msra.mxu0 0
        %4656 = vmatprep.mubr.bf16.mxu0 0
        %4657 = vmatmul.mubr.bf16.gmra.mrb[0].mxu0 %v4389
        %v4658 = vpop.f32.mrb[0].mxu0
        %v4659 = vadd.f32 %v4618, %v4658
        %v4660 = vpop.f32.mrb[0].mxu0
        %v4661 = vadd.f32 %v4620, %v4660
        %v4662 = vpop.f32.mrb[0].mxu0
        %v4663 = vpop.f32.mrb[0].mxu0
        %4664 = vdwg.mxu0
        %4665 = vmatprep.subr.bf16.mxu0 %v4025
        %4666 = vmatpush1.bf16.msra.mxu0 %v4024
        %4667 = vmatprep.subr.bf16.mxu0 %v4034
        %4668 = vmatpush1.bf16.msra.mxu0 %v4033
        %4669 = vmatprep.subr.bf16.mxu0 %v4043
        %4670 = vmatpush1.bf16.msra.mxu0 %v4042
        %4671 = vmatprep.subr.bf16.mxu0 %v4052
        %4672 = vmatpush1.bf16.msra.mxu0 %v4051
        %4673 = vmatprep.subr.bf16.mxu0 %v4061
        %4674 = vmatpush1.bf16.msra.mxu0 %v4060
        %4675 = vmatprep.subr.bf16.mxu0 %v4070
        %4676 = vmatpush1.bf16.msra.mxu0 %v4069
        %4677 = vmatprep.subr.bf16.mxu0 %v4079
        %4678 = vmatpush1.bf16.msra.mxu0 %v4078
        %4679 = vmatprep.subr.bf16.mxu0 %v4088
        %4680 = vmatpush1.bf16.msra.mxu0 %v4087
        %4681 = vmatprep.subr.bf16.mxu0 %v4097
        %4682 = vmatpush1.bf16.msra.mxu0 %v4096
        %4683 = vmatprep.subr.bf16.mxu0 %v4106
        %4684 = vmatpush1.bf16.msra.mxu0 %v4105
        %4685 = vmatprep.subr.bf16.mxu0 %v4115
        %4686 = vmatpush1.bf16.msra.mxu0 %v4114
        %4687 = vmatprep.subr.bf16.mxu0 %v4124
        %4688 = vmatpush1.bf16.msra.mxu0 %v4123
        %4689 = vmatprep.subr.bf16.mxu0 %v4133
        %4690 = vmatpush1.bf16.msra.mxu0 %v4132
        %4691 = vmatprep.subr.bf16.mxu0 %v4142
        %4692 = vmatpush1.bf16.msra.mxu0 %v4141
        %4693 = vmatprep.subr.bf16.mxu0 %v4151
        %4694 = vmatpush1.bf16.msra.mxu0 %v4150
        %4695 = vmatprep.subr.bf16.mxu0 %v4160
        %4696 = vmatpush1.bf16.msra.mxu0 %v4159
        %4697 = vmatprep.mubr.bf16.mxu0 %v3440
        %4698 = vmatmul.mubr.bf16.gmra.mrb[0].mxu0 %v3439
        %v4699 = vpop.f32.mrb[0].mxu0
        %v4700 = vadd.f32 %v3432, %v4699
        %v4701 = vpop.f32.mrb[0].mxu0
        %v4702 = vadd.f32 %v3432, %v4701
        %v4703 = vpop.f32.mrb[0].mxu0
        %v4704 = vpop.f32.mrb[0].mxu0
        %4705 = vdwg.mxu0
        %4706 = vmatprep.subr.bf16.mxu0 %v4169
        %4707 = vmatpush1.bf16.msra.mxu0 %v4168
        %4708 = vmatprep.subr.bf16.mxu0 %v4178
        %4709 = vmatpush1.bf16.msra.mxu0 %v4177
        %4710 = vmatprep.subr.bf16.mxu0 %v4187
        %4711 = vmatpush1.bf16.msra.mxu0 %v4186
        %4712 = vmatprep.subr.bf16.mxu0 %v4196
        %4713 = vmatpush1.bf16.msra.mxu0 %v4195
        %4714 = vmatprep.subr.bf16.mxu0 %v4414
        %4715 = vmatpush1.bf16.msra.mxu0 %v4411
        %4716 = vmatprep.subr.bf16.mxu0 0
        %4717 = vmatpush1.bf16.msra.mxu0 0
        %4718 = vmatprep.subr.bf16.mxu0 0
        %4719 = vmatpush1.bf16.msra.mxu0 0
        %4720 = vmatprep.subr.bf16.mxu0 0
        %4721 = vmatpush1.bf16.msra.mxu0 0
        %4722 = vmatprep.subr.bf16.mxu0 0
        %4723 = vmatpush1.bf16.msra.mxu0 0
        %4724 = vmatprep.subr.bf16.mxu0 0
        %4725 = vmatpush1.bf16.msra.mxu0 0
        %4726 = vmatprep.subr.bf16.mxu0 0
        %4727 = vmatpush1.bf16.msra.mxu0 0
        %4728 = vmatprep.subr.bf16.mxu0 0
        %4729 = vmatpush1.bf16.msra.mxu0 0
        %4730 = vmatprep.subr.bf16.mxu0 0
        %4731 = vmatpush1.bf16.msra.mxu0 0
        %4732 = vmatprep.subr.bf16.mxu0 0
        %4733 = vmatpush1.bf16.msra.mxu0 0
        %4734 = vmatprep.subr.bf16.mxu0 0
        %4735 = vmatpush1.bf16.msra.mxu0 0
        %4736 = vmatprep.subr.bf16.mxu0 0
        %4737 = vmatpush1.bf16.msra.mxu0 0
        %4738 = vmatprep.mubr.bf16.mxu0 0
        %4739 = vmatmul.mubr.bf16.gmra.mrb[0].mxu0 %v4389
        %v4740 = vpop.f32.mrb[0].mxu0
        %v4741 = vadd.f32 %v4700, %v4740
        %v4742 = vpop.f32.mrb[0].mxu0
        %v4743 = vadd.f32 %v4702, %v4742
        %v4744 = vpop.f32.mrb[0].mxu0
        %v4745 = vpop.f32.mrb[0].mxu0
        %4746 = vdwg.mxu0
        %4747 = vmatprep.subr.bf16.mxu0 0
        %4748 = vmatpush1.bf16.msra.mxu0 %v4026
        %4749 = vmatprep.subr.bf16.mxu0 0
        %4750 = vmatpush1.bf16.msra.mxu0 %v4035
        %4751 = vmatprep.subr.bf16.mxu0 0
        %4752 = vmatpush1.bf16.msra.mxu0 %v4044
        %4753 = vmatprep.subr.bf16.mxu0 0
        %4754 = vmatpush1.bf16.msra.mxu0 %v4053
        %4755 = vmatprep.subr.bf16.mxu0 0
        %4756 = vmatpush1.bf16.msra.mxu0 %v4062
        %4757 = vmatprep.subr.bf16.mxu0 0
        %4758 = vmatpush1.bf16.msra.mxu0 %v4071
        %4759 = vmatprep.subr.bf16.mxu0 0
        %4760 = vmatpush1.bf16.msra.mxu0 %v4080
        %4761 = vmatprep.subr.bf16.mxu0 0
        %4762 = vmatpush1.bf16.msra.mxu0 %v4089
        %4763 = vmatprep.subr.bf16.mxu0 0
        %4764 = vmatpush1.bf16.msra.mxu0 %v4098
        %4765 = vmatprep.subr.bf16.mxu0 0
        %4766 = vmatpush1.bf16.msra.mxu0 %v4107
        %4767 = vmatprep.subr.bf16.mxu0 0
        %4768 = vmatpush1.bf16.msra.mxu0 %v4116
        %4769 = vmatprep.subr.bf16.mxu0 0
        %4770 = vmatpush1.bf16.msra.mxu0 %v4125
        %4771 = vmatprep.subr.bf16.mxu0 0
        %4772 = vmatpush1.bf16.msra.mxu0 %v4134
        %4773 = vmatprep.subr.bf16.mxu0 0
        %4774 = vmatpush1.bf16.msra.mxu0 %v4143
        %4775 = vmatprep.subr.bf16.mxu0 0
        %4776 = vmatpush1.bf16.msra.mxu0 %v4152
        %4777 = vmatprep.subr.bf16.mxu0 0
        %4778 = vmatpush1.bf16.msra.mxu0 %v4161
        %4779 = vmatprep.mubr.bf16.mxu0 %v3440
        %4780 = vmatmul.mubr.bf16.gmra.mrb[0].mxu0 %v3439
        %v4781 = vpop.f32.mrb[0].mxu0
        %v4782 = vadd.f32 %v3432, %v4781
        %v4783 = vpop.f32.mrb[0].mxu0
        %v4784 = vpop.f32.mrb[0].mxu0
        %v4785 = vpop.f32.mrb[0].mxu0
        %4786 = vdwg.mxu0
        %4787 = vmatprep.subr.bf16.mxu0 0
        %4788 = vmatpush1.bf16.msra.mxu0 %v4170
        %4789 = vmatprep.subr.bf16.mxu0 0
        %4790 = vmatpush1.bf16.msra.mxu0 %v4179
        %4791 = vmatprep.subr.bf16.mxu0 0
        %4792 = vmatpush1.bf16.msra.mxu0 %v4188
        %4793 = vmatprep.subr.bf16.mxu0 0
        %4794 = vmatpush1.bf16.msra.mxu0 %v4197
        %4795 = vmatprep.subr.bf16.mxu0 0
        %4796 = vmatpush1.bf16.msra.mxu0 %v4417
        %4797 = vmatprep.subr.bf16.mxu0 0
        %4798 = vmatpush1.bf16.msra.mxu0 0
        %4799 = vmatprep.subr.bf16.mxu0 0
        %4800 = vmatpush1.bf16.msra.mxu0 0
        %4801 = vmatprep.subr.bf16.mxu0 0
        %4802 = vmatpush1.bf16.msra.mxu0 0
        %4803 = vmatprep.subr.bf16.mxu0 0
        %4804 = vmatpush1.bf16.msra.mxu0 0
        %4805 = vmatprep.subr.bf16.mxu0 0
        %4806 = vmatpush1.bf16.msra.mxu0 0
        %4807 = vmatprep.subr.bf16.mxu0 0
        %4808 = vmatpush1.bf16.msra.mxu0 0
        %4809 = vmatprep.subr.bf16.mxu0 0
        %4810 = vmatpush1.bf16.msra.mxu0 0
        %4811 = vmatprep.subr.bf16.mxu0 0
        %4812 = vmatpush1.bf16.msra.mxu0 0
        %4813 = vmatprep.subr.bf16.mxu0 0
        %4814 = vmatpush1.bf16.msra.mxu0 0
        %4815 = vmatprep.subr.bf16.mxu0 0
        %4816 = vmatpush1.bf16.msra.mxu0 0
        %4817 = vmatprep.subr.bf16.mxu0 0
        %4818 = vmatpush1.bf16.msra.mxu0 0
        %4819 = vmatprep.mubr.bf16.mxu0 0
        %4820 = vmatmul.mubr.bf16.gmra.mrb[0].mxu0 %v4389
        %v4821 = vpop.f32.mrb[0].mxu0
        %v4822 = vadd.f32 %v4782, %v4821
        %v4823 = vpop.f32.mrb[0].mxu0
        %v4824 = vpop.f32.mrb[0].mxu0
        %v4825 = vpop.f32.mrb[0].mxu0
        %4826 = vdwg.mxu0
        %v4827 = vmul.f32 %v4495, 0.1
        %v4828 = vmul.f32 %v4497, 0.1
        %v4829 = vmul.f32 %v4577, 0.1
        %v4830 = vmul.f32 %v4579, 0.1
        %v4831 = vmul.f32 %v4659, 0.1
        %v4832 = vmul.f32 %v4661, 0.1
        %v4833 = vmul.f32 %v4741, 0.1
        %v4834 = vmul.f32 %v4743, 0.1
        %v4835 = vmul.f32 %v4822, 0.1
        %v4836 = vmax.f32 %v4495, %v4827
        %v4837 = vmax.f32 %v4497, %v4828
        %v4838 = vmax.f32 %v4577, %v4829
        %v4839 = vmax.f32 %v4579, %v4830
        %v4840 = vmax.f32 %v4659, %v4831
        %v4841 = vmax.f32 %v4661, %v4832
        %v4842 = vmax.f32 %v4741, %v4833
        %v4843 = vmax.f32 %v4743, %v4834
        %v4844 = vmax.f32 %v4822, %v4835
        %4845 = vst [vmem:[%s348] sm:$0xff] %v4836
        %4846 = vst [vmem:[%s348 + $0x8] sm:$0xff] %v4837
        %4847 = vst [vmem:[%s348 + $0x10] sm:$0xff] %v4838
        %4848 = vst [vmem:[%s348 + $0x18] sm:$0xff] %v4839
        %4849 = vst [vmem:[%s348 + $0x20] sm:$0xff] %v4840
        %4850 = vst [vmem:[%s348 + $0x28] sm:$0xff] %v4841
        %4851 = vst [vmem:[%s348 + $0x30] sm:$0xff] %v4842
        %4852 = vst [vmem:[%s348 + $0x38] sm:$0xff] %v4843
        %4853 = vst [vmem:[%s348 + $0x40] sm:$0xff] %v4844
        %s4854 = smul.u32 9, %s20
        %p4855 = scmp.lt.s32.totalorder %s19, 0
        %s4856 = scalar_select %p4855, %s19, 0
        %p4857 = scmp.lt.s32.totalorder %s4854, 17
        %s4858 = scalar_select %p4857, %s4854, 17
        %s4859 = smul.addr %s4856, 18
        %s4860 = sadd.s32 %s4858, %s4859
        %s4861 = smul.addr %s4860, 8
        %s4862 = scalar_lea.vmem %s4, %s4861
        // Predicated region
        $region104: #{conv1d.1} parent=94 // pred_check
          %p4863 = pneg %p149
        $region105: #{conv1d.1} parent=94 // pred_check_branch
          %4865 = sbr.rel (%p4863) target = $region107
        $region106: #{conv1d.1} parent=94 // pred_region
          %s4866 = smul.u32 9, %s20
        $region107: #{conv1d.1} parent=94 // pred_fallthru
          _
      $region95: #{conv1d.1} parent=5 // pred_fallthru
        _
      %p4867 = scmp.le.s32.totalorder 2, %s10
      // Predicated region
      $region108: #{conv1d.1} parent=5 // pred_check
        %p4868 = pneg %p4867
      $region109: #{conv1d.1} parent=5 // pred_check_branch
        %4870 = sbr.rel (%p4868) target = $region111
      $region110: #{conv1d.1} parent=5 // pred_region
        %s4871 = ssub.s32 %s10, 2
        // Predicated region
        $region112: #{conv1d.1} parent=110 // pred_check
          %p4872 = pneg %p155
        $region113: #{conv1d.1} parent=110 // pred_check_branch
          %4874 = sbr.rel (%p4872) target = $region115
        $region114: #{conv1d.1} parent=110 // pred_region
          %s4875 = smul.u32 9, %s22
          %p4876 = scmp.lt.s32.totalorder %s21, 0
          %s4877 = scalar_select %p4876, %s21, 0
          %p4878 = scmp.lt.s32.totalorder %s4875, 17
          %s4879 = scalar_select %p4878, %s4875, 17
          %s4880 = smul.addr %s4877, 18
          %s4881 = sadd.s32 %s4879, %s4880
          %s4882 = smul.addr %s4881, 8
          %s4883 = scalar_lea.vmem %s4, %s4882
        $region115: #{conv1d.1} parent=110 // pred_fallthru
          _
      $region111: #{conv1d.1} parent=5 // pred_fallthru
        _
    $region6: #{conv1d.1} parent=1 // loop_footer
      %s14 = sadd.s32 1, %s10
    $region7: #{conv1d.1} parent=1 // loop_footer_branch
      %9 = sbr.rel target = $region3
    $region8: #{conv1d.1} parent=1 // loop_exit
      _

</llo_original>
